<compile_context>
chip_gen: v6e
topology: v6e:2x2x1
jax: 0.10.0
libtpu: 0.0.40
codegen_flags: <defaults>
</compile_context>

<pallas_src>
import functools

import jax
import jax.numpy as jnp
from jax.experimental import pallas as pl
from jax.experimental.pallas import tpu as pltpu

BN_EPS = 1e-5
LRELU_SLOPE = 0.2
LANES = 128
PHASES = ((0, 0), (0, 1), (1, 0), (1, 1))          # (row, col) phase / tap order
VMEM_LIMIT = 32 * 1024 * 1024
BLOCK_VMEM_BUDGET = 8 * 1024 * 1024                # per-block in+out bytes (pre double-buffer)


def _round_up(x, m):
    return ((x + m - 1) // m) * m


# ----------------------------------------------------------------------------
# Pallas kernels
# ----------------------------------------------------------------------------
def _conv_s2d_kernel(s_ref, w_ref, y_ref, st_ref, *, nb, ho, wo, cin4):
    """4x4/s2/p1 conv of `nb` samples on the space-to-depth input, one matmul.

    s_ref : [nb, ho+1, wo+1, cin4] bf16   (cin4 = 4*cin_eff, multiple of 128)
    w_ref : [4*cin4, coutp]        bf16   (the 4 taps folded into K)
    y_ref : [nb*ho*wo, coutp]      bf16   pre-BN conv output (lane-dense slab)
    st_ref: [2, coutp]             f32    per-block [sum; sum of squares]
    """
    s = s_ref[...]
    m = nb * ho * wo
    # One (in-VMEM) relayout per tap, then a single big MXU matmul.
    taps = [s[:, a:a + ho, b:b + wo, :].reshape(m, cin4) for (a, b) in PHASES]
    lhs = jnp.concatenate(taps, axis=-1)                       # [m, 4*cin4]
    acc = jnp.dot(lhs, w_ref[...], preferred_element_type=jnp.float32)
    y_ref[...] = acc.astype(y_ref.dtype)
    # Single end-of-block reduction for the BatchNorm batch statistics (f32).
    st_ref[0:1, :] = jnp.sum(acc, axis=0, keepdims=True)
    st_ref[1:2, :] = jnp.sum(acc * acc, axis=0, keepdims=True)


def _final_conv_kernel(x_ref, sc_ref, sh_ref, w_ref, o_ref, *, n, hf, wf, cin):
    """Last block's BN + LeakyReLU fused with the 4x4/s1/p0 out_conv + sigmoid.

    x_ref : [n, hf, wf, cin] bf16  pre-BN output of the last block
    sc_ref: [1, cin] f32           folded BN scale (0 on padded channels)
    sh_ref: [1, cin] f32           folded BN shift (0 on padded channels)
    w_ref : [16*cin, 128] bf16     out_conv weight, taps folded into K, logit in col 0
    o_ref : [n*ho*wo, 128] f32     sigmoid(conv) (real value in column 0)
    """
    ho, wo = hf - 3, wf - 3
    m = n * ho * wo
    t = x_ref[...].astype(jnp.float32) * sc_ref[...] + sh_ref[...]
    t = jnp.maximum(t, LRELU_SLOPE * t).astype(jnp.bfloat16)
    taps = [t[:, ki:ki + ho, kj:kj + wo, :].reshape(m, cin)
            for ki in range(4) for kj in range(4)]
    lhs = jnp.concatenate(taps, axis=-1)                       # [m, 16*cin]
    acc = jnp.dot(lhs, w_ref[...], preferred_element_type=jnp.float32)
    o_ref[...] = pl.reciprocal(1.0 + jnp.exp(-acc), approx=True)


# ----------------------------------------------------------------------------
# pallas_call wrappers
# ----------------------------------------------------------------------------
def _conv_s2d_call(s, w2, nb, ho, wo, coutp):
    n, hi, wi, cin4 = s.shape
    nblk = n // nb
    m_blk = nb * ho * wo
    flops = 2 * n * ho * wo * (4 * cin4) * coutp
    bytes_accessed = (s.size * 2 + w2.size * 2 * nblk
                      + n * ho * wo * coutp * 2 + nblk * 2 * coutp * 4)
    kernel = functools.partial(_conv_s2d_kernel, nb=nb, ho=ho, wo=wo, cin4=cin4)
    return pl.pallas_call(
        kernel,
        out_shape=(jax.ShapeDtypeStruct((n * ho * wo, coutp), jnp.bfloat16),
                   jax.ShapeDtypeStruct((nblk, 2, coutp), jnp.float32)),
        grid=(nblk,),
        in_specs=[pl.BlockSpec((nb, hi, wi, cin4), lambda i: (i, 0, 0, 0)),
                  pl.BlockSpec((4 * cin4, coutp), lambda i: (0, 0))],
        out_specs=(pl.BlockSpec((m_blk, coutp), lambda i: (i, 0)),
                   pl.BlockSpec((None, 2, coutp), lambda i: (i, 0, 0))),
        compiler_params=pltpu.CompilerParams(
            dimension_semantics=("parallel",),
            vmem_limit_bytes=VMEM_LIMIT),
        cost_estimate=pl.CostEstimate(flops=flops, transcendentals=0,
                                      bytes_accessed=bytes_accessed),
    )(s, w2)


def _final_conv_call(x, scale, shift, wmat):
    n, hf, wf, cin = x.shape
    ho, wo = hf - 3, wf - 3
    m = n * ho * wo
    kernel = functools.partial(_final_conv_kernel, n=n, hf=hf, wf=wf, cin=cin)
    return pl.pallas_call(
        kernel,
        out_shape=jax.ShapeDtypeStruct((m, LANES), jnp.float32),
        grid=(1,),
        in_specs=[pl.BlockSpec((n, hf, wf, cin), lambda i: (0, 0, 0, 0)),
                  pl.BlockSpec((1, cin), lambda i: (0, 0)),
                  pl.BlockSpec((1, cin), lambda i: (0, 0)),
                  pl.BlockSpec((16 * cin, LANES), lambda i: (0, 0))],
        out_specs=pl.BlockSpec((m, LANES), lambda i: (0, 0)),
        compiler_params=pltpu.CompilerParams(
            dimension_semantics=("arbitrary",),
            vmem_limit_bytes=VMEM_LIMIT),
        cost_estimate=pl.CostEstimate(
            flops=2 * m * 16 * cin * LANES, transcendentals=m * LANES,
            bytes_accessed=x.size * 2 + wmat.size * 2 + m * LANES * 4),
    )(x, scale, shift, wmat)


# ----------------------------------------------------------------------------
# Glue: layout rearrangement + weight packing (plain JAX, XLA-fused passes)
# ----------------------------------------------------------------------------
def _space_to_depth_pad(x):
    # x: [N, H, W, C] -> [N, H//2 + 1, W//2 + 1, 4*C]  (pad=1, stride-2 phases)
    xp = jnp.pad(x, ((0, 0), (1, 1), (1, 1), (0, 0)))
    return jnp.concatenate([xp[:, p::2, q::2, :] for (p, q) in PHASES], axis=-1)


def _build_block_weight(w, cin_eff, coutp):
    # w: [Cout, Cin, 4, 4] OIHW -> [16*cin_eff, coutp] bf16, taps folded into K.
    # Row = (2a+b)*4*cin_eff + (2p+q)*cin_eff + c  holds  w[:, c, 2a+p, 2b+q].
    cout, cin = w.shape[0], w.shape[1]
    mats = []
    for (a, b) in PHASES:                               # tap order (matches kernel)
        blocks = []
        for (p, q) in PHASES:                           # s2d phase order
            blk = w[:, :, 2 * a + p, 2 * b + q].T       # [cin, cout]
            blk = jnp.pad(blk, ((0, cin_eff - cin), (0, coutp - cout)))
            blocks.append(blk)
        mats.append(jnp.concatenate(blocks, axis=0))    # [4*cin_eff, coutp]
    return jnp.concatenate(mats, axis=0).astype(jnp.bfloat16)


def _build_out_weight(w, cin_eff):
    # w: [1, Cin, 4, 4] -> [16*cin_eff, 128] bf16 (real logit in column 0).
    cout, cin = w.shape[0], w.shape[1]
    blocks = []
    for ki in range(4):
        for kj in range(4):
            blk = w[:, :, ki, kj].T                     # [cin, 1]
            blk = jnp.pad(blk, ((0, cin_eff - cin), (0, LANES - cout)))
            blocks.append(blk)
    return jnp.concatenate(blocks, axis=0).astype(jnp.bfloat16)


def _bn_scale_shift(stats, gamma, beta, count, coutp):
    totals = jnp.sum(stats, axis=0)                     # [2, coutp], over batch blocks
    mean = totals[0] / count
    # TODO(synk): single-pass E[x^2]-E[x]^2 in f32 can lose precision for
    # large-mean activations; a two-pass / Welford variant would be more robust.
    var = totals[1] / count - mean * mean               # biased variance (PyTorch BN)
    gamma_p = jnp.pad(gamma, (0, coutp - gamma.shape[0]))
    beta_p = jnp.pad(beta, (0, coutp - beta.shape[0]))
    scale = gamma_p * jax.lax.rsqrt(var + BN_EPS)       # padded channels: scale = 0
    shift = beta_p - mean * scale
    return scale.astype(jnp.float32), shift.astype(jnp.float32)


def _pick_batch_block(n, ho, wo, cin4, coutp):
    # Largest divisor of n whose double-buffered in+out block footprint stays
    # well under the VMEM limit; stop growing once the matmul M >= 512.
    best = 1
    for nb in range(1, n + 1):
        if n % nb:
            continue
        in_bytes = nb * (ho + 1) * (wo + 1) * cin4 * 2
        out_bytes = nb * ho * wo * coutp * 2
        if 2 * (in_bytes + out_bytes) > BLOCK_VMEM_BUDGET:
            break
        best = nb
        if nb * ho * wo >= 512:
            break
    return best


def discriminator_forward(x_nchw, params):
    n = x_nchw.shape[0]
    act = jnp.transpose(x_nchw, (0, 2, 3, 1)).astype(jnp.float32)   # NHWC, once
    cin = act.shape[-1]
    cin_eff = _round_up(cin, 32)                 # make 4*cin a multiple of 128
    if cin_eff != cin:
        act = jnp.pad(act, ((0, 0), (0, 0), (0, 0), (0, cin_eff - cin)))

    s = _space_to_depth_pad(act.astype(jnp.bfloat16))               # first-layer s2d
    blocks = params["blocks"]
    y4 = None
    last_scale = last_shift = None
    for li, (w, gamma, beta) in enumerate(blocks):
        ho, wo = s.shape[1] - 1, s.shape[2] - 1
        cin4 = s.shape[3]
        cout = w.shape[0]
        coutp = _round_up(cout, LANES)
        w2 = _build_block_weight(w, cin4 // 4, coutp)
        nb = _pick_batch_block(n, ho, wo, cin4, coutp)

        y, stats = _conv_s2d_call(s, w2, nb, ho, wo, coutp)         # pre-BN, bf16
        scale, shift = _bn_scale_shift(stats, gamma, beta,
                                       jnp.float32(n * ho * wo), coutp)
        y4 = y.reshape(n, ho, wo, coutp)
        if li + 1 < len(blocks):
            # BN + LeakyReLU + next layer's space-to-depth: one XLA-fused
            # elementwise/data-movement pass over the activation.
            a = y4.astype(jnp.float32) * scale + shift
            a = jnp.where(a >= 0.0, a, LRELU_SLOPE * a).astype(jnp.bfloat16)
            s = _space_to_depth_pad(a)
        else:
            last_scale, last_shift = scale, shift

    # Last block's BN + LeakyReLU folded into the final 4x4/s1/p0 conv kernel.
    hf, wf, c_eff = y4.shape[1], y4.shape[2], y4.shape[3]
    ho_f, wo_f = hf - 3, wf - 3
    w_out = _build_out_weight(params["out_conv"], c_eff)
    logits = _final_conv_call(y4, last_scale[None, :], last_shift[None, :], w_out)
    return logits[:, 0].reshape(n, ho_f * wo_f)          # sigmoid(out_conv).flatten(1)


# ----------------------------------------------------------------------------
# Pure-JAX reference (f32) for a sanity check, and deterministic init
# ----------------------------------------------------------------------------
def reference_forward(x_nchw, params):
    act = x_nchw
    for (w, gamma, beta) in params["blocks"]:
        y = jax.lax.conv_general_dilated(
            act, w, window_strides=(2, 2), padding=((1, 1), (1, 1)),
            dimension_numbers=("NCHW", "OIHW", "NCHW"))
        mean = jnp.mean(y, axis=(0, 2, 3), keepdims=True)
        var = jnp.mean((y - mean) ** 2, axis=(0, 2, 3), keepdims=True)
        yn = (y - mean) * jax.lax.rsqrt(var + BN_EPS)
        yn = yn * gamma[None, :, None, None] + beta[None, :, None, None]
        act = jnp.where(yn >= 0, yn, LRELU_SLOPE * yn)
    y = jax.lax.conv_general_dilated(
        act, params["out_conv"], window_strides=(1, 1), padding=((0, 0), (0, 0)),
        dimension_numbers=("NCHW", "OIHW", "NCHW"))
    return (1.0 / (1.0 + jnp.exp(-y))).reshape(y.shape[0], -1)


def init_params(key, in_channel, channel_sizes):
    blocks = []
    c_in = in_channel
    for c_out in channel_sizes:
        key, k1, k2 = jax.random.split(key, 3)
        w = 0.02 * jax.random.normal(k1, (c_out, c_in, 4, 4), jnp.float32)
        gamma = 1.0 + 0.02 * jax.random.normal(k2, (c_out,), jnp.float32)
        beta = jnp.zeros((c_out,), jnp.float32)
        blocks.append((w, gamma, beta))
        c_in = c_out
    key, k3 = jax.random.split(key)
    out_w = 0.02 * jax.random.normal(k3, (1, channel_sizes[-1], 4, 4), jnp.float32)
    return {"blocks": blocks, "out_conv": out_w}


if __name__ == "__main__":
    key = jax.random.PRNGKey(0)
    in_channel = 4
    channel_sizes = [8, 16]
    batch, spatial = 2, 16       # 16 -> 8 -> 4 -> out_conv(4x4, s1, p0) -> 1x1

    k_x, k_p = jax.random.split(key)
    x = jax.random.normal(k_x, (batch, in_channel, spatial, spatial), jnp.float32)
    params = init_params(k_p, in_channel, channel_sizes)

    fwd = jax.jit(discriminator_forward)
    out = jax.block_until_ready(fwd(x, params))

    assert out.shape == (batch, 1), out.shape
    assert bool(jnp.all(jnp.isfinite(out)))
    assert bool(jnp.all((out >= 0.0) & (out <= 1.0)))
    ref = reference_forward(x, params)
    assert bool(jnp.max(jnp.abs(out - ref)) < 5e-2), "mismatch vs f32 reference"
    print("KERNEL_OK")
</pallas_src>

<mosaic_0001>
module attributes {stable_mosaic.version = 11 : i64} {
  func.func @_conv_s2d_kernel(%arg0: i32, %arg1: memref<2x9x9x128xbf16, #tpu.memory_space<vmem>>, %arg2: memref<512x128xbf16, #tpu.memory_space<vmem>>, %arg3: memref<128x128xbf16, #tpu.memory_space<vmem>>, %arg4: memref<1x2x128xf32, #tpu.memory_space<vmem>>) attributes {dimension_semantics = [#tpu.dimension_semantics<parallel>], iteration_bounds = array<i64: 1>, scalar_prefetch = 0 : i64, scratch_operands = 0 : i64, tpu.core_type = #tpu.core_type<tc>, window_params = [{transform_indices = @transform_0, window_bounds = array<i64: 2, 9, 9, 128>}, {pipeline_mode = #tpu.pipeline_mode<synchronous>, transform_indices = @transform_1, window_bounds = array<i64: 512, 128>}, {transform_indices = @transform_2, window_bounds = array<i64: 128, 128>}, {transform_indices = @transform_3, window_bounds = array<i64: 1, 2, 128>}]} {
    %c0 = arith.constant 0 : index
    %c0_0 = arith.constant 0 : index
    %c0_1 = arith.constant 0 : index
    %c0_2 = arith.constant 0 : index
    %0 = vector.load %arg1[%c0, %c0_0, %c0_1, %c0_2] : memref<2x9x9x128xbf16, #tpu.memory_space<vmem>>, vector<2x9x9x128xbf16>
    %1 = vector.extract_strided_slice %0 {offsets = [0, 0, 0, 0], sizes = [2, 8, 8, 128], strides = [1, 1, 1, 1]} : vector<2x9x9x128xbf16> to vector<2x8x8x128xbf16>
    %2 = vector.shape_cast %1 : vector<2x8x8x128xbf16> to vector<128x128xbf16>
    %3 = vector.extract_strided_slice %0 {offsets = [0, 0, 1, 0], sizes = [2, 8, 8, 128], strides = [1, 1, 1, 1]} : vector<2x9x9x128xbf16> to vector<2x8x8x128xbf16>
    %4 = vector.shape_cast %3 : vector<2x8x8x128xbf16> to vector<128x128xbf16>
    %5 = vector.extract_strided_slice %0 {offsets = [0, 1, 0, 0], sizes = [2, 8, 8, 128], strides = [1, 1, 1, 1]} : vector<2x9x9x128xbf16> to vector<2x8x8x128xbf16>
    %6 = vector.shape_cast %5 : vector<2x8x8x128xbf16> to vector<128x128xbf16>
    %7 = vector.extract_strided_slice %0 {offsets = [0, 1, 1, 0], sizes = [2, 8, 8, 128], strides = [1, 1, 1, 1]} : vector<2x9x9x128xbf16> to vector<2x8x8x128xbf16>
    %8 = vector.shape_cast %7 : vector<2x8x8x128xbf16> to vector<128x128xbf16>
    %9 = tpu.concatenate %2, %4, %6, %8 in 1 : vector<128x128xbf16>, vector<128x128xbf16>, vector<128x128xbf16>, vector<128x128xbf16> -> vector<128x512xbf16>
    %c0_3 = arith.constant 0 : index
    %c0_4 = arith.constant 0 : index
    %10 = vector.load %arg2[%c0_3, %c0_4] : memref<512x128xbf16, #tpu.memory_space<vmem>>, vector<512x128xbf16>
    %cst = arith.constant dense<0.000000e+00> : vector<128x128xf32>
    %11 = tpu.matmul %9, %10, %cst {dimension_numbers = #tpu.dot_dimension_numbers<[1], [0], [0], [1], [0, 0, 1, 1], [], []>} : vector<128x512xbf16>, vector<512x128xbf16>, vector<128x128xf32> -> vector<128x128xf32>
    %12 = arith.truncf %11 : vector<128x128xf32> to vector<128x128xbf16>
    %c0_5 = arith.constant 0 : index
    %c0_6 = arith.constant 0 : index
    %13 = vector.load %arg3[%c0_5, %c0_6] : memref<128x128xbf16, #tpu.memory_space<vmem>>, vector<128x128xbf16>
    tpu.vector_store %arg3[%c0_5, %c0_6], %12 {strides = array<i32>} : memref<128x128xbf16, #tpu.memory_space<vmem>>, vector<128x128xbf16>,
    %cst_7 = arith.constant dense<0.000000e+00> : vector<128xf32>
    %14 = vector.multi_reduction <add>, %11, %cst_7 [0] : vector<128x128xf32> to vector<128xf32>
    %15 = vector.shape_cast %14 : vector<128xf32> to vector<1x128xf32>
    %c0_8 = arith.constant 0 : index
    %c0_9 = arith.constant 0 : index
    %c0_10 = arith.constant 0 : index
    %16 = vector.load %arg4[%c0_8, %c0_9, %c0_10] : memref<1x2x128xf32, #tpu.memory_space<vmem>>, vector<1x1x128xf32>
    %17 = vector.shape_cast %16 : vector<1x1x128xf32> to vector<1x128xf32>
    %18 = vector.shape_cast %15 : vector<1x128xf32> to vector<1x1x128xf32>
    tpu.vector_store %arg4[%c0_8, %c0_9, %c0_10], %18 {strides = array<i32>} : memref<1x2x128xf32, #tpu.memory_space<vmem>>, vector<1x1x128xf32>,
    %19 = arith.mulf %11, %11 : vector<128x128xf32>
    %cst_11 = arith.constant dense<0.000000e+00> : vector<128xf32>
    %20 = vector.multi_reduction <add>, %19, %cst_11 [0] : vector<128x128xf32> to vector<128xf32>
    %21 = vector.shape_cast %20 : vector<128xf32> to vector<1x128xf32>
    %c0_12 = arith.constant 0 : index
    %c1 = arith.constant 1 : index
    %c0_13 = arith.constant 0 : index
    %22 = vector.load %arg4[%c0_12, %c1, %c0_13] : memref<1x2x128xf32, #tpu.memory_space<vmem>>, vector<1x1x128xf32>
    %23 = vector.shape_cast %22 : vector<1x1x128xf32> to vector<1x128xf32>
    %24 = vector.shape_cast %21 : vector<1x128xf32> to vector<1x1x128xf32>
    tpu.vector_store %arg4[%c0_12, %c1, %c0_13], %24 {strides = array<i32>} : memref<1x2x128xf32, #tpu.memory_space<vmem>>, vector<1x1x128xf32>,
    return
  }
  func.func @transform_0(%arg0: i32) -> (i32, i32, i32, i32) {
    %c0_i32 = arith.constant 0 : i32
    %c0_i32_0 = arith.constant 0 : i32
    %c0_i32_1 = arith.constant 0 : i32
    %c0_i32_2 = arith.constant 0 : i32
    return %arg0, %c0_i32, %c0_i32_0, %c0_i32_1 : i32, i32, i32, i32
  }
  func.func @transform_1(%arg0: i32) -> (i32, i32) {
    %c0_i32 = arith.constant 0 : i32
    %c0_i32_0 = arith.constant 0 : i32
    %c0_i32_1 = arith.constant 0 : i32
    return %c0_i32, %c0_i32_0 : i32, i32
  }
  func.func @transform_2(%arg0: i32) -> (i32, i32) {
    %c0_i32 = arith.constant 0 : i32
    %c0_i32_0 = arith.constant 0 : i32
    return %arg0, %c0_i32 : i32, i32
  }
  func.func @transform_3(%arg0: i32) -> (i32, i32, i32) {
    %c0_i32 = arith.constant 0 : i32
    %c0_i32_0 = arith.constant 0 : i32
    %c0_i32_1 = arith.constant 0 : i32
    return %arg0, %c0_i32, %c0_i32_0 : i32, i32, i32
  }
}

module attributes {stable_mosaic.version = 11 : i64} {
  func.func @_conv_s2d_kernel(%arg0: i32, %arg1: memref<2x5x5x512xbf16, #tpu.memory_space<vmem>>, %arg2: memref<2048x128xbf16, #tpu.memory_space<vmem>>, %arg3: memref<32x128xbf16, #tpu.memory_space<vmem>>, %arg4: memref<1x2x128xf32, #tpu.memory_space<vmem>>) attributes {dimension_semantics = [#tpu.dimension_semantics<parallel>], iteration_bounds = array<i64: 1>, scalar_prefetch = 0 : i64, scratch_operands = 0 : i64, tpu.core_type = #tpu.core_type<tc>, window_params = [{transform_indices = @transform_0, window_bounds = array<i64: 2, 5, 5, 512>}, {pipeline_mode = #tpu.pipeline_mode<synchronous>, transform_indices = @transform_1, window_bounds = array<i64: 2048, 128>}, {transform_indices = @transform_2, window_bounds = array<i64: 32, 128>}, {transform_indices = @transform_3, window_bounds = array<i64: 1, 2, 128>}]} {
    %c0 = arith.constant 0 : index
    %c0_0 = arith.constant 0 : index
    %c0_1 = arith.constant 0 : index
    %c0_2 = arith.constant 0 : index
    %0 = vector.load %arg1[%c0, %c0_0, %c0_1, %c0_2] : memref<2x5x5x512xbf16, #tpu.memory_space<vmem>>, vector<2x5x5x512xbf16>
    %1 = vector.extract_strided_slice %0 {offsets = [0, 0, 0, 0], sizes = [2, 4, 4, 512], strides = [1, 1, 1, 1]} : vector<2x5x5x512xbf16> to vector<2x4x4x512xbf16>
    %2 = vector.shape_cast %1 : vector<2x4x4x512xbf16> to vector<32x512xbf16>
    %3 = vector.extract_strided_slice %0 {offsets = [0, 0, 1, 0], sizes = [2, 4, 4, 512], strides = [1, 1, 1, 1]} : vector<2x5x5x512xbf16> to vector<2x4x4x512xbf16>
    %4 = vector.shape_cast %3 : vector<2x4x4x512xbf16> to vector<32x512xbf16>
    %5 = vector.extract_strided_slice %0 {offsets = [0, 1, 0, 0], sizes = [2, 4, 4, 512], strides = [1, 1, 1, 1]} : vector<2x5x5x512xbf16> to vector<2x4x4x512xbf16>
    %6 = vector.shape_cast %5 : vector<2x4x4x512xbf16> to vector<32x512xbf16>
    %7 = vector.extract_strided_slice %0 {offsets = [0, 1, 1, 0], sizes = [2, 4, 4, 512], strides = [1, 1, 1, 1]} : vector<2x5x5x512xbf16> to vector<2x4x4x512xbf16>
    %8 = vector.shape_cast %7 : vector<2x4x4x512xbf16> to vector<32x512xbf16>
    %9 = tpu.concatenate %2, %4, %6, %8 in 1 : vector<32x512xbf16>, vector<32x512xbf16>, vector<32x512xbf16>, vector<32x512xbf16> -> vector<32x2048xbf16>
    %c0_3 = arith.constant 0 : index
    %c0_4 = arith.constant 0 : index
    %10 = vector.load %arg2[%c0_3, %c0_4] : memref<2048x128xbf16, #tpu.memory_space<vmem>>, vector<2048x128xbf16>
    %cst = arith.constant dense<0.000000e+00> : vector<32x128xf32>
    %11 = tpu.matmul %9, %10, %cst {dimension_numbers = #tpu.dot_dimension_numbers<[1], [0], [0], [1], [0, 0, 1, 1], [], []>} : vector<32x2048xbf16>, vector<2048x128xbf16>, vector<32x128xf32> -> vector<32x128xf32>
    %12 = arith.truncf %11 : vector<32x128xf32> to vector<32x128xbf16>
    %c0_5 = arith.constant 0 : index
    %c0_6 = arith.constant 0 : index
    %13 = vector.load %arg3[%c0_5, %c0_6] : memref<32x128xbf16, #tpu.memory_space<vmem>>, vector<32x128xbf16>
    tpu.vector_store %arg3[%c0_5, %c0_6], %12 {strides = array<i32>} : memref<32x128xbf16, #tpu.memory_space<vmem>>, vector<32x128xbf16>,
    %cst_7 = arith.constant dense<0.000000e+00> : vector<128xf32>
    %14 = vector.multi_reduction <add>, %11, %cst_7 [0] : vector<32x128xf32> to vector<128xf32>
    %15 = vector.shape_cast %14 : vector<128xf32> to vector<1x128xf32>
    %c0_8 = arith.constant 0 : index
    %c0_9 = arith.constant 0 : index
    %c0_10 = arith.constant 0 : index
    %16 = vector.load %arg4[%c0_8, %c0_9, %c0_10] : memref<1x2x128xf32, #tpu.memory_space<vmem>>, vector<1x1x128xf32>
    %17 = vector.shape_cast %16 : vector<1x1x128xf32> to vector<1x128xf32>
    %18 = vector.shape_cast %15 : vector<1x128xf32> to vector<1x1x128xf32>
    tpu.vector_store %arg4[%c0_8, %c0_9, %c0_10], %18 {strides = array<i32>} : memref<1x2x128xf32, #tpu.memory_space<vmem>>, vector<1x1x128xf32>,
    %19 = arith.mulf %11, %11 : vector<32x128xf32>
    %cst_11 = arith.constant dense<0.000000e+00> : vector<128xf32>
    %20 = vector.multi_reduction <add>, %19, %cst_11 [0] : vector<32x128xf32> to vector<128xf32>
    %21 = vector.shape_cast %20 : vector<128xf32> to vector<1x128xf32>
    %c0_12 = arith.constant 0 : index
    %c1 = arith.constant 1 : index
    %c0_13 = arith.constant 0 : index
    %22 = vector.load %arg4[%c0_12, %c1, %c0_13] : memref<1x2x128xf32, #tpu.memory_space<vmem>>, vector<1x1x128xf32>
    %23 = vector.shape_cast %22 : vector<1x1x128xf32> to vector<1x128xf32>
    %24 = vector.shape_cast %21 : vector<1x128xf32> to vector<1x1x128xf32>
    tpu.vector_store %arg4[%c0_12, %c1, %c0_13], %24 {strides = array<i32>} : memref<1x2x128xf32, #tpu.memory_space<vmem>>, vector<1x1x128xf32>,
    return
  }
  func.func @transform_0(%arg0: i32) -> (i32, i32, i32, i32) {
    %c0_i32 = arith.constant 0 : i32
    %c0_i32_0 = arith.constant 0 : i32
    %c0_i32_1 = arith.constant 0 : i32
    %c0_i32_2 = arith.constant 0 : i32
    return %arg0, %c0_i32, %c0_i32_0, %c0_i32_1 : i32, i32, i32, i32
  }
  func.func @transform_1(%arg0: i32) -> (i32, i32) {
    %c0_i32 = arith.constant 0 : i32
    %c0_i32_0 = arith.constant 0 : i32
    %c0_i32_1 = arith.constant 0 : i32
    return %c0_i32, %c0_i32_0 : i32, i32
  }
  func.func @transform_2(%arg0: i32) -> (i32, i32) {
    %c0_i32 = arith.constant 0 : i32
    %c0_i32_0 = arith.constant 0 : i32
    return %arg0, %c0_i32 : i32, i32
  }
  func.func @transform_3(%arg0: i32) -> (i32, i32, i32) {
    %c0_i32 = arith.constant 0 : i32
    %c0_i32_0 = arith.constant 0 : i32
    %c0_i32_1 = arith.constant 0 : i32
    return %arg0, %c0_i32, %c0_i32_0 : i32, i32, i32
  }
}

module attributes {stable_mosaic.version = 11 : i64} {
  func.func @_final_conv_kernel(%arg0: i32, %arg1: memref<2x4x4x128xbf16, #tpu.memory_space<vmem>>, %arg2: memref<1x128xf32, #tpu.memory_space<vmem>>, %arg3: memref<1x128xf32, #tpu.memory_space<vmem>>, %arg4: memref<2048x128xbf16, #tpu.memory_space<vmem>>, %arg5: memref<2x128xf32, #tpu.memory_space<vmem>>) attributes {dimension_semantics = [#tpu.dimension_semantics<arbitrary>], iteration_bounds = array<i64: 1>, scalar_prefetch = 0 : i64, scratch_operands = 0 : i64, tpu.core_type = #tpu.core_type<tc>, window_params = [{pipeline_mode = #tpu.pipeline_mode<synchronous>, transform_indices = @transform_0, window_bounds = array<i64: 2, 4, 4, 128>}, {pipeline_mode = #tpu.pipeline_mode<synchronous>, transform_indices = @transform_1, window_bounds = array<i64: 1, 128>}, {pipeline_mode = #tpu.pipeline_mode<synchronous>, transform_indices = @transform_2, window_bounds = array<i64: 1, 128>}, {pipeline_mode = #tpu.pipeline_mode<synchronous>, transform_indices = @transform_3, window_bounds = array<i64: 2048, 128>}, {pipeline_mode = #tpu.pipeline_mode<synchronous>, transform_indices = @transform_4, window_bounds = array<i64: 2, 128>}]} {
    %c0 = arith.constant 0 : index
    %c0_0 = arith.constant 0 : index
    %c0_1 = arith.constant 0 : index
    %c0_2 = arith.constant 0 : index
    %0 = vector.load %arg1[%c0, %c0_0, %c0_1, %c0_2] : memref<2x4x4x128xbf16, #tpu.memory_space<vmem>>, vector<2x4x4x128xbf16>
    %1 = arith.extf %0 : vector<2x4x4x128xbf16> to vector<2x4x4x128xf32>
    %c0_3 = arith.constant 0 : index
    %c0_4 = arith.constant 0 : index
    %2 = vector.load %arg2[%c0_3, %c0_4] : memref<1x128xf32, #tpu.memory_space<vmem>>, vector<1x128xf32>
    %3 = vector.shape_cast %2 : vector<1x128xf32> to vector<1x1x1x128xf32>
    %4 = vector.broadcast %3 : vector<1x1x1x128xf32> to vector<2x4x4x128xf32>
    %5 = arith.mulf %1, %4 : vector<2x4x4x128xf32>
    %c0_5 = arith.constant 0 : index
    %c0_6 = arith.constant 0 : index
    %6 = vector.load %arg3[%c0_5, %c0_6] : memref<1x128xf32, #tpu.memory_space<vmem>>, vector<1x128xf32>
    %7 = vector.shape_cast %6 : vector<1x128xf32> to vector<1x1x1x128xf32>
    %8 = vector.broadcast %7 : vector<1x1x1x128xf32> to vector<2x4x4x128xf32>
    %9 = arith.addf %5, %8 : vector<2x4x4x128xf32>
    %cst = arith.constant 2.000000e-01 : f32
    %10 = vector.broadcast %cst : f32 to vector<2x4x4x128xf32>
    %11 = arith.mulf %10, %9 : vector<2x4x4x128xf32>
    %12 = arith.maximumf %9, %11 : vector<2x4x4x128xf32>
    %13 = arith.truncf %12 : vector<2x4x4x128xf32> to vector<2x4x4x128xbf16>
    %14 = vector.extract_strided_slice %13 {offsets = [0, 0, 0, 0], sizes = [2, 1, 1, 128], strides = [1, 1, 1, 1]} : vector<2x4x4x128xbf16> to vector<2x1x1x128xbf16>
    %15 = vector.shape_cast %14 : vector<2x1x1x128xbf16> to vector<2x128xbf16>
    %16 = vector.extract_strided_slice %13 {offsets = [0, 0, 1, 0], sizes = [2, 1, 1, 128], strides = [1, 1, 1, 1]} : vector<2x4x4x128xbf16> to vector<2x1x1x128xbf16>
    %17 = vector.shape_cast %16 : vector<2x1x1x128xbf16> to vector<2x128xbf16>
    %18 = vector.extract_strided_slice %13 {offsets = [0, 0, 2, 0], sizes = [2, 1, 1, 128], strides = [1, 1, 1, 1]} : vector<2x4x4x128xbf16> to vector<2x1x1x128xbf16>
    %19 = vector.shape_cast %18 : vector<2x1x1x128xbf16> to vector<2x128xbf16>
    %20 = vector.extract_strided_slice %13 {offsets = [0, 0, 3, 0], sizes = [2, 1, 1, 128], strides = [1, 1, 1, 1]} : vector<2x4x4x128xbf16> to vector<2x1x1x128xbf16>
    %21 = vector.shape_cast %20 : vector<2x1x1x128xbf16> to vector<2x128xbf16>
    %22 = vector.extract_strided_slice %13 {offsets = [0, 1, 0, 0], sizes = [2, 1, 1, 128], strides = [1, 1, 1, 1]} : vector<2x4x4x128xbf16> to vector<2x1x1x128xbf16>
    %23 = vector.shape_cast %22 : vector<2x1x1x128xbf16> to vector<2x128xbf16>
    %24 = vector.extract_strided_slice %13 {offsets = [0, 1, 1, 0], sizes = [2, 1, 1, 128], strides = [1, 1, 1, 1]} : vector<2x4x4x128xbf16> to vector<2x1x1x128xbf16>
    %25 = vector.shape_cast %24 : vector<2x1x1x128xbf16> to vector<2x128xbf16>
    %26 = vector.extract_strided_slice %13 {offsets = [0, 1, 2, 0], sizes = [2, 1, 1, 128], strides = [1, 1, 1, 1]} : vector<2x4x4x128xbf16> to vector<2x1x1x128xbf16>
    %27 = vector.shape_cast %26 : vector<2x1x1x128xbf16> to vector<2x128xbf16>
    %28 = vector.extract_strided_slice %13 {offsets = [0, 1, 3, 0], sizes = [2, 1, 1, 128], strides = [1, 1, 1, 1]} : vector<2x4x4x128xbf16> to vector<2x1x1x128xbf16>
    %29 = vector.shape_cast %28 : vector<2x1x1x128xbf16> to vector<2x128xbf16>
    %30 = vector.extract_strided_slice %13 {offsets = [0, 2, 0, 0], sizes = [2, 1, 1, 128], strides = [1, 1, 1, 1]} : vector<2x4x4x128xbf16> to vector<2x1x1x128xbf16>
    %31 = vector.shape_cast %30 : vector<2x1x1x128xbf16> to vector<2x128xbf16>
    %32 = vector.extract_strided_slice %13 {offsets = [0, 2, 1, 0], sizes = [2, 1, 1, 128], strides = [1, 1, 1, 1]} : vector<2x4x4x128xbf16> to vector<2x1x1x128xbf16>
    %33 = vector.shape_cast %32 : vector<2x1x1x128xbf16> to vector<2x128xbf16>
    %34 = vector.extract_strided_slice %13 {offsets = [0, 2, 2, 0], sizes = [2, 1, 1, 128], strides = [1, 1, 1, 1]} : vector<2x4x4x128xbf16> to vector<2x1x1x128xbf16>
    %35 = vector.shape_cast %34 : vector<2x1x1x128xbf16> to vector<2x128xbf16>
    %36 = vector.extract_strided_slice %13 {offsets = [0, 2, 3, 0], sizes = [2, 1, 1, 128], strides = [1, 1, 1, 1]} : vector<2x4x4x128xbf16> to vector<2x1x1x128xbf16>
    %37 = vector.shape_cast %36 : vector<2x1x1x128xbf16> to vector<2x128xbf16>
    %38 = vector.extract_strided_slice %13 {offsets = [0, 3, 0, 0], sizes = [2, 1, 1, 128], strides = [1, 1, 1, 1]} : vector<2x4x4x128xbf16> to vector<2x1x1x128xbf16>
    %39 = vector.shape_cast %38 : vector<2x1x1x128xbf16> to vector<2x128xbf16>
    %40 = vector.extract_strided_slice %13 {offsets = [0, 3, 1, 0], sizes = [2, 1, 1, 128], strides = [1, 1, 1, 1]} : vector<2x4x4x128xbf16> to vector<2x1x1x128xbf16>
    %41 = vector.shape_cast %40 : vector<2x1x1x128xbf16> to vector<2x128xbf16>
    %42 = vector.extract_strided_slice %13 {offsets = [0, 3, 2, 0], sizes = [2, 1, 1, 128], strides = [1, 1, 1, 1]} : vector<2x4x4x128xbf16> to vector<2x1x1x128xbf16>
    %43 = vector.shape_cast %42 : vector<2x1x1x128xbf16> to vector<2x128xbf16>
    %44 = vector.extract_strided_slice %13 {offsets = [0, 3, 3, 0], sizes = [2, 1, 1, 128], strides = [1, 1, 1, 1]} : vector<2x4x4x128xbf16> to vector<2x1x1x128xbf16>
    %45 = vector.shape_cast %44 : vector<2x1x1x128xbf16> to vector<2x128xbf16>
    %46 = tpu.concatenate %15, %17, %19, %21, %23, %25, %27, %29, %31, %33, %35, %37, %39, %41, %43, %45 in 1 : vector<2x128xbf16>, vector<2x128xbf16>, vector<2x128xbf16>, vector<2x128xbf16>, vector<2x128xbf16>, vector<2x128xbf16>, vector<2x128xbf16>, vector<2x128xbf16>, vector<2x128xbf16>, vector<2x128xbf16>, vector<2x128xbf16>, vector<2x128xbf16>, vector<2x128xbf16>, vector<2x128xbf16>, vector<2x128xbf16>, vector<2x128xbf16> -> vector<2x2048xbf16>
    %c0_7 = arith.constant 0 : index
    %c0_8 = arith.constant 0 : index
    %47 = vector.load %arg4[%c0_7, %c0_8] : memref<2048x128xbf16, #tpu.memory_space<vmem>>, vector<2048x128xbf16>
    %cst_9 = arith.constant dense<0.000000e+00> : vector<2x128xf32>
    %48 = tpu.matmul %46, %47, %cst_9 {dimension_numbers = #tpu.dot_dimension_numbers<[1], [0], [0], [1], [0, 0, 1, 1], [], []>} : vector<2x2048xbf16>, vector<2048x128xbf16>, vector<2x128xf32> -> vector<2x128xf32>
    %cst_10 = arith.constant 0.000000e+00 : f32
    %49 = vector.broadcast %cst_10 : f32 to vector<2x128xf32>
    %50 = arith.subf %49, %48 : vector<2x128xf32>
    %51 = math.exp %50 : vector<2x128xf32>
    %cst_11 = arith.constant 1.000000e+00 : f32
    %52 = vector.broadcast %cst_11 : f32 to vector<2x128xf32>
    %53 = arith.addf %52, %51 : vector<2x128xf32>
    %54 = tpu.reciprocal %53 {approx = true} : vector<2x128xf32> -> vector<2x128xf32>
    %c0_12 = arith.constant 0 : index
    %c0_13 = arith.constant 0 : index
    %55 = vector.load %arg5[%c0_12, %c0_13] : memref<2x128xf32, #tpu.memory_space<vmem>>, vector<2x128xf32>
    tpu.vector_store %arg5[%c0_12, %c0_13], %54 {strides = array<i32>} : memref<2x128xf32, #tpu.memory_space<vmem>>, vector<2x128xf32>,
    return
  }
  func.func @transform_0(%arg0: i32) -> (i32, i32, i32, i32) {
    %c0_i32 = arith.constant 0 : i32
    %c0_i32_0 = arith.constant 0 : i32
    %c0_i32_1 = arith.constant 0 : i32
    %c0_i32_2 = arith.constant 0 : i32
    %c0_i32_3 = arith.constant 0 : i32
    return %c0_i32, %c0_i32_0, %c0_i32_1, %c0_i32_2 : i32, i32, i32, i32
  }
  func.func @transform_1(%arg0: i32) -> (i32, i32) {
    %c0_i32 = arith.constant 0 : i32
    %c0_i32_0 = arith.constant 0 : i32
    %c0_i32_1 = arith.constant 0 : i32
    return %c0_i32, %c0_i32_0 : i32, i32
  }
  func.func @transform_2(%arg0: i32) -> (i32, i32) {
    %c0_i32 = arith.constant 0 : i32
    %c0_i32_0 = arith.constant 0 : i32
    %c0_i32_1 = arith.constant 0 : i32
    return %c0_i32, %c0_i32_0 : i32, i32
  }
  func.func @transform_3(%arg0: i32) -> (i32, i32) {
    %c0_i32 = arith.constant 0 : i32
    %c0_i32_0 = arith.constant 0 : i32
    %c0_i32_1 = arith.constant 0 : i32
    return %c0_i32, %c0_i32_0 : i32, i32
  }
  func.func @transform_4(%arg0: i32) -> (i32, i32) {
    %c0_i32 = arith.constant 0 : i32
    %c0_i32_0 = arith.constant 0 : i32
    %c0_i32_1 = arith.constant 0 : i32
    return %c0_i32, %c0_i32_0 : i32, i32
  }
}

</mosaic_0001>

<llo_original>
// kernel: discriminator_forward.3
$region0: #{discriminator_forward.3}
  #allocation0 [shape = 'u32[]', space=smem, size = 0x4, offset = 0x4, fixed_abs, tag = 'smem constant byte address 0x4 - core index']
  #allocation1 [shape = 'u32[144,128]{1,0:T(1,128)}', space=vmem, size = 0x12000, scoped, tag = 'internal scratch']
  %s0 = inlined_call_operand.vmem [shape: bf16[2,9,9,128], index: 0, kind: input, shape index: {}]
  %s1 = inlined_call_operand.vmem [shape: bf16[512,128], index: 1, kind: input, shape index: {}]
  %s2 = inlined_call_operand.vmem [shape: bf16[128,128], index: 2, kind: output, shape index: {0}]
  %s3 = inlined_call_operand.vmem [shape: f32[1,2,128], index: 3, kind: output, shape index: {1}]
  %4 = xla_tuple %s2, %s3
  %s5 = sld [smem:[#allocation0]]
  $region26: #{discriminator_forward.3} parent=0
    _
  %s7 = ssub.s32 1, %s5
  %s8 = scalar_select 0, %s7, %s5
  // Predicated region
  $region2: #{discriminator_forward.3} parent=0 // pred_check
    _
  $region3: #{discriminator_forward.3} parent=0 // pred_check_branch
    %10 = sbr.rel (0) target = $region5
  $region4: #{discriminator_forward.3} parent=0 // pred_region
    _
  $region5: #{discriminator_forward.3} parent=0 // pred_fallthru
    _
  // Predicated region
  $region6: #{discriminator_forward.3} parent=0 // pred_check
    _
  $region7: #{discriminator_forward.3} parent=0 // pred_check_branch
    %12 = sbr.rel (0) target = $region9
  $region8: #{discriminator_forward.3} parent=0 // pred_region
    _
  $region9: #{discriminator_forward.3} parent=0 // pred_fallthru
    _
  %v14 = vld [vmem:[%s0] sm:$0xf]
  %v15 = vld [vmem:[%s0 + $0x4] sm:$0x1]
  %v16 = vld [vmem:[%s0 + $0x8] sm:$0xf]
  %v17 = vld [vmem:[%s0 + $0xc] sm:$0x1]
  %v18 = vld [vmem:[%s0 + $0x10] sm:$0xf]
  %v19 = vld [vmem:[%s0 + $0x14] sm:$0x1]
  %v20 = vld [vmem:[%s0 + $0x18] sm:$0xf]
  %v21 = vld [vmem:[%s0 + $0x1c] sm:$0x1]
  %v22 = vld [vmem:[%s0 + $0x20] sm:$0xf]
  %v23 = vld [vmem:[%s0 + $0x24] sm:$0x1]
  %v24 = vld [vmem:[%s0 + $0x28] sm:$0xf]
  %v25 = vld [vmem:[%s0 + $0x2c] sm:$0x1]
  %v26 = vld [vmem:[%s0 + $0x30] sm:$0xf]
  %v27 = vld [vmem:[%s0 + $0x34] sm:$0x1]
  %v28 = vld [vmem:[%s0 + $0x38] sm:$0xf]
  %v29 = vld [vmem:[%s0 + $0x3c] sm:$0x1]
  %v30 = vld [vmem:[%s0 + $0x40] sm:$0xf]
  %v31 = vld [vmem:[%s0 + $0x44] sm:$0x1]
  %v32 = vld [vmem:[%s0 + $0x48] sm:$0xf]
  %v33 = vld [vmem:[%s0 + $0x4c] sm:$0x1]
  %v34 = vld [vmem:[%s0 + $0x50] sm:$0xf]
  %v35 = vld [vmem:[%s0 + $0x54] sm:$0x1]
  %v36 = vld [vmem:[%s0 + $0x58] sm:$0xf]
  %v37 = vld [vmem:[%s0 + $0x5c] sm:$0x1]
  %v38 = vld [vmem:[%s0 + $0x60] sm:$0xf]
  %v39 = vld [vmem:[%s0 + $0x64] sm:$0x1]
  %v40 = vld [vmem:[%s0 + $0x68] sm:$0xf]
  %v41 = vld [vmem:[%s0 + $0x6c] sm:$0x1]
  %v42 = vld [vmem:[%s0 + $0x70] sm:$0xf]
  %v43 = vld [vmem:[%s0 + $0x74] sm:$0x1]
  %v44 = vld [vmem:[%s0 + $0x78] sm:$0xf]
  %v45 = vld [vmem:[%s0 + $0x7c] sm:$0x1]
  %v46 = vld [vmem:[%s0 + $0x80] sm:$0xf]
  %v47 = vld [vmem:[%s0 + $0x84] sm:$0x1]
  %v48 = vld [vmem:[%s0 + $0x88] sm:$0xf]
  %v49 = vld [vmem:[%s0 + $0x8c] sm:$0x1]
  %vm50 = vsmask.f32 3328
  %vm51 = vsmask.f32 7440
  %vm52 = vmor %vm50, %vm51
  %v54 = vshrl.u32 %v14, 16
  %v56 = vrot.slane %v54, 4
  %v57 = vshll.u32 %v14, 16
  %v59 = vrot.slane %v57, 5
  %v60 = vor.u32 %v56, %v59
  %v61 = vrot.slane %v60, 4
  %v63 = vshll.u32 %v15, 16
  %v65 = vrot.slane %v63, 5
  %v66 = vsel %vm52, %v61, %v65
  %v68 = vshrl.u32 %v16, 16
  %v70 = vrot.slane %v68, 4
  %v71 = vshll.u32 %v16, 16
  %v73 = vrot.slane %v71, 5
  %v74 = vor.u32 %v70, %v73
  %v75 = vrot.slane %v74, 4
  %v77 = vshll.u32 %v17, 16
  %v79 = vrot.slane %v77, 5
  %v80 = vsel %vm52, %v75, %v79
  %v82 = vshrl.u32 %v18, 16
  %v84 = vrot.slane %v82, 4
  %v85 = vshll.u32 %v18, 16
  %v87 = vrot.slane %v85, 5
  %v88 = vor.u32 %v84, %v87
  %v89 = vrot.slane %v88, 4
  %v91 = vshll.u32 %v19, 16
  %v93 = vrot.slane %v91, 5
  %v94 = vsel %vm52, %v89, %v93
  %v96 = vshrl.u32 %v20, 16
  %v98 = vrot.slane %v96, 4
  %v99 = vshll.u32 %v20, 16
  %v101 = vrot.slane %v99, 5
  %v102 = vor.u32 %v98, %v101
  %v103 = vrot.slane %v102, 4
  %v105 = vshll.u32 %v21, 16
  %v107 = vrot.slane %v105, 5
  %v108 = vsel %vm52, %v103, %v107
  %v110 = vshrl.u32 %v22, 16
  %v112 = vrot.slane %v110, 4
  %v113 = vshll.u32 %v22, 16
  %v115 = vrot.slane %v113, 5
  %v116 = vor.u32 %v112, %v115
  %v117 = vrot.slane %v116, 4
  %v119 = vshll.u32 %v23, 16
  %v121 = vrot.slane %v119, 5
  %v122 = vsel %vm52, %v117, %v121
  %v124 = vshrl.u32 %v24, 16
  %v126 = vrot.slane %v124, 4
  %v127 = vshll.u32 %v24, 16
  %v129 = vrot.slane %v127, 5
  %v130 = vor.u32 %v126, %v129
  %v131 = vrot.slane %v130, 4
  %v133 = vshll.u32 %v25, 16
  %v135 = vrot.slane %v133, 5
  %v136 = vsel %vm52, %v131, %v135
  %v138 = vshrl.u32 %v26, 16
  %v140 = vrot.slane %v138, 4
  %v141 = vshll.u32 %v26, 16
  %v143 = vrot.slane %v141, 5
  %v144 = vor.u32 %v140, %v143
  %v145 = vrot.slane %v144, 4
  %v147 = vshll.u32 %v27, 16
  %v149 = vrot.slane %v147, 5
  %v150 = vsel %vm52, %v145, %v149
  %v152 = vshrl.u32 %v28, 16
  %v154 = vrot.slane %v152, 4
  %v155 = vshll.u32 %v28, 16
  %v157 = vrot.slane %v155, 5
  %v158 = vor.u32 %v154, %v157
  %v159 = vrot.slane %v158, 4
  %v161 = vshll.u32 %v29, 16
  %v163 = vrot.slane %v161, 5
  %v164 = vsel %vm52, %v159, %v163
  %v166 = vshrl.u32 %v32, 16
  %v168 = vrot.slane %v166, 4
  %v169 = vshll.u32 %v32, 16
  %v171 = vrot.slane %v169, 5
  %v172 = vor.u32 %v168, %v171
  %v173 = vrot.slane %v172, 4
  %v175 = vshll.u32 %v33, 16
  %v177 = vrot.slane %v175, 5
  %v178 = vsel %vm52, %v173, %v177
  %v180 = vshrl.u32 %v34, 16
  %v182 = vrot.slane %v180, 4
  %v183 = vshll.u32 %v34, 16
  %v185 = vrot.slane %v183, 5
  %v186 = vor.u32 %v182, %v185
  %v187 = vrot.slane %v186, 4
  %v189 = vshll.u32 %v35, 16
  %v191 = vrot.slane %v189, 5
  %v192 = vsel %vm52, %v187, %v191
  %v194 = vshrl.u32 %v36, 16
  %v196 = vrot.slane %v194, 4
  %v197 = vshll.u32 %v36, 16
  %v199 = vrot.slane %v197, 5
  %v200 = vor.u32 %v196, %v199
  %v201 = vrot.slane %v200, 4
  %v203 = vshll.u32 %v37, 16
  %v205 = vrot.slane %v203, 5
  %v206 = vsel %vm52, %v201, %v205
  %v208 = vshrl.u32 %v38, 16
  %v210 = vrot.slane %v208, 4
  %v211 = vshll.u32 %v38, 16
  %v213 = vrot.slane %v211, 5
  %v214 = vor.u32 %v210, %v213
  %v215 = vrot.slane %v214, 4
  %v217 = vshll.u32 %v39, 16
  %v219 = vrot.slane %v217, 5
  %v220 = vsel %vm52, %v215, %v219
  %v222 = vshrl.u32 %v40, 16
  %v224 = vrot.slane %v222, 4
  %v225 = vshll.u32 %v40, 16
  %v227 = vrot.slane %v225, 5
  %v228 = vor.u32 %v224, %v227
  %v229 = vrot.slane %v228, 4
  %v231 = vshll.u32 %v41, 16
  %v233 = vrot.slane %v231, 5
  %v234 = vsel %vm52, %v229, %v233
  %v236 = vshrl.u32 %v42, 16
  %v238 = vrot.slane %v236, 4
  %v239 = vshll.u32 %v42, 16
  %v241 = vrot.slane %v239, 5
  %v242 = vor.u32 %v238, %v241
  %v243 = vrot.slane %v242, 4
  %v245 = vshll.u32 %v43, 16
  %v247 = vrot.slane %v245, 5
  %v248 = vsel %vm52, %v243, %v247
  %v250 = vshrl.u32 %v44, 16
  %v252 = vrot.slane %v250, 4
  %v253 = vshll.u32 %v44, 16
  %v255 = vrot.slane %v253, 5
  %v256 = vor.u32 %v252, %v255
  %v257 = vrot.slane %v256, 4
  %v259 = vshll.u32 %v45, 16
  %v261 = vrot.slane %v259, 5
  %v262 = vsel %vm52, %v257, %v261
  %v264 = vshrl.u32 %v46, 16
  %v266 = vrot.slane %v264, 4
  %v267 = vshll.u32 %v46, 16
  %v269 = vrot.slane %v267, 5
  %v270 = vor.u32 %v266, %v269
  %v271 = vrot.slane %v270, 4
  %v273 = vshll.u32 %v47, 16
  %v275 = vrot.slane %v273, 5
  %v276 = vsel %vm52, %v271, %v275
  %v278 = vshrl.u32 %v30, 16
  %v280 = vrot.slane %v278, 4
  %v281 = vshll.u32 %v30, 16
  %v283 = vrot.slane %v281, 5
  %v284 = vor.u32 %v280, %v283
  %v285 = vrot.slane %v284, 4
  %v287 = vshll.u32 %v31, 16
  %v289 = vrot.slane %v287, 5
  %v290 = vsel %vm52, %v285, %v289
  %v292 = vshrl.u32 %v48, 16
  %v294 = vrot.slane %v292, 4
  %v295 = vshll.u32 %v48, 16
  %v297 = vrot.slane %v295, 5
  %v298 = vor.u32 %v294, %v297
  %v299 = vrot.slane %v298, 4
  %v301 = vshll.u32 %v49, 16
  %v303 = vrot.slane %v301, 5
  %v304 = vsel %vm52, %v299, %v303
  %v321 = vunpack.c.l.b16 %v14
  %v322 = vunpack.c.l.b16 %v16
  %v323 = vunpack.c.l.b16 %v18
  %v324 = vunpack.c.l.b16 %v20
  %v325 = vunpack.c.l.b16 %v22
  %v326 = vunpack.c.l.b16 %v24
  %v327 = vunpack.c.l.b16 %v26
  %v328 = vunpack.c.l.b16 %v28
  %v329 = vunpack.c.l.b16 %v32
  %v330 = vunpack.c.l.b16 %v34
  %v331 = vunpack.c.l.b16 %v36
  %v332 = vunpack.c.l.b16 %v38
  %v333 = vunpack.c.l.b16 %v40
  %v334 = vunpack.c.l.b16 %v42
  %v335 = vunpack.c.l.b16 %v44
  %v336 = vunpack.c.l.b16 %v46
  %v337 = vpack.c.b16 %v322, %v321
  %v338 = vpack.c.b16 %v324, %v323
  %v339 = vpack.c.b16 %v326, %v325
  %v340 = vpack.c.b16 %v328, %v327
  %v341 = vpack.c.b16 %v330, %v329
  %v342 = vpack.c.b16 %v332, %v331
  %v343 = vpack.c.b16 %v334, %v333
  %v344 = vpack.c.b16 %v336, %v335
  %v353 = vunpack.c.l.b16 %v66
  %v354 = vunpack.c.l.b16 %v80
  %v355 = vunpack.c.l.b16 %v94
  %v356 = vunpack.c.l.b16 %v108
  %v357 = vunpack.c.l.b16 %v122
  %v358 = vunpack.c.l.b16 %v136
  %v359 = vunpack.c.l.b16 %v150
  %v360 = vunpack.c.l.b16 %v164
  %v361 = vunpack.c.l.b16 %v178
  %v362 = vunpack.c.l.b16 %v192
  %v363 = vunpack.c.l.b16 %v206
  %v364 = vunpack.c.l.b16 %v220
  %v365 = vunpack.c.l.b16 %v234
  %v366 = vunpack.c.l.b16 %v248
  %v367 = vunpack.c.l.b16 %v262
  %v368 = vunpack.c.l.b16 %v276
  %v369 = vpack.c.b16 %v354, %v353
  %v370 = vpack.c.b16 %v356, %v355
  %v371 = vpack.c.b16 %v358, %v357
  %v372 = vpack.c.b16 %v360, %v359
  %v373 = vpack.c.b16 %v362, %v361
  %v374 = vpack.c.b16 %v364, %v363
  %v375 = vpack.c.b16 %v366, %v365
  %v376 = vpack.c.b16 %v368, %v367
  %v387 = vunpack.c.l.b16 %v30
  %v388 = vunpack.c.l.b16 %v48
  %v389 = vpack.c.b16 %v323, %v322
  %v390 = vpack.c.b16 %v325, %v324
  %v391 = vpack.c.b16 %v327, %v326
  %v392 = vpack.c.b16 %v387, %v328
  %v393 = vpack.c.b16 %v331, %v330
  %v394 = vpack.c.b16 %v333, %v332
  %v395 = vpack.c.b16 %v335, %v334
  %v396 = vpack.c.b16 %v388, %v336
  %v405 = vunpack.c.l.b16 %v290
  %v406 = vunpack.c.l.b16 %v304
  %v407 = vpack.c.b16 %v355, %v354
  %v408 = vpack.c.b16 %v357, %v356
  %v409 = vpack.c.b16 %v359, %v358
  %v410 = vpack.c.b16 %v405, %v360
  %v411 = vpack.c.b16 %v363, %v362
  %v412 = vpack.c.b16 %v365, %v364
  %v413 = vpack.c.b16 %v367, %v366
  %v414 = vpack.c.b16 %v406, %v368
  %v423 = vld [vmem:[%s1] sm:$0xf]
  %v424 = vld [vmem:[%s1 + $0x4] sm:$0xf]
  %v425 = vld [vmem:[%s1 + $0x8] sm:$0xf]
  %v426 = vld [vmem:[%s1 + $0xc] sm:$0xf]
  %v427 = vld [vmem:[%s1 + $0x10] sm:$0xf]
  %v428 = vld [vmem:[%s1 + $0x14] sm:$0xf]
  %v429 = vld [vmem:[%s1 + $0x18] sm:$0xf]
  %v430 = vld [vmem:[%s1 + $0x1c] sm:$0xf]
  %v431 = vld [vmem:[%s1 + $0x20] sm:$0xf]
  %v432 = vld [vmem:[%s1 + $0x24] sm:$0xf]
  %v433 = vld [vmem:[%s1 + $0x28] sm:$0xf]
  %v434 = vld [vmem:[%s1 + $0x2c] sm:$0xf]
  %v435 = vld [vmem:[%s1 + $0x30] sm:$0xf]
  %v436 = vld [vmem:[%s1 + $0x34] sm:$0xf]
  %v437 = vld [vmem:[%s1 + $0x38] sm:$0xf]
  %v438 = vld [vmem:[%s1 + $0x3c] sm:$0xf]
  %v439 = vld [vmem:[%s1 + $0x40] sm:$0xf]
  %v440 = vld [vmem:[%s1 + $0x44] sm:$0xf]
  %v441 = vld [vmem:[%s1 + $0x48] sm:$0xf]
  %v442 = vld [vmem:[%s1 + $0x4c] sm:$0xf]
  %v443 = vld [vmem:[%s1 + $0x50] sm:$0xf]
  %v444 = vld [vmem:[%s1 + $0x54] sm:$0xf]
  %v445 = vld [vmem:[%s1 + $0x58] sm:$0xf]
  %v446 = vld [vmem:[%s1 + $0x5c] sm:$0xf]
  %v447 = vld [vmem:[%s1 + $0x60] sm:$0xf]
  %v448 = vld [vmem:[%s1 + $0x64] sm:$0xf]
  %v449 = vld [vmem:[%s1 + $0x68] sm:$0xf]
  %v450 = vld [vmem:[%s1 + $0x6c] sm:$0xf]
  %v451 = vld [vmem:[%s1 + $0x70] sm:$0xf]
  %v452 = vld [vmem:[%s1 + $0x74] sm:$0xf]
  %v453 = vld [vmem:[%s1 + $0x78] sm:$0xf]
  %v454 = vld [vmem:[%s1 + $0x7c] sm:$0xf]
  %v455 = vld [vmem:[%s1 + $0x80] sm:$0xf]
  %v456 = vld [vmem:[%s1 + $0x84] sm:$0xf]
  %v457 = vld [vmem:[%s1 + $0x88] sm:$0xf]
  %v458 = vld [vmem:[%s1 + $0x8c] sm:$0xf]
  %v459 = vld [vmem:[%s1 + $0x90] sm:$0xf]
  %v460 = vld [vmem:[%s1 + $0x94] sm:$0xf]
  %v461 = vld [vmem:[%s1 + $0x98] sm:$0xf]
  %v462 = vld [vmem:[%s1 + $0x9c] sm:$0xf]
  %v463 = vld [vmem:[%s1 + $0xa0] sm:$0xf]
  %v464 = vld [vmem:[%s1 + $0xa4] sm:$0xf]
  %v465 = vld [vmem:[%s1 + $0xa8] sm:$0xf]
  %v466 = vld [vmem:[%s1 + $0xac] sm:$0xf]
  %v467 = vld [vmem:[%s1 + $0xb0] sm:$0xf]
  %v468 = vld [vmem:[%s1 + $0xb4] sm:$0xf]
  %v469 = vld [vmem:[%s1 + $0xb8] sm:$0xf]
  %v470 = vld [vmem:[%s1 + $0xbc] sm:$0xf]
  %v471 = vld [vmem:[%s1 + $0xc0] sm:$0xf]
  %v472 = vld [vmem:[%s1 + $0xc4] sm:$0xf]
  %v473 = vld [vmem:[%s1 + $0xc8] sm:$0xf]
  %v474 = vld [vmem:[%s1 + $0xcc] sm:$0xf]
  %v475 = vld [vmem:[%s1 + $0xd0] sm:$0xf]
  %v476 = vld [vmem:[%s1 + $0xd4] sm:$0xf]
  %v477 = vld [vmem:[%s1 + $0xd8] sm:$0xf]
  %v478 = vld [vmem:[%s1 + $0xdc] sm:$0xf]
  %v479 = vld [vmem:[%s1 + $0xe0] sm:$0xf]
  %v480 = vld [vmem:[%s1 + $0xe4] sm:$0xf]
  %v481 = vld [vmem:[%s1 + $0xe8] sm:$0xf]
  %v482 = vld [vmem:[%s1 + $0xec] sm:$0xf]
  %v483 = vld [vmem:[%s1 + $0xf0] sm:$0xf]
  %v484 = vld [vmem:[%s1 + $0xf4] sm:$0xf]
  %v485 = vld [vmem:[%s1 + $0xf8] sm:$0xf]
  %v486 = vld [vmem:[%s1 + $0xfc] sm:$0xf]
  %v551 = vunpack.c.l.b16 %v423
  %v552 = vunpack.c.l.b16 %v424
  %v553 = vunpack.c.l.b16 %v425
  %v554 = vunpack.c.l.b16 %v426
  %v555 = vunpack.c.l.b16 %v427
  %v556 = vunpack.c.l.b16 %v428
  %v557 = vunpack.c.l.b16 %v429
  %v558 = vunpack.c.l.b16 %v430
  %v559 = vunpack.c.l.b16 %v431
  %v560 = vunpack.c.l.b16 %v432
  %v561 = vunpack.c.l.b16 %v433
  %v562 = vunpack.c.l.b16 %v434
  %v563 = vunpack.c.l.b16 %v435
  %v564 = vunpack.c.l.b16 %v436
  %v565 = vunpack.c.l.b16 %v437
  %v566 = vunpack.c.l.b16 %v438
  %v567 = vunpack.c.l.b16 %v439
  %v568 = vunpack.c.l.b16 %v440
  %v569 = vunpack.c.l.b16 %v441
  %v570 = vunpack.c.l.b16 %v442
  %v571 = vunpack.c.l.b16 %v443
  %v572 = vunpack.c.l.b16 %v444
  %v573 = vunpack.c.l.b16 %v445
  %v574 = vunpack.c.l.b16 %v446
  %v575 = vunpack.c.l.b16 %v447
  %v576 = vunpack.c.l.b16 %v448
  %v577 = vunpack.c.l.b16 %v449
  %v578 = vunpack.c.l.b16 %v450
  %v579 = vunpack.c.l.b16 %v451
  %v580 = vunpack.c.l.b16 %v452
  %v581 = vunpack.c.l.b16 %v453
  %v582 = vunpack.c.l.b16 %v454
  %v583 = vunpack.c.l.b16 %v455
  %v584 = vunpack.c.l.b16 %v456
  %v585 = vunpack.c.l.b16 %v457
  %v586 = vunpack.c.l.b16 %v458
  %v587 = vunpack.c.l.b16 %v459
  %v588 = vunpack.c.l.b16 %v460
  %v589 = vunpack.c.l.b16 %v461
  %v590 = vunpack.c.l.b16 %v462
  %v591 = vunpack.c.l.b16 %v463
  %v592 = vunpack.c.l.b16 %v464
  %v593 = vunpack.c.l.b16 %v465
  %v594 = vunpack.c.l.b16 %v466
  %v595 = vunpack.c.l.b16 %v467
  %v596 = vunpack.c.l.b16 %v468
  %v597 = vunpack.c.l.b16 %v469
  %v598 = vunpack.c.l.b16 %v470
  %v599 = vunpack.c.l.b16 %v471
  %v600 = vunpack.c.l.b16 %v472
  %v601 = vunpack.c.l.b16 %v473
  %v602 = vunpack.c.l.b16 %v474
  %v603 = vunpack.c.l.b16 %v475
  %v604 = vunpack.c.l.b16 %v476
  %v605 = vunpack.c.l.b16 %v477
  %v606 = vunpack.c.l.b16 %v478
  %v607 = vunpack.c.l.b16 %v479
  %v608 = vunpack.c.l.b16 %v480
  %v609 = vunpack.c.l.b16 %v481
  %v610 = vunpack.c.l.b16 %v482
  %v611 = vunpack.c.l.b16 %v483
  %v612 = vunpack.c.l.b16 %v484
  %v613 = vunpack.c.l.b16 %v485
  %v614 = vunpack.c.l.b16 %v486
  %v615 = vpack.c.b16 %v552, %v551
  %v616 = vpack.c.b16 %v554, %v553
  %v617 = vpack.c.b16 %v556, %v555
  %v618 = vpack.c.b16 %v558, %v557
  %v619 = vpack.c.b16 %v560, %v559
  %v620 = vpack.c.b16 %v562, %v561
  %v621 = vpack.c.b16 %v564, %v563
  %v622 = vpack.c.b16 %v566, %v565
  %v623 = vpack.c.b16 %v568, %v567
  %v624 = vpack.c.b16 %v570, %v569
  %v625 = vpack.c.b16 %v572, %v571
  %v626 = vpack.c.b16 %v574, %v573
  %v627 = vpack.c.b16 %v576, %v575
  %v628 = vpack.c.b16 %v578, %v577
  %v629 = vpack.c.b16 %v580, %v579
  %v630 = vpack.c.b16 %v582, %v581
  %v631 = vpack.c.b16 %v584, %v583
  %v632 = vpack.c.b16 %v586, %v585
  %v633 = vpack.c.b16 %v588, %v587
  %v634 = vpack.c.b16 %v590, %v589
  %v635 = vpack.c.b16 %v592, %v591
  %v636 = vpack.c.b16 %v594, %v593
  %v637 = vpack.c.b16 %v596, %v595
  %v638 = vpack.c.b16 %v598, %v597
  %v639 = vpack.c.b16 %v600, %v599
  %v640 = vpack.c.b16 %v602, %v601
  %v641 = vpack.c.b16 %v604, %v603
  %v642 = vpack.c.b16 %v606, %v605
  %v643 = vpack.c.b16 %v608, %v607
  %v644 = vpack.c.b16 %v610, %v609
  %v645 = vpack.c.b16 %v612, %v611
  %v646 = vpack.c.b16 %v614, %v613
  %679 = vmatprep.subr.bf16.mxu0 0
  %680 = vmatpush1.bf16.msra.mxu0 %v622
  %681 = vmatprep.subr.bf16.mxu0 0
  %682 = vmatpush1.bf16.msra.mxu0 %v621
  %683 = vmatprep.subr.bf16.mxu0 0
  %684 = vmatpush1.bf16.msra.mxu0 %v620
  %685 = vmatprep.subr.bf16.mxu0 0
  %686 = vmatpush1.bf16.msra.mxu0 %v619
  %687 = vmatprep.subr.bf16.mxu0 0
  %688 = vmatpush1.bf16.msra.mxu0 %v618
  %689 = vmatprep.subr.bf16.mxu0 0
  %690 = vmatpush1.bf16.msra.mxu0 %v617
  %691 = vmatprep.subr.bf16.mxu0 0
  %692 = vmatpush1.bf16.msra.mxu0 %v616
  %693 = vmatprep.subr.bf16.mxu0 0
  %694 = vmatpush1.bf16.msra.mxu0 %v615
  %695 = vmatprep.subr.bf16.mxu0 0
  %696 = vmatpush2.bf16.msra.mxu0 %v630
  %697 = vmatprep.subr.bf16.mxu0 0
  %698 = vmatpush2.bf16.msra.mxu0 %v629
  %699 = vmatprep.subr.bf16.mxu0 0
  %700 = vmatpush2.bf16.msra.mxu0 %v628
  %701 = vmatprep.subr.bf16.mxu0 0
  %702 = vmatpush2.bf16.msra.mxu0 %v627
  %703 = vmatprep.subr.bf16.mxu0 0
  %704 = vmatpush2.bf16.msra.mxu0 %v626
  %705 = vmatprep.subr.bf16.mxu0 0
  %706 = vmatpush2.bf16.msra.mxu0 %v625
  %707 = vmatprep.subr.bf16.mxu0 0
  %708 = vmatpush2.bf16.msra.mxu0 %v624
  %709 = vmatprep.subr.bf16.mxu0 0
  %710 = vmatpush2.bf16.msra.mxu0 %v623
  %711 = vmatprep.mubr.bf16.mxu0 %v369
  %712 = vmatmul.mubr.bf16.gmra.mxu0 %v337
  %v713 = vpop.f32.mrf.mxu0
  %v714 = vadd.f32 0.0, %v713
  %v715 = vpop.f32.mrf.mxu0
  %v716 = vpop.f32.mrf.mxu0
  %v717 = vadd.f32 0.0, %v716
  %v718 = vpop.f32.mrf.mxu0
  %719 = vmatprep.mubr.bf16.mxu0 %v370
  %720 = vmatmul.mubr.bf16.gmra.mxu0 %v338
  %v721 = vpop.f32.mrf.mxu0
  %v722 = vadd.f32 0.0, %v721
  %v723 = vpop.f32.mrf.mxu0
  %v724 = vpop.f32.mrf.mxu0
  %v725 = vadd.f32 0.0, %v724
  %v726 = vpop.f32.mrf.mxu0
  %727 = vmatprep.mubr.bf16.mxu0 %v371
  %728 = vmatmul.mubr.bf16.gmra.mxu0 %v339
  %v729 = vpop.f32.mrf.mxu0
  %v730 = vadd.f32 0.0, %v729
  %v731 = vpop.f32.mrf.mxu0
  %v732 = vpop.f32.mrf.mxu0
  %v733 = vadd.f32 0.0, %v732
  %v734 = vpop.f32.mrf.mxu0
  %735 = vmatprep.mubr.bf16.mxu0 %v372
  %736 = vmatmul.mubr.bf16.gmra.mxu0 %v340
  %v737 = vpop.f32.mrf.mxu0
  %v738 = vadd.f32 0.0, %v737
  %v739 = vpop.f32.mrf.mxu0
  %v740 = vpop.f32.mrf.mxu0
  %v741 = vadd.f32 0.0, %v740
  %v742 = vpop.f32.mrf.mxu0
  %743 = vmatprep.mubr.bf16.mxu0 %v373
  %744 = vmatmul.mubr.bf16.gmra.mxu0 %v341
  %v745 = vpop.f32.mrf.mxu0
  %v746 = vadd.f32 0.0, %v745
  %v747 = vpop.f32.mrf.mxu0
  %v748 = vpop.f32.mrf.mxu0
  %v749 = vadd.f32 0.0, %v748
  %v750 = vpop.f32.mrf.mxu0
  %751 = vmatprep.mubr.bf16.mxu0 %v374
  %752 = vmatmul.mubr.bf16.gmra.mxu0 %v342
  %v753 = vpop.f32.mrf.mxu0
  %v754 = vadd.f32 0.0, %v753
  %v755 = vpop.f32.mrf.mxu0
  %v756 = vpop.f32.mrf.mxu0
  %v757 = vadd.f32 0.0, %v756
  %v758 = vpop.f32.mrf.mxu0
  %759 = vmatprep.mubr.bf16.mxu0 %v375
  %760 = vmatmul.mubr.bf16.gmra.mxu0 %v343
  %v761 = vpop.f32.mrf.mxu0
  %v762 = vadd.f32 0.0, %v761
  %v763 = vpop.f32.mrf.mxu0
  %v764 = vpop.f32.mrf.mxu0
  %v765 = vadd.f32 0.0, %v764
  %v766 = vpop.f32.mrf.mxu0
  %767 = vmatprep.mubr.bf16.mxu0 %v376
  %768 = vmatmul.mubr.bf16.gmra.mxu0 %v344
  %v769 = vpop.f32.mrf.mxu0
  %v770 = vadd.f32 0.0, %v769
  %v771 = vpop.f32.mrf.mxu0
  %v772 = vpop.f32.mrf.mxu0
  %v773 = vadd.f32 0.0, %v772
  %v774 = vpop.f32.mrf.mxu0
  %775 = vdwg.mxu0
  %776 = vmatprep.subr.bf16.mxu0 0
  %777 = vmatpush1.bf16.msra.mxu0 %v638
  %778 = vmatprep.subr.bf16.mxu0 0
  %779 = vmatpush1.bf16.msra.mxu0 %v637
  %780 = vmatprep.subr.bf16.mxu0 0
  %781 = vmatpush1.bf16.msra.mxu0 %v636
  %782 = vmatprep.subr.bf16.mxu0 0
  %783 = vmatpush1.bf16.msra.mxu0 %v635
  %784 = vmatprep.subr.bf16.mxu0 0
  %785 = vmatpush1.bf16.msra.mxu0 %v634
  %786 = vmatprep.subr.bf16.mxu0 0
  %787 = vmatpush1.bf16.msra.mxu0 %v633
  %788 = vmatprep.subr.bf16.mxu0 0
  %789 = vmatpush1.bf16.msra.mxu0 %v632
  %790 = vmatprep.subr.bf16.mxu0 0
  %791 = vmatpush1.bf16.msra.mxu0 %v631
  %792 = vmatprep.subr.bf16.mxu0 0
  %793 = vmatpush2.bf16.msra.mxu0 %v646
  %794 = vmatprep.subr.bf16.mxu0 0
  %795 = vmatpush2.bf16.msra.mxu0 %v645
  %796 = vmatprep.subr.bf16.mxu0 0
  %797 = vmatpush2.bf16.msra.mxu0 %v644
  %798 = vmatprep.subr.bf16.mxu0 0
  %799 = vmatpush2.bf16.msra.mxu0 %v643
  %800 = vmatprep.subr.bf16.mxu0 0
  %801 = vmatpush2.bf16.msra.mxu0 %v642
  %802 = vmatprep.subr.bf16.mxu0 0
  %803 = vmatpush2.bf16.msra.mxu0 %v641
  %804 = vmatprep.subr.bf16.mxu0 0
  %805 = vmatpush2.bf16.msra.mxu0 %v640
  %806 = vmatprep.subr.bf16.mxu0 0
  %807 = vmatpush2.bf16.msra.mxu0 %v639
  %808 = vmatprep.mubr.bf16.mxu0 %v407
  %809 = vmatmul.mubr.bf16.gmra.mxu0 %v389
  %v810 = vpop.f32.mrf.mxu0
  %v811 = vadd.f32 %v714, %v810
  %v812 = vpop.f32.mrf.mxu0
  %v813 = vpop.f32.mrf.mxu0
  %v814 = vadd.f32 %v717, %v813
  %v815 = vpop.f32.mrf.mxu0
  %816 = vmatprep.mubr.bf16.mxu0 %v408
  %817 = vmatmul.mubr.bf16.gmra.mxu0 %v390
  %v818 = vpop.f32.mrf.mxu0
  %v819 = vadd.f32 %v722, %v818
  %v820 = vpop.f32.mrf.mxu0
  %v821 = vpop.f32.mrf.mxu0
  %v822 = vadd.f32 %v725, %v821
  %v823 = vpop.f32.mrf.mxu0
  %824 = vmatprep.mubr.bf16.mxu0 %v409
  %825 = vmatmul.mubr.bf16.gmra.mxu0 %v391
  %v826 = vpop.f32.mrf.mxu0
  %v827 = vadd.f32 %v730, %v826
  %v828 = vpop.f32.mrf.mxu0
  %v829 = vpop.f32.mrf.mxu0
  %v830 = vadd.f32 %v733, %v829
  %v831 = vpop.f32.mrf.mxu0
  %832 = vmatprep.mubr.bf16.mxu0 %v410
  %833 = vmatmul.mubr.bf16.gmra.mxu0 %v392
  %v834 = vpop.f32.mrf.mxu0
  %v835 = vadd.f32 %v738, %v834
  %v836 = vpop.f32.mrf.mxu0
  %v837 = vpop.f32.mrf.mxu0
  %v838 = vadd.f32 %v741, %v837
  %v839 = vpop.f32.mrf.mxu0
  %840 = vmatprep.mubr.bf16.mxu0 %v411
  %841 = vmatmul.mubr.bf16.gmra.mxu0 %v393
  %v842 = vpop.f32.mrf.mxu0
  %v843 = vadd.f32 %v746, %v842
  %v844 = vpop.f32.mrf.mxu0
  %v845 = vpop.f32.mrf.mxu0
  %v846 = vadd.f32 %v749, %v845
  %v847 = vpop.f32.mrf.mxu0
  %848 = vmatprep.mubr.bf16.mxu0 %v412
  %849 = vmatmul.mubr.bf16.gmra.mxu0 %v394
  %v850 = vpop.f32.mrf.mxu0
  %v851 = vadd.f32 %v754, %v850
  %v852 = vpop.f32.mrf.mxu0
  %v853 = vpop.f32.mrf.mxu0
  %v854 = vadd.f32 %v757, %v853
  %v855 = vpop.f32.mrf.mxu0
  %856 = vmatprep.mubr.bf16.mxu0 %v413
  %857 = vmatmul.mubr.bf16.gmra.mxu0 %v395
  %v858 = vpop.f32.mrf.mxu0
  %v859 = vadd.f32 %v762, %v858
  %v860 = vpop.f32.mrf.mxu0
  %v861 = vpop.f32.mrf.mxu0
  %v862 = vadd.f32 %v765, %v861
  %v863 = vpop.f32.mrf.mxu0
  %864 = vmatprep.mubr.bf16.mxu0 %v414
  %865 = vmatmul.mubr.bf16.gmra.mxu0 %v396
  %v866 = vpop.f32.mrf.mxu0
  %v867 = vadd.f32 %v770, %v866
  %v868 = vpop.f32.mrf.mxu0
  %v869 = vpop.f32.mrf.mxu0
  %v870 = vadd.f32 %v773, %v869
  %v871 = vpop.f32.mrf.mxu0
  %872 = vdwg.mxu0
  %v873 = vpack.c.bf16 %v814, %v811
  %v874 = vpack.c.bf16 %v822, %v819
  %v875 = vpack.c.bf16 %v830, %v827
  %v876 = vpack.c.bf16 %v838, %v835
  %v877 = vpack.c.bf16 %v846, %v843
  %v878 = vpack.c.bf16 %v854, %v851
  %v879 = vpack.c.bf16 %v862, %v859
  %v880 = vpack.c.bf16 %v870, %v867
  %v889 = vunpack.c.l.b16 %v873
  %v890 = vunpack.c.h.b16 %v873
  %v891 = vunpack.c.l.b16 %v874
  %v892 = vunpack.c.h.b16 %v874
  %v893 = vunpack.c.l.b16 %v875
  %v894 = vunpack.c.h.b16 %v875
  %v895 = vunpack.c.l.b16 %v876
  %v896 = vunpack.c.h.b16 %v876
  %v897 = vunpack.c.l.b16 %v877
  %v898 = vunpack.c.h.b16 %v877
  %v899 = vunpack.c.l.b16 %v878
  %v900 = vunpack.c.h.b16 %v878
  %v901 = vunpack.c.l.b16 %v879
  %v902 = vunpack.c.h.b16 %v879
  %v903 = vunpack.c.l.b16 %v880
  %v904 = vunpack.c.h.b16 %v880
  %v905 = vpack.c.b16 %v889, %v889
  %v906 = vpack.c.b16 %v890, %v890
  %v907 = vpack.c.b16 %v891, %v891
  %v908 = vpack.c.b16 %v892, %v892
  %v909 = vpack.c.b16 %v893, %v893
  %v910 = vpack.c.b16 %v894, %v894
  %v911 = vpack.c.b16 %v895, %v895
  %v912 = vpack.c.b16 %v896, %v896
  %v913 = vpack.c.b16 %v897, %v897
  %v914 = vpack.c.b16 %v898, %v898
  %v915 = vpack.c.b16 %v899, %v899
  %v916 = vpack.c.b16 %v900, %v900
  %v917 = vpack.c.b16 %v901, %v901
  %v918 = vpack.c.b16 %v902, %v902
  %v919 = vpack.c.b16 %v903, %v903
  %v920 = vpack.c.b16 %v904, %v904
  %937 = vst [vmem:[%s2] sm:$0xf] %v905
  %938 = vst [vmem:[%s2 + $0x4] sm:$0xf] %v906
  %939 = vst [vmem:[%s2 + $0x8] sm:$0xf] %v907
  %940 = vst [vmem:[%s2 + $0xc] sm:$0xf] %v908
  %941 = vst [vmem:[%s2 + $0x10] sm:$0xf] %v909
  %942 = vst [vmem:[%s2 + $0x14] sm:$0xf] %v910
  %943 = vst [vmem:[%s2 + $0x18] sm:$0xf] %v911
  %944 = vst [vmem:[%s2 + $0x1c] sm:$0xf] %v912
  %945 = vst [vmem:[%s2 + $0x20] sm:$0xf] %v913
  %946 = vst [vmem:[%s2 + $0x24] sm:$0xf] %v914
  %947 = vst [vmem:[%s2 + $0x28] sm:$0xf] %v915
  %948 = vst [vmem:[%s2 + $0x2c] sm:$0xf] %v916
  %949 = vst [vmem:[%s2 + $0x30] sm:$0xf] %v917
  %950 = vst [vmem:[%s2 + $0x34] sm:$0xf] %v918
  %951 = vst [vmem:[%s2 + $0x38] sm:$0xf] %v919
  %952 = vst [vmem:[%s2 + $0x3c] sm:$0xf] %v920
  %v953 = vadd.f32 %v811, %v814
  %v954 = vadd.f32 %v953, %v819
  %v955 = vadd.f32 %v954, %v822
  %v956 = vadd.f32 %v955, %v827
  %v957 = vadd.f32 %v956, %v830
  %v958 = vadd.f32 %v957, %v835
  %v959 = vadd.f32 %v958, %v838
  %v960 = vadd.f32 %v959, %v843
  %v961 = vadd.f32 %v960, %v846
  %v962 = vadd.f32 %v961, %v851
  %v963 = vadd.f32 %v962, %v854
  %v964 = vadd.f32 %v963, %v859
  %v965 = vadd.f32 %v964, %v862
  %v966 = vadd.f32 %v965, %v867
  %v967 = vadd.f32 %v966, %v870
  %v968 = vrot.slane %v967, 4
  %v969 = vadd.f32 %v967, %v968
  %v970 = vrot.slane %v969, 2
  %v971 = vadd.f32 %v969, %v970
  %v972 = vrot.slane %v971, 1
  %v973 = vadd.f32 %v971, %v972
  %974 = vst [vmem:[%s3] sm:$0x1] %v973
  %v975 = vmul.f32 %v811, %v811
  %v976 = vmul.f32 %v814, %v814
  %v977 = vmul.f32 %v819, %v819
  %v978 = vmul.f32 %v822, %v822
  %v979 = vmul.f32 %v827, %v827
  %v980 = vmul.f32 %v830, %v830
  %v981 = vmul.f32 %v835, %v835
  %v982 = vmul.f32 %v838, %v838
  %v983 = vmul.f32 %v843, %v843
  %v984 = vmul.f32 %v846, %v846
  %v985 = vmul.f32 %v851, %v851
  %v986 = vmul.f32 %v854, %v854
  %v987 = vmul.f32 %v859, %v859
  %v988 = vmul.f32 %v862, %v862
  %v989 = vmul.f32 %v867, %v867
  %v990 = vmul.f32 %v870, %v870
  %v991 = vadd.f32 %v975, %v976
  %v992 = vadd.f32 %v991, %v977
  %v993 = vadd.f32 %v992, %v978
  %v994 = vadd.f32 %v993, %v979
  %v995 = vadd.f32 %v994, %v980
  %v996 = vadd.f32 %v995, %v981
  %v997 = vadd.f32 %v996, %v982
  %v998 = vadd.f32 %v997, %v983
  %v999 = vadd.f32 %v998, %v984
  %v1000 = vadd.f32 %v999, %v985
  %v1001 = vadd.f32 %v1000, %v986
  %v1002 = vadd.f32 %v1001, %v987
  %v1003 = vadd.f32 %v1002, %v988
  %v1004 = vadd.f32 %v1003, %v989
  %v1005 = vadd.f32 %v1004, %v990
  %v1006 = vrot.slane %v1005, 4
  %v1007 = vadd.f32 %v1005, %v1006
  %v1008 = vrot.slane %v1007, 2
  %v1009 = vadd.f32 %v1007, %v1008
  %v1010 = vrot.slane %v1009, 1
  %v1011 = vadd.f32 %v1009, %v1010
  %1012 = vst [vmem:[%s3 + $0x1] sm:$0x1] %v1011
  // Predicated region
  $region10: #{discriminator_forward.3} parent=0 // pred_check
    _
  $region11: #{discriminator_forward.3} parent=0 // pred_check_branch
    %1014 = sbr.rel (0) target = $region13
  $region12: #{discriminator_forward.3} parent=0 // pred_region
    _
  $region13: #{discriminator_forward.3} parent=0 // pred_fallthru
    _
  // Predicated region
  $region14: #{discriminator_forward.3} parent=0 // pred_check
    _
  $region15: #{discriminator_forward.3} parent=0 // pred_check_branch
    %1016 = sbr.rel (0) target = $region17
  $region16: #{discriminator_forward.3} parent=0 // pred_region
    _
  $region17: #{discriminator_forward.3} parent=0 // pred_fallthru
    _
  // Predicated region
  $region18: #{discriminator_forward.3} parent=0 // pred_check
    _
  $region19: #{discriminator_forward.3} parent=0 // pred_check_branch
    %1018 = sbr.rel (0) target = $region21
  $region20: #{discriminator_forward.3} parent=0 // pred_region
    _
  $region21: #{discriminator_forward.3} parent=0 // pred_fallthru
    _
  // Predicated region
  $region22: #{discriminator_forward.3} parent=0 // pred_check
    _
  $region23: #{discriminator_forward.3} parent=0 // pred_check_branch
    %1020 = sbr.rel (0) target = $region25
  $region24: #{discriminator_forward.3} parent=0 // pred_region
    _
  $region25: #{discriminator_forward.3} parent=0 // pred_fallthru
    _

// kernel: discriminator_forward.4
$region0: #{discriminator_forward.4}
  #allocation0 [shape = 'u32[]', space=smem, size = 0x4, offset = 0x4, fixed_abs, tag = 'smem constant byte address 0x4 - core index']
  #allocation1 [shape = 'u32[144,128]{1,0:T(1,128)}', space=vmem, size = 0x12000, scoped, tag = 'internal scratch']
  %s0 = inlined_call_operand.vmem [shape: bf16[2,5,5,512], index: 0, kind: input, shape index: {}]
  %s1 = inlined_call_operand.vmem [shape: bf16[2048,128], index: 1, kind: input, shape index: {}]
  %s2 = inlined_call_operand.vmem [shape: bf16[32,128], index: 2, kind: output, shape index: {0}]
  %s3 = inlined_call_operand.vmem [shape: f32[1,2,128], index: 3, kind: output, shape index: {1}]
  %4 = xla_tuple %s2, %s3
  %s5 = sld [smem:[#allocation0]]
  $region26: #{discriminator_forward.4} parent=0
    _
  %s7 = ssub.s32 1, %s5
  %s8 = scalar_select 0, %s7, %s5
  // Predicated region
  $region2: #{discriminator_forward.4} parent=0 // pred_check
    _
  $region3: #{discriminator_forward.4} parent=0 // pred_check_branch
    %10 = sbr.rel (0) target = $region5
  $region4: #{discriminator_forward.4} parent=0 // pred_region
    _
  $region5: #{discriminator_forward.4} parent=0 // pred_fallthru
    _
  // Predicated region
  $region6: #{discriminator_forward.4} parent=0 // pred_check
    _
  $region7: #{discriminator_forward.4} parent=0 // pred_check_branch
    %12 = sbr.rel (0) target = $region9
  $region8: #{discriminator_forward.4} parent=0 // pred_region
    _
  $region9: #{discriminator_forward.4} parent=0 // pred_fallthru
    _
  %v14 = vld [vmem:[%s0] sm:$0x77]
  %v15 = vld [vmem:[%s0 + $0x8] sm:$0x77]
  %v16 = vld [vmem:[%s0 + $0x10] sm:$0x77]
  %v17 = vld [vmem:[%s0 + $0x18] sm:$0x77]
  %v18 = vld [vmem:[%s0 + $0x20] sm:$0x77]
  %v19 = vld [vmem:[%s0 + $0x28] sm:$0x77]
  %v20 = vld [vmem:[%s0 + $0x30] sm:$0x77]
  %v21 = vld [vmem:[%s0 + $0x38] sm:$0x77]
  %v22 = vld [vmem:[%s0 + $0x40] sm:$0x77]
  %v23 = vld [vmem:[%s0 + $0x48] sm:$0x77]
  %v24 = vld [vmem:[%s0 + $0x50] sm:$0x77]
  %v25 = vld [vmem:[%s0 + $0x58] sm:$0x77]
  %v26 = vld [vmem:[%s0 + $0x60] sm:$0x77]
  %v27 = vld [vmem:[%s0 + $0x68] sm:$0x77]
  %v28 = vld [vmem:[%s0 + $0x70] sm:$0x77]
  %v29 = vld [vmem:[%s0 + $0x78] sm:$0x77]
  %v30 = vld [vmem:[%s0 + $0x80] sm:$0x77]
  %v31 = vld [vmem:[%s0 + $0x88] sm:$0x77]
  %v32 = vld [vmem:[%s0 + $0x90] sm:$0x77]
  %v33 = vld [vmem:[%s0 + $0x98] sm:$0x77]
  %v51 = vunpack.c.l.s4 1983009808
  %v52 = vunpack.c.0.s8 %v51
  %v53 = vlaneseq
  %v54 = vshrl.u32 %v53, 7
  %v55 = vsub.s32 %v52, %v54
  %v56 = vrot.slane %v14, %v55
  %v58 = vunpack.c.l.s4 1983009808
  %v59 = vunpack.c.0.s8 %v58
  %v60 = vlaneseq
  %v61 = vshrl.u32 %v60, 7
  %v62 = vsub.s32 %v59, %v61
  %v63 = vrot.slane %v15, %v62
  %v64 = vcombine.low %v56, %v63
  %v66 = vunpack.c.l.s4 1983009808
  %v67 = vunpack.c.0.s8 %v66
  %v68 = vlaneseq
  %v69 = vshrl.u32 %v68, 7
  %v70 = vsub.s32 %v67, %v69
  %v71 = vrot.slane %v16, %v70
  %v73 = vunpack.c.l.s4 1983009808
  %v74 = vunpack.c.0.s8 %v73
  %v75 = vlaneseq
  %v76 = vshrl.u32 %v75, 7
  %v77 = vsub.s32 %v74, %v76
  %v78 = vrot.slane %v17, %v77
  %v79 = vcombine.low %v71, %v78
  %v81 = vunpack.c.l.s4 1983009808
  %v82 = vunpack.c.0.s8 %v81
  %v83 = vlaneseq
  %v84 = vshrl.u32 %v83, 7
  %v85 = vsub.s32 %v82, %v84
  %v86 = vrot.slane %v18, %v85
  %v88 = vunpack.c.l.s4 1983009808
  %v89 = vunpack.c.0.s8 %v88
  %v90 = vlaneseq
  %v91 = vshrl.u32 %v90, 7
  %v92 = vsub.s32 %v89, %v91
  %v93 = vrot.slane %v19, %v92
  %v94 = vcombine.low %v86, %v93
  %v96 = vunpack.c.l.s4 1983009808
  %v97 = vunpack.c.0.s8 %v96
  %v98 = vlaneseq
  %v99 = vshrl.u32 %v98, 7
  %v100 = vsub.s32 %v97, %v99
  %v101 = vrot.slane %v20, %v100
  %v103 = vunpack.c.l.s4 1983009808
  %v104 = vunpack.c.0.s8 %v103
  %v105 = vlaneseq
  %v106 = vshrl.u32 %v105, 7
  %v107 = vsub.s32 %v104, %v106
  %v108 = vrot.slane %v21, %v107
  %v109 = vcombine.low %v101, %v108
  %v111 = vunpack.c.l.s4 1983009808
  %v112 = vunpack.c.0.s8 %v111
  %v113 = vlaneseq
  %v114 = vshrl.u32 %v113, 7
  %v115 = vsub.s32 %v112, %v114
  %v116 = vrot.slane %v24, %v115
  %v118 = vunpack.c.l.s4 1983009808
  %v119 = vunpack.c.0.s8 %v118
  %v120 = vlaneseq
  %v121 = vshrl.u32 %v120, 7
  %v122 = vsub.s32 %v119, %v121
  %v123 = vrot.slane %v25, %v122
  %v124 = vcombine.low %v116, %v123
  %v126 = vunpack.c.l.s4 1983009808
  %v127 = vunpack.c.0.s8 %v126
  %v128 = vlaneseq
  %v129 = vshrl.u32 %v128, 7
  %v130 = vsub.s32 %v127, %v129
  %v131 = vrot.slane %v26, %v130
  %v133 = vunpack.c.l.s4 1983009808
  %v134 = vunpack.c.0.s8 %v133
  %v135 = vlaneseq
  %v136 = vshrl.u32 %v135, 7
  %v137 = vsub.s32 %v134, %v136
  %v138 = vrot.slane %v27, %v137
  %v139 = vcombine.low %v131, %v138
  %v141 = vunpack.c.l.s4 1983009808
  %v142 = vunpack.c.0.s8 %v141
  %v143 = vlaneseq
  %v144 = vshrl.u32 %v143, 7
  %v145 = vsub.s32 %v142, %v144
  %v146 = vrot.slane %v28, %v145
  %v148 = vunpack.c.l.s4 1983009808
  %v149 = vunpack.c.0.s8 %v148
  %v150 = vlaneseq
  %v151 = vshrl.u32 %v150, 7
  %v152 = vsub.s32 %v149, %v151
  %v153 = vrot.slane %v29, %v152
  %v154 = vcombine.low %v146, %v153
  %v156 = vunpack.c.l.s4 1983009808
  %v157 = vunpack.c.0.s8 %v156
  %v158 = vlaneseq
  %v159 = vshrl.u32 %v158, 7
  %v160 = vsub.s32 %v157, %v159
  %v161 = vrot.slane %v30, %v160
  %v163 = vunpack.c.l.s4 1983009808
  %v164 = vunpack.c.0.s8 %v163
  %v165 = vlaneseq
  %v166 = vshrl.u32 %v165, 7
  %v167 = vsub.s32 %v164, %v166
  %v168 = vrot.slane %v31, %v167
  %v169 = vcombine.low %v161, %v168
  %v170 = vcombine.high %v56, %v63
  %v171 = vcombine.high %v71, %v78
  %v172 = vcombine.high %v86, %v93
  %v173 = vcombine.high %v101, %v108
  %v174 = vcombine.high %v116, %v123
  %v175 = vcombine.high %v131, %v138
  %v176 = vcombine.high %v146, %v153
  %v177 = vcombine.high %v161, %v168
  %vm178 = vsmask.f32 1280
  %vm179 = vsmask.f32 3336
  %vm180 = vmor %vm178, %vm179
  %vm181 = vsmask.f32 5392
  %vm182 = vmor %vm180, %vm181
  %vm183 = vsmask.f32 7448
  %vm184 = vmor %vm182, %vm183
  %v186 = vshrl.u32 %v64, 16
  %v188 = vrot.slane %v186, 6
  %v189 = vshll.u32 %v64, 16
  %v191 = vrot.slane %v189, 7
  %v192 = vor.u32 %v188, %v191
  %v193 = vrot.slane %v192, 2
  %v195 = vshll.u32 %v170, 16
  %v197 = vrot.slane %v195, 7
  %v198 = vsel %vm184, %v193, %v197
  %v200 = vshrl.u32 %v79, 16
  %v202 = vrot.slane %v200, 6
  %v203 = vshll.u32 %v79, 16
  %v205 = vrot.slane %v203, 7
  %v206 = vor.u32 %v202, %v205
  %v207 = vrot.slane %v206, 2
  %v209 = vshll.u32 %v171, 16
  %v211 = vrot.slane %v209, 7
  %v212 = vsel %vm184, %v207, %v211
  %v214 = vshrl.u32 %v94, 16
  %v216 = vrot.slane %v214, 6
  %v217 = vshll.u32 %v94, 16
  %v219 = vrot.slane %v217, 7
  %v220 = vor.u32 %v216, %v219
  %v221 = vrot.slane %v220, 2
  %v223 = vshll.u32 %v172, 16
  %v225 = vrot.slane %v223, 7
  %v226 = vsel %vm184, %v221, %v225
  %v228 = vshrl.u32 %v109, 16
  %v230 = vrot.slane %v228, 6
  %v231 = vshll.u32 %v109, 16
  %v233 = vrot.slane %v231, 7
  %v234 = vor.u32 %v230, %v233
  %v235 = vrot.slane %v234, 2
  %v237 = vshll.u32 %v173, 16
  %v239 = vrot.slane %v237, 7
  %v240 = vsel %vm184, %v235, %v239
  %v242 = vshrl.u32 %v124, 16
  %v244 = vrot.slane %v242, 6
  %v245 = vshll.u32 %v124, 16
  %v247 = vrot.slane %v245, 7
  %v248 = vor.u32 %v244, %v247
  %v249 = vrot.slane %v248, 2
  %v251 = vshll.u32 %v174, 16
  %v253 = vrot.slane %v251, 7
  %v254 = vsel %vm184, %v249, %v253
  %v256 = vshrl.u32 %v139, 16
  %v258 = vrot.slane %v256, 6
  %v259 = vshll.u32 %v139, 16
  %v261 = vrot.slane %v259, 7
  %v262 = vor.u32 %v258, %v261
  %v263 = vrot.slane %v262, 2
  %v265 = vshll.u32 %v175, 16
  %v267 = vrot.slane %v265, 7
  %v268 = vsel %vm184, %v263, %v267
  %v270 = vshrl.u32 %v154, 16
  %v272 = vrot.slane %v270, 6
  %v273 = vshll.u32 %v154, 16
  %v275 = vrot.slane %v273, 7
  %v276 = vor.u32 %v272, %v275
  %v277 = vrot.slane %v276, 2
  %v279 = vshll.u32 %v176, 16
  %v281 = vrot.slane %v279, 7
  %v282 = vsel %vm184, %v277, %v281
  %v284 = vshrl.u32 %v169, 16
  %v286 = vrot.slane %v284, 6
  %v287 = vshll.u32 %v169, 16
  %v289 = vrot.slane %v287, 7
  %v290 = vor.u32 %v286, %v289
  %v291 = vrot.slane %v290, 2
  %v293 = vshll.u32 %v177, 16
  %v295 = vrot.slane %v293, 7
  %v296 = vsel %vm184, %v291, %v295
  %v302 = vunpack.c.l.s4 1983009808
  %v303 = vunpack.c.0.s8 %v302
  %v304 = vlaneseq
  %v305 = vshrl.u32 %v304, 7
  %v306 = vsub.s32 %v303, %v305
  %v307 = vrot.slane %v22, %v306
  %v309 = vunpack.c.l.s4 1983009808
  %v310 = vunpack.c.0.s8 %v309
  %v311 = vlaneseq
  %v312 = vshrl.u32 %v311, 7
  %v313 = vsub.s32 %v310, %v312
  %v314 = vrot.slane %v23, %v313
  %v315 = vcombine.low %v307, %v314
  %v317 = vunpack.c.l.s4 1983009808
  %v318 = vunpack.c.0.s8 %v317
  %v319 = vlaneseq
  %v320 = vshrl.u32 %v319, 7
  %v321 = vsub.s32 %v318, %v320
  %v322 = vrot.slane %v32, %v321
  %v324 = vunpack.c.l.s4 1983009808
  %v325 = vunpack.c.0.s8 %v324
  %v326 = vlaneseq
  %v327 = vshrl.u32 %v326, 7
  %v328 = vsub.s32 %v325, %v327
  %v329 = vrot.slane %v33, %v328
  %v330 = vcombine.low %v322, %v329
  %v331 = vcombine.high %v307, %v314
  %v332 = vcombine.high %v322, %v329
  %v334 = vshrl.u32 %v315, 16
  %v336 = vrot.slane %v334, 6
  %v337 = vshll.u32 %v315, 16
  %v339 = vrot.slane %v337, 7
  %v340 = vor.u32 %v336, %v339
  %v341 = vrot.slane %v340, 2
  %v343 = vshll.u32 %v331, 16
  %v345 = vrot.slane %v343, 7
  %v346 = vsel %vm184, %v341, %v345
  %v348 = vshrl.u32 %v330, 16
  %v350 = vrot.slane %v348, 6
  %v351 = vshll.u32 %v330, 16
  %v353 = vrot.slane %v351, 7
  %v354 = vor.u32 %v350, %v353
  %v355 = vrot.slane %v354, 2
  %v357 = vshll.u32 %v332, 16
  %v359 = vrot.slane %v357, 7
  %v360 = vsel %vm184, %v355, %v359
  %v361 = vcombine.low %v64, %v79
  %v362 = vcombine.high %v64, %v79
  %v363 = vcombine.low %v94, %v109
  %v364 = vcombine.high %v94, %v109
  %v366 = vunpack.c.l.s4 1983009808
  %v367 = vunpack.c.0.s8 %v366
  %v368 = vlaneseq
  %v369 = vshrl.u32 %v368, 7
  %v370 = vsub.s32 %v367, %v369
  %v371 = vrot.slane %v361, %v370
  %v373 = vunpack.c.l.s4 1983009808
  %v374 = vunpack.c.0.s8 %v373
  %v375 = vlaneseq
  %v376 = vshrl.u32 %v375, 7
  %v377 = vsub.s32 %v374, %v376
  %v378 = vrot.slane %v362, %v377
  %v380 = vunpack.c.l.s4 1983009808
  %v381 = vunpack.c.0.s8 %v380
  %v382 = vlaneseq
  %v383 = vshrl.u32 %v382, 7
  %v384 = vsub.s32 %v381, %v383
  %v385 = vrot.slane %v363, %v384
  %v387 = vunpack.c.l.s4 1983009808
  %v388 = vunpack.c.0.s8 %v387
  %v389 = vlaneseq
  %v390 = vshrl.u32 %v389, 7
  %v391 = vsub.s32 %v388, %v390
  %v392 = vrot.slane %v364, %v391
  %v393 = vcombine.low %v371, %v385
  %v394 = vcombine.high %v371, %v385
  %v395 = vcombine.low %v378, %v392
  %v396 = vcombine.high %v378, %v392
  %v397 = vcombine.low %v124, %v139
  %v398 = vcombine.high %v124, %v139
  %v399 = vcombine.low %v154, %v169
  %v400 = vcombine.high %v154, %v169
  %v402 = vunpack.c.l.s4 1983009808
  %v403 = vunpack.c.0.s8 %v402
  %v404 = vlaneseq
  %v405 = vshrl.u32 %v404, 7
  %v406 = vsub.s32 %v403, %v405
  %v407 = vrot.slane %v397, %v406
  %v409 = vunpack.c.l.s4 1983009808
  %v410 = vunpack.c.0.s8 %v409
  %v411 = vlaneseq
  %v412 = vshrl.u32 %v411, 7
  %v413 = vsub.s32 %v410, %v412
  %v414 = vrot.slane %v398, %v413
  %v416 = vunpack.c.l.s4 1983009808
  %v417 = vunpack.c.0.s8 %v416
  %v418 = vlaneseq
  %v419 = vshrl.u32 %v418, 7
  %v420 = vsub.s32 %v417, %v419
  %v421 = vrot.slane %v399, %v420
  %v423 = vunpack.c.l.s4 1983009808
  %v424 = vunpack.c.0.s8 %v423
  %v425 = vlaneseq
  %v426 = vshrl.u32 %v425, 7
  %v427 = vsub.s32 %v424, %v426
  %v428 = vrot.slane %v400, %v427
  %v429 = vcombine.low %v407, %v421
  %v430 = vcombine.high %v407, %v421
  %v431 = vcombine.low %v414, %v428
  %v432 = vcombine.high %v414, %v428
  %v441 = vcombine.low %v198, %v212
  %v442 = vcombine.high %v198, %v212
  %v443 = vcombine.low %v226, %v240
  %v444 = vcombine.high %v226, %v240
  %v446 = vunpack.c.l.s4 1983009808
  %v447 = vunpack.c.0.s8 %v446
  %v448 = vlaneseq
  %v449 = vshrl.u32 %v448, 7
  %v450 = vsub.s32 %v447, %v449
  %v451 = vrot.slane %v441, %v450
  %v453 = vunpack.c.l.s4 1983009808
  %v454 = vunpack.c.0.s8 %v453
  %v455 = vlaneseq
  %v456 = vshrl.u32 %v455, 7
  %v457 = vsub.s32 %v454, %v456
  %v458 = vrot.slane %v442, %v457
  %v460 = vunpack.c.l.s4 1983009808
  %v461 = vunpack.c.0.s8 %v460
  %v462 = vlaneseq
  %v463 = vshrl.u32 %v462, 7
  %v464 = vsub.s32 %v461, %v463
  %v465 = vrot.slane %v443, %v464
  %v467 = vunpack.c.l.s4 1983009808
  %v468 = vunpack.c.0.s8 %v467
  %v469 = vlaneseq
  %v470 = vshrl.u32 %v469, 7
  %v471 = vsub.s32 %v468, %v470
  %v472 = vrot.slane %v444, %v471
  %v473 = vcombine.low %v451, %v465
  %v474 = vcombine.high %v451, %v465
  %v475 = vcombine.low %v458, %v472
  %v476 = vcombine.high %v458, %v472
  %v477 = vcombine.low %v254, %v268
  %v478 = vcombine.high %v254, %v268
  %v479 = vcombine.low %v282, %v296
  %v480 = vcombine.high %v282, %v296
  %v482 = vunpack.c.l.s4 1983009808
  %v483 = vunpack.c.0.s8 %v482
  %v484 = vlaneseq
  %v485 = vshrl.u32 %v484, 7
  %v486 = vsub.s32 %v483, %v485
  %v487 = vrot.slane %v477, %v486
  %v489 = vunpack.c.l.s4 1983009808
  %v490 = vunpack.c.0.s8 %v489
  %v491 = vlaneseq
  %v492 = vshrl.u32 %v491, 7
  %v493 = vsub.s32 %v490, %v492
  %v494 = vrot.slane %v478, %v493
  %v496 = vunpack.c.l.s4 1983009808
  %v497 = vunpack.c.0.s8 %v496
  %v498 = vlaneseq
  %v499 = vshrl.u32 %v498, 7
  %v500 = vsub.s32 %v497, %v499
  %v501 = vrot.slane %v479, %v500
  %v503 = vunpack.c.l.s4 1983009808
  %v504 = vunpack.c.0.s8 %v503
  %v505 = vlaneseq
  %v506 = vshrl.u32 %v505, 7
  %v507 = vsub.s32 %v504, %v506
  %v508 = vrot.slane %v480, %v507
  %v509 = vcombine.low %v487, %v501
  %v510 = vcombine.high %v487, %v501
  %v511 = vcombine.low %v494, %v508
  %v512 = vcombine.high %v494, %v508
  %v521 = vcombine.low %v79, %v94
  %v522 = vcombine.high %v79, %v94
  %v523 = vcombine.low %v109, %v315
  %v524 = vcombine.high %v109, %v315
  %v526 = vunpack.c.l.s4 1983009808
  %v527 = vunpack.c.0.s8 %v526
  %v528 = vlaneseq
  %v529 = vshrl.u32 %v528, 7
  %v530 = vsub.s32 %v527, %v529
  %v531 = vrot.slane %v521, %v530
  %v533 = vunpack.c.l.s4 1983009808
  %v534 = vunpack.c.0.s8 %v533
  %v535 = vlaneseq
  %v536 = vshrl.u32 %v535, 7
  %v537 = vsub.s32 %v534, %v536
  %v538 = vrot.slane %v522, %v537
  %v540 = vunpack.c.l.s4 1983009808
  %v541 = vunpack.c.0.s8 %v540
  %v542 = vlaneseq
  %v543 = vshrl.u32 %v542, 7
  %v544 = vsub.s32 %v541, %v543
  %v545 = vrot.slane %v523, %v544
  %v547 = vunpack.c.l.s4 1983009808
  %v548 = vunpack.c.0.s8 %v547
  %v549 = vlaneseq
  %v550 = vshrl.u32 %v549, 7
  %v551 = vsub.s32 %v548, %v550
  %v552 = vrot.slane %v524, %v551
  %v553 = vcombine.low %v531, %v545
  %v554 = vcombine.high %v531, %v545
  %v555 = vcombine.low %v538, %v552
  %v556 = vcombine.high %v538, %v552
  %v557 = vcombine.low %v139, %v154
  %v558 = vcombine.high %v139, %v154
  %v559 = vcombine.low %v169, %v330
  %v560 = vcombine.high %v169, %v330
  %v562 = vunpack.c.l.s4 1983009808
  %v563 = vunpack.c.0.s8 %v562
  %v564 = vlaneseq
  %v565 = vshrl.u32 %v564, 7
  %v566 = vsub.s32 %v563, %v565
  %v567 = vrot.slane %v557, %v566
  %v569 = vunpack.c.l.s4 1983009808
  %v570 = vunpack.c.0.s8 %v569
  %v571 = vlaneseq
  %v572 = vshrl.u32 %v571, 7
  %v573 = vsub.s32 %v570, %v572
  %v574 = vrot.slane %v558, %v573
  %v576 = vunpack.c.l.s4 1983009808
  %v577 = vunpack.c.0.s8 %v576
  %v578 = vlaneseq
  %v579 = vshrl.u32 %v578, 7
  %v580 = vsub.s32 %v577, %v579
  %v581 = vrot.slane %v559, %v580
  %v583 = vunpack.c.l.s4 1983009808
  %v584 = vunpack.c.0.s8 %v583
  %v585 = vlaneseq
  %v586 = vshrl.u32 %v585, 7
  %v587 = vsub.s32 %v584, %v586
  %v588 = vrot.slane %v560, %v587
  %v589 = vcombine.low %v567, %v581
  %v590 = vcombine.high %v567, %v581
  %v591 = vcombine.low %v574, %v588
  %v592 = vcombine.high %v574, %v588
  %v601 = vcombine.low %v212, %v226
  %v602 = vcombine.high %v212, %v226
  %v603 = vcombine.low %v240, %v346
  %v604 = vcombine.high %v240, %v346
  %v606 = vunpack.c.l.s4 1983009808
  %v607 = vunpack.c.0.s8 %v606
  %v608 = vlaneseq
  %v609 = vshrl.u32 %v608, 7
  %v610 = vsub.s32 %v607, %v609
  %v611 = vrot.slane %v601, %v610
  %v613 = vunpack.c.l.s4 1983009808
  %v614 = vunpack.c.0.s8 %v613
  %v615 = vlaneseq
  %v616 = vshrl.u32 %v615, 7
  %v617 = vsub.s32 %v614, %v616
  %v618 = vrot.slane %v602, %v617
  %v620 = vunpack.c.l.s4 1983009808
  %v621 = vunpack.c.0.s8 %v620
  %v622 = vlaneseq
  %v623 = vshrl.u32 %v622, 7
  %v624 = vsub.s32 %v621, %v623
  %v625 = vrot.slane %v603, %v624
  %v627 = vunpack.c.l.s4 1983009808
  %v628 = vunpack.c.0.s8 %v627
  %v629 = vlaneseq
  %v630 = vshrl.u32 %v629, 7
  %v631 = vsub.s32 %v628, %v630
  %v632 = vrot.slane %v604, %v631
  %v633 = vcombine.low %v611, %v625
  %v634 = vcombine.high %v611, %v625
  %v635 = vcombine.low %v618, %v632
  %v636 = vcombine.high %v618, %v632
  %v637 = vcombine.low %v268, %v282
  %v638 = vcombine.high %v268, %v282
  %v639 = vcombine.low %v296, %v360
  %v640 = vcombine.high %v296, %v360
  %v642 = vunpack.c.l.s4 1983009808
  %v643 = vunpack.c.0.s8 %v642
  %v644 = vlaneseq
  %v645 = vshrl.u32 %v644, 7
  %v646 = vsub.s32 %v643, %v645
  %v647 = vrot.slane %v637, %v646
  %v649 = vunpack.c.l.s4 1983009808
  %v650 = vunpack.c.0.s8 %v649
  %v651 = vlaneseq
  %v652 = vshrl.u32 %v651, 7
  %v653 = vsub.s32 %v650, %v652
  %v654 = vrot.slane %v638, %v653
  %v656 = vunpack.c.l.s4 1983009808
  %v657 = vunpack.c.0.s8 %v656
  %v658 = vlaneseq
  %v659 = vshrl.u32 %v658, 7
  %v660 = vsub.s32 %v657, %v659
  %v661 = vrot.slane %v639, %v660
  %v663 = vunpack.c.l.s4 1983009808
  %v664 = vunpack.c.0.s8 %v663
  %v665 = vlaneseq
  %v666 = vshrl.u32 %v665, 7
  %v667 = vsub.s32 %v664, %v666
  %v668 = vrot.slane %v640, %v667
  %v669 = vcombine.low %v647, %v661
  %v670 = vcombine.high %v647, %v661
  %v671 = vcombine.low %v654, %v668
  %v672 = vcombine.high %v654, %v668
  %v681 = vld [vmem:[%s1] sm:$0xf]
  %v682 = vld [vmem:[%s1 + $0x4] sm:$0xf]
  %v683 = vld [vmem:[%s1 + $0x8] sm:$0xf]
  %v684 = vld [vmem:[%s1 + $0xc] sm:$0xf]
  %v685 = vld [vmem:[%s1 + $0x10] sm:$0xf]
  %v686 = vld [vmem:[%s1 + $0x14] sm:$0xf]
  %v687 = vld [vmem:[%s1 + $0x18] sm:$0xf]
  %v688 = vld [vmem:[%s1 + $0x1c] sm:$0xf]
  %v689 = vld [vmem:[%s1 + $0x20] sm:$0xf]
  %v690 = vld [vmem:[%s1 + $0x24] sm:$0xf]
  %v691 = vld [vmem:[%s1 + $0x28] sm:$0xf]
  %v692 = vld [vmem:[%s1 + $0x2c] sm:$0xf]
  %v693 = vld [vmem:[%s1 + $0x30] sm:$0xf]
  %v694 = vld [vmem:[%s1 + $0x34] sm:$0xf]
  %v695 = vld [vmem:[%s1 + $0x38] sm:$0xf]
  %v696 = vld [vmem:[%s1 + $0x3c] sm:$0xf]
  %v697 = vld [vmem:[%s1 + $0x40] sm:$0xf]
  %v698 = vld [vmem:[%s1 + $0x44] sm:$0xf]
  %v699 = vld [vmem:[%s1 + $0x48] sm:$0xf]
  %v700 = vld [vmem:[%s1 + $0x4c] sm:$0xf]
  %v701 = vld [vmem:[%s1 + $0x50] sm:$0xf]
  %v702 = vld [vmem:[%s1 + $0x54] sm:$0xf]
  %v703 = vld [vmem:[%s1 + $0x58] sm:$0xf]
  %v704 = vld [vmem:[%s1 + $0x5c] sm:$0xf]
  %v705 = vld [vmem:[%s1 + $0x60] sm:$0xf]
  %v706 = vld [vmem:[%s1 + $0x64] sm:$0xf]
  %v707 = vld [vmem:[%s1 + $0x68] sm:$0xf]
  %v708 = vld [vmem:[%s1 + $0x6c] sm:$0xf]
  %v709 = vld [vmem:[%s1 + $0x70] sm:$0xf]
  %v710 = vld [vmem:[%s1 + $0x74] sm:$0xf]
  %v711 = vld [vmem:[%s1 + $0x78] sm:$0xf]
  %v712 = vld [vmem:[%s1 + $0x7c] sm:$0xf]
  %v713 = vld [vmem:[%s1 + $0x80] sm:$0xf]
  %v714 = vld [vmem:[%s1 + $0x84] sm:$0xf]
  %v715 = vld [vmem:[%s1 + $0x88] sm:$0xf]
  %v716 = vld [vmem:[%s1 + $0x8c] sm:$0xf]
  %v717 = vld [vmem:[%s1 + $0x90] sm:$0xf]
  %v718 = vld [vmem:[%s1 + $0x94] sm:$0xf]
  %v719 = vld [vmem:[%s1 + $0x98] sm:$0xf]
  %v720 = vld [vmem:[%s1 + $0x9c] sm:$0xf]
  %v721 = vld [vmem:[%s1 + $0xa0] sm:$0xf]
  %v722 = vld [vmem:[%s1 + $0xa4] sm:$0xf]
  %v723 = vld [vmem:[%s1 + $0xa8] sm:$0xf]
  %v724 = vld [vmem:[%s1 + $0xac] sm:$0xf]
  %v725 = vld [vmem:[%s1 + $0xb0] sm:$0xf]
  %v726 = vld [vmem:[%s1 + $0xb4] sm:$0xf]
  %v727 = vld [vmem:[%s1 + $0xb8] sm:$0xf]
  %v728 = vld [vmem:[%s1 + $0xbc] sm:$0xf]
  %v729 = vld [vmem:[%s1 + $0xc0] sm:$0xf]
  %v730 = vld [vmem:[%s1 + $0xc4] sm:$0xf]
  %v731 = vld [vmem:[%s1 + $0xc8] sm:$0xf]
  %v732 = vld [vmem:[%s1 + $0xcc] sm:$0xf]
  %v733 = vld [vmem:[%s1 + $0xd0] sm:$0xf]
  %v734 = vld [vmem:[%s1 + $0xd4] sm:$0xf]
  %v735 = vld [vmem:[%s1 + $0xd8] sm:$0xf]
  %v736 = vld [vmem:[%s1 + $0xdc] sm:$0xf]
  %v737 = vld [vmem:[%s1 + $0xe0] sm:$0xf]
  %v738 = vld [vmem:[%s1 + $0xe4] sm:$0xf]
  %v739 = vld [vmem:[%s1 + $0xe8] sm:$0xf]
  %v740 = vld [vmem:[%s1 + $0xec] sm:$0xf]
  %v741 = vld [vmem:[%s1 + $0xf0] sm:$0xf]
  %v742 = vld [vmem:[%s1 + $0xf4] sm:$0xf]
  %v743 = vld [vmem:[%s1 + $0xf8] sm:$0xf]
  %v744 = vld [vmem:[%s1 + $0xfc] sm:$0xf]
  %v745 = vld [vmem:[%s1 + $0x100] sm:$0xf]
  %v746 = vld [vmem:[%s1 + $0x104] sm:$0xf]
  %v747 = vld [vmem:[%s1 + $0x108] sm:$0xf]
  %v748 = vld [vmem:[%s1 + $0x10c] sm:$0xf]
  %v749 = vld [vmem:[%s1 + $0x110] sm:$0xf]
  %v750 = vld [vmem:[%s1 + $0x114] sm:$0xf]
  %v751 = vld [vmem:[%s1 + $0x118] sm:$0xf]
  %v752 = vld [vmem:[%s1 + $0x11c] sm:$0xf]
  %v753 = vld [vmem:[%s1 + $0x120] sm:$0xf]
  %v754 = vld [vmem:[%s1 + $0x124] sm:$0xf]
  %v755 = vld [vmem:[%s1 + $0x128] sm:$0xf]
  %v756 = vld [vmem:[%s1 + $0x12c] sm:$0xf]
  %v757 = vld [vmem:[%s1 + $0x130] sm:$0xf]
  %v758 = vld [vmem:[%s1 + $0x134] sm:$0xf]
  %v759 = vld [vmem:[%s1 + $0x138] sm:$0xf]
  %v760 = vld [vmem:[%s1 + $0x13c] sm:$0xf]
  %v761 = vld [vmem:[%s1 + $0x140] sm:$0xf]
  %v762 = vld [vmem:[%s1 + $0x144] sm:$0xf]
  %v763 = vld [vmem:[%s1 + $0x148] sm:$0xf]
  %v764 = vld [vmem:[%s1 + $0x14c] sm:$0xf]
  %v765 = vld [vmem:[%s1 + $0x150] sm:$0xf]
  %v766 = vld [vmem:[%s1 + $0x154] sm:$0xf]
  %v767 = vld [vmem:[%s1 + $0x158] sm:$0xf]
  %v768 = vld [vmem:[%s1 + $0x15c] sm:$0xf]
  %v769 = vld [vmem:[%s1 + $0x160] sm:$0xf]
  %v770 = vld [vmem:[%s1 + $0x164] sm:$0xf]
  %v771 = vld [vmem:[%s1 + $0x168] sm:$0xf]
  %v772 = vld [vmem:[%s1 + $0x16c] sm:$0xf]
  %v773 = vld [vmem:[%s1 + $0x170] sm:$0xf]
  %v774 = vld [vmem:[%s1 + $0x174] sm:$0xf]
  %v775 = vld [vmem:[%s1 + $0x178] sm:$0xf]
  %v776 = vld [vmem:[%s1 + $0x17c] sm:$0xf]
  %v777 = vld [vmem:[%s1 + $0x180] sm:$0xf]
  %v778 = vld [vmem:[%s1 + $0x184] sm:$0xf]
  %v779 = vld [vmem:[%s1 + $0x188] sm:$0xf]
  %v780 = vld [vmem:[%s1 + $0x18c] sm:$0xf]
  %v781 = vld [vmem:[%s1 + $0x190] sm:$0xf]
  %v782 = vld [vmem:[%s1 + $0x194] sm:$0xf]
  %v783 = vld [vmem:[%s1 + $0x198] sm:$0xf]
  %v784 = vld [vmem:[%s1 + $0x19c] sm:$0xf]
  %v785 = vld [vmem:[%s1 + $0x1a0] sm:$0xf]
  %v786 = vld [vmem:[%s1 + $0x1a4] sm:$0xf]
  %v787 = vld [vmem:[%s1 + $0x1a8] sm:$0xf]
  %v788 = vld [vmem:[%s1 + $0x1ac] sm:$0xf]
  %v789 = vld [vmem:[%s1 + $0x1b0] sm:$0xf]
  %v790 = vld [vmem:[%s1 + $0x1b4] sm:$0xf]
  %v791 = vld [vmem:[%s1 + $0x1b8] sm:$0xf]
  %v792 = vld [vmem:[%s1 + $0x1bc] sm:$0xf]
  %v793 = vld [vmem:[%s1 + $0x1c0] sm:$0xf]
  %v794 = vld [vmem:[%s1 + $0x1c4] sm:$0xf]
  %v795 = vld [vmem:[%s1 + $0x1c8] sm:$0xf]
  %v796 = vld [vmem:[%s1 + $0x1cc] sm:$0xf]
  %v797 = vld [vmem:[%s1 + $0x1d0] sm:$0xf]
  %v798 = vld [vmem:[%s1 + $0x1d4] sm:$0xf]
  %v799 = vld [vmem:[%s1 + $0x1d8] sm:$0xf]
  %v800 = vld [vmem:[%s1 + $0x1dc] sm:$0xf]
  %v801 = vld [vmem:[%s1 + $0x1e0] sm:$0xf]
  %v802 = vld [vmem:[%s1 + $0x1e4] sm:$0xf]
  %v803 = vld [vmem:[%s1 + $0x1e8] sm:$0xf]
  %v804 = vld [vmem:[%s1 + $0x1ec] sm:$0xf]
  %v805 = vld [vmem:[%s1 + $0x1f0] sm:$0xf]
  %v806 = vld [vmem:[%s1 + $0x1f4] sm:$0xf]
  %v807 = vld [vmem:[%s1 + $0x1f8] sm:$0xf]
  %v808 = vld [vmem:[%s1 + $0x1fc] sm:$0xf]
  %v809 = vld [vmem:[%s1 + $0x200] sm:$0xf]
  %v810 = vld [vmem:[%s1 + $0x204] sm:$0xf]
  %v811 = vld [vmem:[%s1 + $0x208] sm:$0xf]
  %v812 = vld [vmem:[%s1 + $0x20c] sm:$0xf]
  %v813 = vld [vmem:[%s1 + $0x210] sm:$0xf]
  %v814 = vld [vmem:[%s1 + $0x214] sm:$0xf]
  %v815 = vld [vmem:[%s1 + $0x218] sm:$0xf]
  %v816 = vld [vmem:[%s1 + $0x21c] sm:$0xf]
  %v817 = vld [vmem:[%s1 + $0x220] sm:$0xf]
  %v818 = vld [vmem:[%s1 + $0x224] sm:$0xf]
  %v819 = vld [vmem:[%s1 + $0x228] sm:$0xf]
  %v820 = vld [vmem:[%s1 + $0x22c] sm:$0xf]
  %v821 = vld [vmem:[%s1 + $0x230] sm:$0xf]
  %v822 = vld [vmem:[%s1 + $0x234] sm:$0xf]
  %v823 = vld [vmem:[%s1 + $0x238] sm:$0xf]
  %v824 = vld [vmem:[%s1 + $0x23c] sm:$0xf]
  %v825 = vld [vmem:[%s1 + $0x240] sm:$0xf]
  %v826 = vld [vmem:[%s1 + $0x244] sm:$0xf]
  %v827 = vld [vmem:[%s1 + $0x248] sm:$0xf]
  %v828 = vld [vmem:[%s1 + $0x24c] sm:$0xf]
  %v829 = vld [vmem:[%s1 + $0x250] sm:$0xf]
  %v830 = vld [vmem:[%s1 + $0x254] sm:$0xf]
  %v831 = vld [vmem:[%s1 + $0x258] sm:$0xf]
  %v832 = vld [vmem:[%s1 + $0x25c] sm:$0xf]
  %v833 = vld [vmem:[%s1 + $0x260] sm:$0xf]
  %v834 = vld [vmem:[%s1 + $0x264] sm:$0xf]
  %v835 = vld [vmem:[%s1 + $0x268] sm:$0xf]
  %v836 = vld [vmem:[%s1 + $0x26c] sm:$0xf]
  %v837 = vld [vmem:[%s1 + $0x270] sm:$0xf]
  %v838 = vld [vmem:[%s1 + $0x274] sm:$0xf]
  %v839 = vld [vmem:[%s1 + $0x278] sm:$0xf]
  %v840 = vld [vmem:[%s1 + $0x27c] sm:$0xf]
  %v841 = vld [vmem:[%s1 + $0x280] sm:$0xf]
  %v842 = vld [vmem:[%s1 + $0x284] sm:$0xf]
  %v843 = vld [vmem:[%s1 + $0x288] sm:$0xf]
  %v844 = vld [vmem:[%s1 + $0x28c] sm:$0xf]
  %v845 = vld [vmem:[%s1 + $0x290] sm:$0xf]
  %v846 = vld [vmem:[%s1 + $0x294] sm:$0xf]
  %v847 = vld [vmem:[%s1 + $0x298] sm:$0xf]
  %v848 = vld [vmem:[%s1 + $0x29c] sm:$0xf]
  %v849 = vld [vmem:[%s1 + $0x2a0] sm:$0xf]
  %v850 = vld [vmem:[%s1 + $0x2a4] sm:$0xf]
  %v851 = vld [vmem:[%s1 + $0x2a8] sm:$0xf]
  %v852 = vld [vmem:[%s1 + $0x2ac] sm:$0xf]
  %v853 = vld [vmem:[%s1 + $0x2b0] sm:$0xf]
  %v854 = vld [vmem:[%s1 + $0x2b4] sm:$0xf]
  %v855 = vld [vmem:[%s1 + $0x2b8] sm:$0xf]
  %v856 = vld [vmem:[%s1 + $0x2bc] sm:$0xf]
  %v857 = vld [vmem:[%s1 + $0x2c0] sm:$0xf]
  %v858 = vld [vmem:[%s1 + $0x2c4] sm:$0xf]
  %v859 = vld [vmem:[%s1 + $0x2c8] sm:$0xf]
  %v860 = vld [vmem:[%s1 + $0x2cc] sm:$0xf]
  %v861 = vld [vmem:[%s1 + $0x2d0] sm:$0xf]
  %v862 = vld [vmem:[%s1 + $0x2d4] sm:$0xf]
  %v863 = vld [vmem:[%s1 + $0x2d8] sm:$0xf]
  %v864 = vld [vmem:[%s1 + $0x2dc] sm:$0xf]
  %v865 = vld [vmem:[%s1 + $0x2e0] sm:$0xf]
  %v866 = vld [vmem:[%s1 + $0x2e4] sm:$0xf]
  %v867 = vld [vmem:[%s1 + $0x2e8] sm:$0xf]
  %v868 = vld [vmem:[%s1 + $0x2ec] sm:$0xf]
  %v869 = vld [vmem:[%s1 + $0x2f0] sm:$0xf]
  %v870 = vld [vmem:[%s1 + $0x2f4] sm:$0xf]
  %v871 = vld [vmem:[%s1 + $0x2f8] sm:$0xf]
  %v872 = vld [vmem:[%s1 + $0x2fc] sm:$0xf]
  %v873 = vld [vmem:[%s1 + $0x300] sm:$0xf]
  %v874 = vld [vmem:[%s1 + $0x304] sm:$0xf]
  %v875 = vld [vmem:[%s1 + $0x308] sm:$0xf]
  %v876 = vld [vmem:[%s1 + $0x30c] sm:$0xf]
  %v877 = vld [vmem:[%s1 + $0x310] sm:$0xf]
  %v878 = vld [vmem:[%s1 + $0x314] sm:$0xf]
  %v879 = vld [vmem:[%s1 + $0x318] sm:$0xf]
  %v880 = vld [vmem:[%s1 + $0x31c] sm:$0xf]
  %v881 = vld [vmem:[%s1 + $0x320] sm:$0xf]
  %v882 = vld [vmem:[%s1 + $0x324] sm:$0xf]
  %v883 = vld [vmem:[%s1 + $0x328] sm:$0xf]
  %v884 = vld [vmem:[%s1 + $0x32c] sm:$0xf]
  %v885 = vld [vmem:[%s1 + $0x330] sm:$0xf]
  %v886 = vld [vmem:[%s1 + $0x334] sm:$0xf]
  %v887 = vld [vmem:[%s1 + $0x338] sm:$0xf]
  %v888 = vld [vmem:[%s1 + $0x33c] sm:$0xf]
  %v889 = vld [vmem:[%s1 + $0x340] sm:$0xf]
  %v890 = vld [vmem:[%s1 + $0x344] sm:$0xf]
  %v891 = vld [vmem:[%s1 + $0x348] sm:$0xf]
  %v892 = vld [vmem:[%s1 + $0x34c] sm:$0xf]
  %v893 = vld [vmem:[%s1 + $0x350] sm:$0xf]
  %v894 = vld [vmem:[%s1 + $0x354] sm:$0xf]
  %v895 = vld [vmem:[%s1 + $0x358] sm:$0xf]
  %v896 = vld [vmem:[%s1 + $0x35c] sm:$0xf]
  %v897 = vld [vmem:[%s1 + $0x360] sm:$0xf]
  %v898 = vld [vmem:[%s1 + $0x364] sm:$0xf]
  %v899 = vld [vmem:[%s1 + $0x368] sm:$0xf]
  %v900 = vld [vmem:[%s1 + $0x36c] sm:$0xf]
  %v901 = vld [vmem:[%s1 + $0x370] sm:$0xf]
  %v902 = vld [vmem:[%s1 + $0x374] sm:$0xf]
  %v903 = vld [vmem:[%s1 + $0x378] sm:$0xf]
  %v904 = vld [vmem:[%s1 + $0x37c] sm:$0xf]
  %v905 = vld [vmem:[%s1 + $0x380] sm:$0xf]
  %v906 = vld [vmem:[%s1 + $0x384] sm:$0xf]
  %v907 = vld [vmem:[%s1 + $0x388] sm:$0xf]
  %v908 = vld [vmem:[%s1 + $0x38c] sm:$0xf]
  %v909 = vld [vmem:[%s1 + $0x390] sm:$0xf]
  %v910 = vld [vmem:[%s1 + $0x394] sm:$0xf]
  %v911 = vld [vmem:[%s1 + $0x398] sm:$0xf]
  %v912 = vld [vmem:[%s1 + $0x39c] sm:$0xf]
  %v913 = vld [vmem:[%s1 + $0x3a0] sm:$0xf]
  %v914 = vld [vmem:[%s1 + $0x3a4] sm:$0xf]
  %v915 = vld [vmem:[%s1 + $0x3a8] sm:$0xf]
  %v916 = vld [vmem:[%s1 + $0x3ac] sm:$0xf]
  %v917 = vld [vmem:[%s1 + $0x3b0] sm:$0xf]
  %v918 = vld [vmem:[%s1 + $0x3b4] sm:$0xf]
  %v919 = vld [vmem:[%s1 + $0x3b8] sm:$0xf]
  %v920 = vld [vmem:[%s1 + $0x3bc] sm:$0xf]
  %v921 = vld [vmem:[%s1 + $0x3c0] sm:$0xf]
  %v922 = vld [vmem:[%s1 + $0x3c4] sm:$0xf]
  %v923 = vld [vmem:[%s1 + $0x3c8] sm:$0xf]
  %v924 = vld [vmem:[%s1 + $0x3cc] sm:$0xf]
  %v925 = vld [vmem:[%s1 + $0x3d0] sm:$0xf]
  %v926 = vld [vmem:[%s1 + $0x3d4] sm:$0xf]
  %v927 = vld [vmem:[%s1 + $0x3d8] sm:$0xf]
  %v928 = vld [vmem:[%s1 + $0x3dc] sm:$0xf]
  %v929 = vld [vmem:[%s1 + $0x3e0] sm:$0xf]
  %v930 = vld [vmem:[%s1 + $0x3e4] sm:$0xf]
  %v931 = vld [vmem:[%s1 + $0x3e8] sm:$0xf]
  %v932 = vld [vmem:[%s1 + $0x3ec] sm:$0xf]
  %v933 = vld [vmem:[%s1 + $0x3f0] sm:$0xf]
  %v934 = vld [vmem:[%s1 + $0x3f4] sm:$0xf]
  %v935 = vld [vmem:[%s1 + $0x3f8] sm:$0xf]
  %v936 = vld [vmem:[%s1 + $0x3fc] sm:$0xf]
  %v1193 = vunpack.c.l.b16 %v681
  %v1194 = vunpack.c.l.b16 %v682
  %v1195 = vunpack.c.l.b16 %v683
  %v1196 = vunpack.c.l.b16 %v684
  %v1197 = vunpack.c.l.b16 %v685
  %v1198 = vunpack.c.l.b16 %v686
  %v1199 = vunpack.c.l.b16 %v687
  %v1200 = vunpack.c.l.b16 %v688
  %v1201 = vunpack.c.l.b16 %v689
  %v1202 = vunpack.c.l.b16 %v690
  %v1203 = vunpack.c.l.b16 %v691
  %v1204 = vunpack.c.l.b16 %v692
  %v1205 = vunpack.c.l.b16 %v693
  %v1206 = vunpack.c.l.b16 %v694
  %v1207 = vunpack.c.l.b16 %v695
  %v1208 = vunpack.c.l.b16 %v696
  %v1209 = vunpack.c.l.b16 %v697
  %v1210 = vunpack.c.l.b16 %v698
  %v1211 = vunpack.c.l.b16 %v699
  %v1212 = vunpack.c.l.b16 %v700
  %v1213 = vunpack.c.l.b16 %v701
  %v1214 = vunpack.c.l.b16 %v702
  %v1215 = vunpack.c.l.b16 %v703
  %v1216 = vunpack.c.l.b16 %v704
  %v1217 = vunpack.c.l.b16 %v705
  %v1218 = vunpack.c.l.b16 %v706
  %v1219 = vunpack.c.l.b16 %v707
  %v1220 = vunpack.c.l.b16 %v708
  %v1221 = vunpack.c.l.b16 %v709
  %v1222 = vunpack.c.l.b16 %v710
  %v1223 = vunpack.c.l.b16 %v711
  %v1224 = vunpack.c.l.b16 %v712
  %v1225 = vunpack.c.l.b16 %v713
  %v1226 = vunpack.c.l.b16 %v714
  %v1227 = vunpack.c.l.b16 %v715
  %v1228 = vunpack.c.l.b16 %v716
  %v1229 = vunpack.c.l.b16 %v717
  %v1230 = vunpack.c.l.b16 %v718
  %v1231 = vunpack.c.l.b16 %v719
  %v1232 = vunpack.c.l.b16 %v720
  %v1233 = vunpack.c.l.b16 %v721
  %v1234 = vunpack.c.l.b16 %v722
  %v1235 = vunpack.c.l.b16 %v723
  %v1236 = vunpack.c.l.b16 %v724
  %v1237 = vunpack.c.l.b16 %v725
  %v1238 = vunpack.c.l.b16 %v726
  %v1239 = vunpack.c.l.b16 %v727
  %v1240 = vunpack.c.l.b16 %v728
  %v1241 = vunpack.c.l.b16 %v729
  %v1242 = vunpack.c.l.b16 %v730
  %v1243 = vunpack.c.l.b16 %v731
  %v1244 = vunpack.c.l.b16 %v732
  %v1245 = vunpack.c.l.b16 %v733
  %v1246 = vunpack.c.l.b16 %v734
  %v1247 = vunpack.c.l.b16 %v735
  %v1248 = vunpack.c.l.b16 %v736
  %v1249 = vunpack.c.l.b16 %v737
  %v1250 = vunpack.c.l.b16 %v738
  %v1251 = vunpack.c.l.b16 %v739
  %v1252 = vunpack.c.l.b16 %v740
  %v1253 = vunpack.c.l.b16 %v741
  %v1254 = vunpack.c.l.b16 %v742
  %v1255 = vunpack.c.l.b16 %v743
  %v1256 = vunpack.c.l.b16 %v744
  %v1257 = vunpack.c.l.b16 %v745
  %v1258 = vunpack.c.l.b16 %v746
  %v1259 = vunpack.c.l.b16 %v747
  %v1260 = vunpack.c.l.b16 %v748
  %v1261 = vunpack.c.l.b16 %v749
  %v1262 = vunpack.c.l.b16 %v750
  %v1263 = vunpack.c.l.b16 %v751
  %v1264 = vunpack.c.l.b16 %v752
  %v1265 = vunpack.c.l.b16 %v753
  %v1266 = vunpack.c.l.b16 %v754
  %v1267 = vunpack.c.l.b16 %v755
  %v1268 = vunpack.c.l.b16 %v756
  %v1269 = vunpack.c.l.b16 %v757
  %v1270 = vunpack.c.l.b16 %v758
  %v1271 = vunpack.c.l.b16 %v759
  %v1272 = vunpack.c.l.b16 %v760
  %v1273 = vunpack.c.l.b16 %v761
  %v1274 = vunpack.c.l.b16 %v762
  %v1275 = vunpack.c.l.b16 %v763
  %v1276 = vunpack.c.l.b16 %v764
  %v1277 = vunpack.c.l.b16 %v765
  %v1278 = vunpack.c.l.b16 %v766
  %v1279 = vunpack.c.l.b16 %v767
  %v1280 = vunpack.c.l.b16 %v768
  %v1281 = vunpack.c.l.b16 %v769
  %v1282 = vunpack.c.l.b16 %v770
  %v1283 = vunpack.c.l.b16 %v771
  %v1284 = vunpack.c.l.b16 %v772
  %v1285 = vunpack.c.l.b16 %v773
  %v1286 = vunpack.c.l.b16 %v774
  %v1287 = vunpack.c.l.b16 %v775
  %v1288 = vunpack.c.l.b16 %v776
  %v1289 = vunpack.c.l.b16 %v777
  %v1290 = vunpack.c.l.b16 %v778
  %v1291 = vunpack.c.l.b16 %v779
  %v1292 = vunpack.c.l.b16 %v780
  %v1293 = vunpack.c.l.b16 %v781
  %v1294 = vunpack.c.l.b16 %v782
  %v1295 = vunpack.c.l.b16 %v783
  %v1296 = vunpack.c.l.b16 %v784
  %v1297 = vunpack.c.l.b16 %v785
  %v1298 = vunpack.c.l.b16 %v786
  %v1299 = vunpack.c.l.b16 %v787
  %v1300 = vunpack.c.l.b16 %v788
  %v1301 = vunpack.c.l.b16 %v789
  %v1302 = vunpack.c.l.b16 %v790
  %v1303 = vunpack.c.l.b16 %v791
  %v1304 = vunpack.c.l.b16 %v792
  %v1305 = vunpack.c.l.b16 %v793
  %v1306 = vunpack.c.l.b16 %v794
  %v1307 = vunpack.c.l.b16 %v795
  %v1308 = vunpack.c.l.b16 %v796
  %v1309 = vunpack.c.l.b16 %v797
  %v1310 = vunpack.c.l.b16 %v798
  %v1311 = vunpack.c.l.b16 %v799
  %v1312 = vunpack.c.l.b16 %v800
  %v1313 = vunpack.c.l.b16 %v801
  %v1314 = vunpack.c.l.b16 %v802
  %v1315 = vunpack.c.l.b16 %v803
  %v1316 = vunpack.c.l.b16 %v804
  %v1317 = vunpack.c.l.b16 %v805
  %v1318 = vunpack.c.l.b16 %v806
  %v1319 = vunpack.c.l.b16 %v807
  %v1320 = vunpack.c.l.b16 %v808
  %v1321 = vunpack.c.l.b16 %v809
  %v1322 = vunpack.c.l.b16 %v810
  %v1323 = vunpack.c.l.b16 %v811
  %v1324 = vunpack.c.l.b16 %v812
  %v1325 = vunpack.c.l.b16 %v813
  %v1326 = vunpack.c.l.b16 %v814
  %v1327 = vunpack.c.l.b16 %v815
  %v1328 = vunpack.c.l.b16 %v816
  %v1329 = vunpack.c.l.b16 %v817
  %v1330 = vunpack.c.l.b16 %v818
  %v1331 = vunpack.c.l.b16 %v819
  %v1332 = vunpack.c.l.b16 %v820
  %v1333 = vunpack.c.l.b16 %v821
  %v1334 = vunpack.c.l.b16 %v822
  %v1335 = vunpack.c.l.b16 %v823
  %v1336 = vunpack.c.l.b16 %v824
  %v1337 = vunpack.c.l.b16 %v825
  %v1338 = vunpack.c.l.b16 %v826
  %v1339 = vunpack.c.l.b16 %v827
  %v1340 = vunpack.c.l.b16 %v828
  %v1341 = vunpack.c.l.b16 %v829
  %v1342 = vunpack.c.l.b16 %v830
  %v1343 = vunpack.c.l.b16 %v831
  %v1344 = vunpack.c.l.b16 %v832
  %v1345 = vunpack.c.l.b16 %v833
  %v1346 = vunpack.c.l.b16 %v834
  %v1347 = vunpack.c.l.b16 %v835
  %v1348 = vunpack.c.l.b16 %v836
  %v1349 = vunpack.c.l.b16 %v837
  %v1350 = vunpack.c.l.b16 %v838
  %v1351 = vunpack.c.l.b16 %v839
  %v1352 = vunpack.c.l.b16 %v840
  %v1353 = vunpack.c.l.b16 %v841
  %v1354 = vunpack.c.l.b16 %v842
  %v1355 = vunpack.c.l.b16 %v843
  %v1356 = vunpack.c.l.b16 %v844
  %v1357 = vunpack.c.l.b16 %v845
  %v1358 = vunpack.c.l.b16 %v846
  %v1359 = vunpack.c.l.b16 %v847
  %v1360 = vunpack.c.l.b16 %v848
  %v1361 = vunpack.c.l.b16 %v849
  %v1362 = vunpack.c.l.b16 %v850
  %v1363 = vunpack.c.l.b16 %v851
  %v1364 = vunpack.c.l.b16 %v852
  %v1365 = vunpack.c.l.b16 %v853
  %v1366 = vunpack.c.l.b16 %v854
  %v1367 = vunpack.c.l.b16 %v855
  %v1368 = vunpack.c.l.b16 %v856
  %v1369 = vunpack.c.l.b16 %v857
  %v1370 = vunpack.c.l.b16 %v858
  %v1371 = vunpack.c.l.b16 %v859
  %v1372 = vunpack.c.l.b16 %v860
  %v1373 = vunpack.c.l.b16 %v861
  %v1374 = vunpack.c.l.b16 %v862
  %v1375 = vunpack.c.l.b16 %v863
  %v1376 = vunpack.c.l.b16 %v864
  %v1377 = vunpack.c.l.b16 %v865
  %v1378 = vunpack.c.l.b16 %v866
  %v1379 = vunpack.c.l.b16 %v867
  %v1380 = vunpack.c.l.b16 %v868
  %v1381 = vunpack.c.l.b16 %v869
  %v1382 = vunpack.c.l.b16 %v870
  %v1383 = vunpack.c.l.b16 %v871
  %v1384 = vunpack.c.l.b16 %v872
  %v1385 = vunpack.c.l.b16 %v873
  %v1386 = vunpack.c.l.b16 %v874
  %v1387 = vunpack.c.l.b16 %v875
  %v1388 = vunpack.c.l.b16 %v876
  %v1389 = vunpack.c.l.b16 %v877
  %v1390 = vunpack.c.l.b16 %v878
  %v1391 = vunpack.c.l.b16 %v879
  %v1392 = vunpack.c.l.b16 %v880
  %v1393 = vunpack.c.l.b16 %v881
  %v1394 = vunpack.c.l.b16 %v882
  %v1395 = vunpack.c.l.b16 %v883
  %v1396 = vunpack.c.l.b16 %v884
  %v1397 = vunpack.c.l.b16 %v885
  %v1398 = vunpack.c.l.b16 %v886
  %v1399 = vunpack.c.l.b16 %v887
  %v1400 = vunpack.c.l.b16 %v888
  %v1401 = vunpack.c.l.b16 %v889
  %v1402 = vunpack.c.l.b16 %v890
  %v1403 = vunpack.c.l.b16 %v891
  %v1404 = vunpack.c.l.b16 %v892
  %v1405 = vunpack.c.l.b16 %v893
  %v1406 = vunpack.c.l.b16 %v894
  %v1407 = vunpack.c.l.b16 %v895
  %v1408 = vunpack.c.l.b16 %v896
  %v1409 = vunpack.c.l.b16 %v897
  %v1410 = vunpack.c.l.b16 %v898
  %v1411 = vunpack.c.l.b16 %v899
  %v1412 = vunpack.c.l.b16 %v900
  %v1413 = vunpack.c.l.b16 %v901
  %v1414 = vunpack.c.l.b16 %v902
  %v1415 = vunpack.c.l.b16 %v903
  %v1416 = vunpack.c.l.b16 %v904
  %v1417 = vunpack.c.l.b16 %v905
  %v1418 = vunpack.c.l.b16 %v906
  %v1419 = vunpack.c.l.b16 %v907
  %v1420 = vunpack.c.l.b16 %v908
  %v1421 = vunpack.c.l.b16 %v909
  %v1422 = vunpack.c.l.b16 %v910
  %v1423 = vunpack.c.l.b16 %v911
  %v1424 = vunpack.c.l.b16 %v912
  %v1425 = vunpack.c.l.b16 %v913
  %v1426 = vunpack.c.l.b16 %v914
  %v1427 = vunpack.c.l.b16 %v915
  %v1428 = vunpack.c.l.b16 %v916
  %v1429 = vunpack.c.l.b16 %v917
  %v1430 = vunpack.c.l.b16 %v918
  %v1431 = vunpack.c.l.b16 %v919
  %v1432 = vunpack.c.l.b16 %v920
  %v1433 = vunpack.c.l.b16 %v921
  %v1434 = vunpack.c.l.b16 %v922
  %v1435 = vunpack.c.l.b16 %v923
  %v1436 = vunpack.c.l.b16 %v924
  %v1437 = vunpack.c.l.b16 %v925
  %v1438 = vunpack.c.l.b16 %v926
  %v1439 = vunpack.c.l.b16 %v927
  %v1440 = vunpack.c.l.b16 %v928
  %v1441 = vunpack.c.l.b16 %v929
  %v1442 = vunpack.c.l.b16 %v930
  %v1443 = vunpack.c.l.b16 %v931
  %v1444 = vunpack.c.l.b16 %v932
  %v1445 = vunpack.c.l.b16 %v933
  %v1446 = vunpack.c.l.b16 %v934
  %v1447 = vunpack.c.l.b16 %v935
  %v1448 = vunpack.c.l.b16 %v936
  %v1449 = vpack.c.b16 %v1194, %v1193
  %v1450 = vpack.c.b16 %v1196, %v1195
  %v1451 = vpack.c.b16 %v1198, %v1197
  %v1452 = vpack.c.b16 %v1200, %v1199
  %v1453 = vpack.c.b16 %v1202, %v1201
  %v1454 = vpack.c.b16 %v1204, %v1203
  %v1455 = vpack.c.b16 %v1206, %v1205
  %v1456 = vpack.c.b16 %v1208, %v1207
  %v1457 = vpack.c.b16 %v1210, %v1209
  %v1458 = vpack.c.b16 %v1212, %v1211
  %v1459 = vpack.c.b16 %v1214, %v1213
  %v1460 = vpack.c.b16 %v1216, %v1215
  %v1461 = vpack.c.b16 %v1218, %v1217
  %v1462 = vpack.c.b16 %v1220, %v1219
  %v1463 = vpack.c.b16 %v1222, %v1221
  %v1464 = vpack.c.b16 %v1224, %v1223
  %v1465 = vpack.c.b16 %v1226, %v1225
  %v1466 = vpack.c.b16 %v1228, %v1227
  %v1467 = vpack.c.b16 %v1230, %v1229
  %v1468 = vpack.c.b16 %v1232, %v1231
  %v1469 = vpack.c.b16 %v1234, %v1233
  %v1470 = vpack.c.b16 %v1236, %v1235
  %v1471 = vpack.c.b16 %v1238, %v1237
  %v1472 = vpack.c.b16 %v1240, %v1239
  %v1473 = vpack.c.b16 %v1242, %v1241
  %v1474 = vpack.c.b16 %v1244, %v1243
  %v1475 = vpack.c.b16 %v1246, %v1245
  %v1476 = vpack.c.b16 %v1248, %v1247
  %v1477 = vpack.c.b16 %v1250, %v1249
  %v1478 = vpack.c.b16 %v1252, %v1251
  %v1479 = vpack.c.b16 %v1254, %v1253
  %v1480 = vpack.c.b16 %v1256, %v1255
  %v1481 = vpack.c.b16 %v1258, %v1257
  %v1482 = vpack.c.b16 %v1260, %v1259
  %v1483 = vpack.c.b16 %v1262, %v1261
  %v1484 = vpack.c.b16 %v1264, %v1263
  %v1485 = vpack.c.b16 %v1266, %v1265
  %v1486 = vpack.c.b16 %v1268, %v1267
  %v1487 = vpack.c.b16 %v1270, %v1269
  %v1488 = vpack.c.b16 %v1272, %v1271
  %v1489 = vpack.c.b16 %v1274, %v1273
  %v1490 = vpack.c.b16 %v1276, %v1275
  %v1491 = vpack.c.b16 %v1278, %v1277
  %v1492 = vpack.c.b16 %v1280, %v1279
  %v1493 = vpack.c.b16 %v1282, %v1281
  %v1494 = vpack.c.b16 %v1284, %v1283
  %v1495 = vpack.c.b16 %v1286, %v1285
  %v1496 = vpack.c.b16 %v1288, %v1287
  %v1497 = vpack.c.b16 %v1290, %v1289
  %v1498 = vpack.c.b16 %v1292, %v1291
  %v1499 = vpack.c.b16 %v1294, %v1293
  %v1500 = vpack.c.b16 %v1296, %v1295
  %v1501 = vpack.c.b16 %v1298, %v1297
  %v1502 = vpack.c.b16 %v1300, %v1299
  %v1503 = vpack.c.b16 %v1302, %v1301
  %v1504 = vpack.c.b16 %v1304, %v1303
  %v1505 = vpack.c.b16 %v1306, %v1305
  %v1506 = vpack.c.b16 %v1308, %v1307
  %v1507 = vpack.c.b16 %v1310, %v1309
  %v1508 = vpack.c.b16 %v1312, %v1311
  %v1509 = vpack.c.b16 %v1314, %v1313
  %v1510 = vpack.c.b16 %v1316, %v1315
  %v1511 = vpack.c.b16 %v1318, %v1317
  %v1512 = vpack.c.b16 %v1320, %v1319
  %v1513 = vpack.c.b16 %v1322, %v1321
  %v1514 = vpack.c.b16 %v1324, %v1323
  %v1515 = vpack.c.b16 %v1326, %v1325
  %v1516 = vpack.c.b16 %v1328, %v1327
  %v1517 = vpack.c.b16 %v1330, %v1329
  %v1518 = vpack.c.b16 %v1332, %v1331
  %v1519 = vpack.c.b16 %v1334, %v1333
  %v1520 = vpack.c.b16 %v1336, %v1335
  %v1521 = vpack.c.b16 %v1338, %v1337
  %v1522 = vpack.c.b16 %v1340, %v1339
  %v1523 = vpack.c.b16 %v1342, %v1341
  %v1524 = vpack.c.b16 %v1344, %v1343
  %v1525 = vpack.c.b16 %v1346, %v1345
  %v1526 = vpack.c.b16 %v1348, %v1347
  %v1527 = vpack.c.b16 %v1350, %v1349
  %v1528 = vpack.c.b16 %v1352, %v1351
  %v1529 = vpack.c.b16 %v1354, %v1353
  %v1530 = vpack.c.b16 %v1356, %v1355
  %v1531 = vpack.c.b16 %v1358, %v1357
  %v1532 = vpack.c.b16 %v1360, %v1359
  %v1533 = vpack.c.b16 %v1362, %v1361
  %v1534 = vpack.c.b16 %v1364, %v1363
  %v1535 = vpack.c.b16 %v1366, %v1365
  %v1536 = vpack.c.b16 %v1368, %v1367
  %v1537 = vpack.c.b16 %v1370, %v1369
  %v1538 = vpack.c.b16 %v1372, %v1371
  %v1539 = vpack.c.b16 %v1374, %v1373
  %v1540 = vpack.c.b16 %v1376, %v1375
  %v1541 = vpack.c.b16 %v1378, %v1377
  %v1542 = vpack.c.b16 %v1380, %v1379
  %v1543 = vpack.c.b16 %v1382, %v1381
  %v1544 = vpack.c.b16 %v1384, %v1383
  %v1545 = vpack.c.b16 %v1386, %v1385
  %v1546 = vpack.c.b16 %v1388, %v1387
  %v1547 = vpack.c.b16 %v1390, %v1389
  %v1548 = vpack.c.b16 %v1392, %v1391
  %v1549 = vpack.c.b16 %v1394, %v1393
  %v1550 = vpack.c.b16 %v1396, %v1395
  %v1551 = vpack.c.b16 %v1398, %v1397
  %v1552 = vpack.c.b16 %v1400, %v1399
  %v1553 = vpack.c.b16 %v1402, %v1401
  %v1554 = vpack.c.b16 %v1404, %v1403
  %v1555 = vpack.c.b16 %v1406, %v1405
  %v1556 = vpack.c.b16 %v1408, %v1407
  %v1557 = vpack.c.b16 %v1410, %v1409
  %v1558 = vpack.c.b16 %v1412, %v1411
  %v1559 = vpack.c.b16 %v1414, %v1413
  %v1560 = vpack.c.b16 %v1416, %v1415
  %v1561 = vpack.c.b16 %v1418, %v1417
  %v1562 = vpack.c.b16 %v1420, %v1419
  %v1563 = vpack.c.b16 %v1422, %v1421
  %v1564 = vpack.c.b16 %v1424, %v1423
  %v1565 = vpack.c.b16 %v1426, %v1425
  %v1566 = vpack.c.b16 %v1428, %v1427
  %v1567 = vpack.c.b16 %v1430, %v1429
  %v1568 = vpack.c.b16 %v1432, %v1431
  %v1569 = vpack.c.b16 %v1434, %v1433
  %v1570 = vpack.c.b16 %v1436, %v1435
  %v1571 = vpack.c.b16 %v1438, %v1437
  %v1572 = vpack.c.b16 %v1440, %v1439
  %v1573 = vpack.c.b16 %v1442, %v1441
  %v1574 = vpack.c.b16 %v1444, %v1443
  %v1575 = vpack.c.b16 %v1446, %v1445
  %v1576 = vpack.c.b16 %v1448, %v1447
  %1705 = vmatprep.subr.bf16.mxu0 0
  %1706 = vmatpush1.bf16.msra.mxu0 %v1456
  %1707 = vmatprep.subr.bf16.mxu0 0
  %1708 = vmatpush1.bf16.msra.mxu0 %v1455
  %1709 = vmatprep.subr.bf16.mxu0 0
  %1710 = vmatpush1.bf16.msra.mxu0 %v1454
  %1711 = vmatprep.subr.bf16.mxu0 0
  %1712 = vmatpush1.bf16.msra.mxu0 %v1453
  %1713 = vmatprep.subr.bf16.mxu0 0
  %1714 = vmatpush1.bf16.msra.mxu0 %v1452
  %1715 = vmatprep.subr.bf16.mxu0 0
  %1716 = vmatpush1.bf16.msra.mxu0 %v1451
  %1717 = vmatprep.subr.bf16.mxu0 0
  %1718 = vmatpush1.bf16.msra.mxu0 %v1450
  %1719 = vmatprep.subr.bf16.mxu0 0
  %1720 = vmatpush1.bf16.msra.mxu0 %v1449
  %1721 = vmatprep.subr.bf16.mxu0 0
  %1722 = vmatpush2.bf16.msra.mxu0 %v1464
  %1723 = vmatprep.subr.bf16.mxu0 0
  %1724 = vmatpush2.bf16.msra.mxu0 %v1463
  %1725 = vmatprep.subr.bf16.mxu0 0
  %1726 = vmatpush2.bf16.msra.mxu0 %v1462
  %1727 = vmatprep.subr.bf16.mxu0 0
  %1728 = vmatpush2.bf16.msra.mxu0 %v1461
  %1729 = vmatprep.subr.bf16.mxu0 0
  %1730 = vmatpush2.bf16.msra.mxu0 %v1460
  %1731 = vmatprep.subr.bf16.mxu0 0
  %1732 = vmatpush2.bf16.msra.mxu0 %v1459
  %1733 = vmatprep.subr.bf16.mxu0 0
  %1734 = vmatpush2.bf16.msra.mxu0 %v1458
  %1735 = vmatprep.subr.bf16.mxu0 0
  %1736 = vmatpush2.bf16.msra.mxu0 %v1457
  %1737 = vmatprep.mubr.bf16.mxu0 %v394
  %1738 = vmatmul.mubr.bf16.gmra.mxu0 %v393
  %v1739 = vpop.f32.mrf.mxu0
  %v1740 = vadd.f32 0.0, %v1739
  %v1741 = vpop.f32.mrf.mxu0
  %v1742 = vpop.f32.mrf.mxu0
  %v1743 = vadd.f32 0.0, %v1742
  %v1744 = vpop.f32.mrf.mxu0
  %1745 = vmatprep.mubr.bf16.mxu0 %v430
  %1746 = vmatmul.mubr.bf16.gmra.mxu0 %v429
  %v1747 = vpop.f32.mrf.mxu0
  %v1748 = vadd.f32 0.0, %v1747
  %v1749 = vpop.f32.mrf.mxu0
  %v1750 = vpop.f32.mrf.mxu0
  %v1751 = vadd.f32 0.0, %v1750
  %v1752 = vpop.f32.mrf.mxu0
  %1753 = vdwg.mxu0
  %1754 = vmatprep.subr.bf16.mxu0 0
  %1755 = vmatpush1.bf16.msra.mxu0 %v1472
  %1756 = vmatprep.subr.bf16.mxu0 0
  %1757 = vmatpush1.bf16.msra.mxu0 %v1471
  %1758 = vmatprep.subr.bf16.mxu0 0
  %1759 = vmatpush1.bf16.msra.mxu0 %v1470
  %1760 = vmatprep.subr.bf16.mxu0 0
  %1761 = vmatpush1.bf16.msra.mxu0 %v1469
  %1762 = vmatprep.subr.bf16.mxu0 0
  %1763 = vmatpush1.bf16.msra.mxu0 %v1468
  %1764 = vmatprep.subr.bf16.mxu0 0
  %1765 = vmatpush1.bf16.msra.mxu0 %v1467
  %1766 = vmatprep.subr.bf16.mxu0 0
  %1767 = vmatpush1.bf16.msra.mxu0 %v1466
  %1768 = vmatprep.subr.bf16.mxu0 0
  %1769 = vmatpush1.bf16.msra.mxu0 %v1465
  %1770 = vmatprep.subr.bf16.mxu0 0
  %1771 = vmatpush2.bf16.msra.mxu0 %v1480
  %1772 = vmatprep.subr.bf16.mxu0 0
  %1773 = vmatpush2.bf16.msra.mxu0 %v1479
  %1774 = vmatprep.subr.bf16.mxu0 0
  %1775 = vmatpush2.bf16.msra.mxu0 %v1478
  %1776 = vmatprep.subr.bf16.mxu0 0
  %1777 = vmatpush2.bf16.msra.mxu0 %v1477
  %1778 = vmatprep.subr.bf16.mxu0 0
  %1779 = vmatpush2.bf16.msra.mxu0 %v1476
  %1780 = vmatprep.subr.bf16.mxu0 0
  %1781 = vmatpush2.bf16.msra.mxu0 %v1475
  %1782 = vmatprep.subr.bf16.mxu0 0
  %1783 = vmatpush2.bf16.msra.mxu0 %v1474
  %1784 = vmatprep.subr.bf16.mxu0 0
  %1785 = vmatpush2.bf16.msra.mxu0 %v1473
  %1786 = vmatprep.mubr.bf16.mxu0 %v396
  %1787 = vmatmul.mubr.bf16.gmra.mxu0 %v395
  %v1788 = vpop.f32.mrf.mxu0
  %v1789 = vadd.f32 %v1740, %v1788
  %v1790 = vpop.f32.mrf.mxu0
  %v1791 = vpop.f32.mrf.mxu0
  %v1792 = vadd.f32 %v1743, %v1791
  %v1793 = vpop.f32.mrf.mxu0
  %1794 = vmatprep.mubr.bf16.mxu0 %v432
  %1795 = vmatmul.mubr.bf16.gmra.mxu0 %v431
  %v1796 = vpop.f32.mrf.mxu0
  %v1797 = vadd.f32 %v1748, %v1796
  %v1798 = vpop.f32.mrf.mxu0
  %v1799 = vpop.f32.mrf.mxu0
  %v1800 = vadd.f32 %v1751, %v1799
  %v1801 = vpop.f32.mrf.mxu0
  %1802 = vdwg.mxu0
  %1803 = vmatprep.subr.bf16.mxu0 0
  %1804 = vmatpush1.bf16.msra.mxu0 %v1488
  %1805 = vmatprep.subr.bf16.mxu0 0
  %1806 = vmatpush1.bf16.msra.mxu0 %v1487
  %1807 = vmatprep.subr.bf16.mxu0 0
  %1808 = vmatpush1.bf16.msra.mxu0 %v1486
  %1809 = vmatprep.subr.bf16.mxu0 0
  %1810 = vmatpush1.bf16.msra.mxu0 %v1485
  %1811 = vmatprep.subr.bf16.mxu0 0
  %1812 = vmatpush1.bf16.msra.mxu0 %v1484
  %1813 = vmatprep.subr.bf16.mxu0 0
  %1814 = vmatpush1.bf16.msra.mxu0 %v1483
  %1815 = vmatprep.subr.bf16.mxu0 0
  %1816 = vmatpush1.bf16.msra.mxu0 %v1482
  %1817 = vmatprep.subr.bf16.mxu0 0
  %1818 = vmatpush1.bf16.msra.mxu0 %v1481
  %1819 = vmatprep.subr.bf16.mxu0 0
  %1820 = vmatpush2.bf16.msra.mxu0 %v1496
  %1821 = vmatprep.subr.bf16.mxu0 0
  %1822 = vmatpush2.bf16.msra.mxu0 %v1495
  %1823 = vmatprep.subr.bf16.mxu0 0
  %1824 = vmatpush2.bf16.msra.mxu0 %v1494
  %1825 = vmatprep.subr.bf16.mxu0 0
  %1826 = vmatpush2.bf16.msra.mxu0 %v1493
  %1827 = vmatprep.subr.bf16.mxu0 0
  %1828 = vmatpush2.bf16.msra.mxu0 %v1492
  %1829 = vmatprep.subr.bf16.mxu0 0
  %1830 = vmatpush2.bf16.msra.mxu0 %v1491
  %1831 = vmatprep.subr.bf16.mxu0 0
  %1832 = vmatpush2.bf16.msra.mxu0 %v1490
  %1833 = vmatprep.subr.bf16.mxu0 0
  %1834 = vmatpush2.bf16.msra.mxu0 %v1489
  %1835 = vmatprep.mubr.bf16.mxu0 %v474
  %1836 = vmatmul.mubr.bf16.gmra.mxu0 %v473
  %v1837 = vpop.f32.mrf.mxu0
  %v1838 = vadd.f32 %v1789, %v1837
  %v1839 = vpop.f32.mrf.mxu0
  %v1840 = vpop.f32.mrf.mxu0
  %v1841 = vadd.f32 %v1792, %v1840
  %v1842 = vpop.f32.mrf.mxu0
  %1843 = vmatprep.mubr.bf16.mxu0 %v510
  %1844 = vmatmul.mubr.bf16.gmra.mxu0 %v509
  %v1845 = vpop.f32.mrf.mxu0
  %v1846 = vadd.f32 %v1797, %v1845
  %v1847 = vpop.f32.mrf.mxu0
  %v1848 = vpop.f32.mrf.mxu0
  %v1849 = vadd.f32 %v1800, %v1848
  %v1850 = vpop.f32.mrf.mxu0
  %1851 = vdwg.mxu0
  %1852 = vmatprep.subr.bf16.mxu0 0
  %1853 = vmatpush1.bf16.msra.mxu0 %v1504
  %1854 = vmatprep.subr.bf16.mxu0 0
  %1855 = vmatpush1.bf16.msra.mxu0 %v1503
  %1856 = vmatprep.subr.bf16.mxu0 0
  %1857 = vmatpush1.bf16.msra.mxu0 %v1502
  %1858 = vmatprep.subr.bf16.mxu0 0
  %1859 = vmatpush1.bf16.msra.mxu0 %v1501
  %1860 = vmatprep.subr.bf16.mxu0 0
  %1861 = vmatpush1.bf16.msra.mxu0 %v1500
  %1862 = vmatprep.subr.bf16.mxu0 0
  %1863 = vmatpush1.bf16.msra.mxu0 %v1499
  %1864 = vmatprep.subr.bf16.mxu0 0
  %1865 = vmatpush1.bf16.msra.mxu0 %v1498
  %1866 = vmatprep.subr.bf16.mxu0 0
  %1867 = vmatpush1.bf16.msra.mxu0 %v1497
  %1868 = vmatprep.subr.bf16.mxu0 0
  %1869 = vmatpush2.bf16.msra.mxu0 %v1512
  %1870 = vmatprep.subr.bf16.mxu0 0
  %1871 = vmatpush2.bf16.msra.mxu0 %v1511
  %1872 = vmatprep.subr.bf16.mxu0 0
  %1873 = vmatpush2.bf16.msra.mxu0 %v1510
  %1874 = vmatprep.subr.bf16.mxu0 0
  %1875 = vmatpush2.bf16.msra.mxu0 %v1509
  %1876 = vmatprep.subr.bf16.mxu0 0
  %1877 = vmatpush2.bf16.msra.mxu0 %v1508
  %1878 = vmatprep.subr.bf16.mxu0 0
  %1879 = vmatpush2.bf16.msra.mxu0 %v1507
  %1880 = vmatprep.subr.bf16.mxu0 0
  %1881 = vmatpush2.bf16.msra.mxu0 %v1506
  %1882 = vmatprep.subr.bf16.mxu0 0
  %1883 = vmatpush2.bf16.msra.mxu0 %v1505
  %1884 = vmatprep.mubr.bf16.mxu0 %v476
  %1885 = vmatmul.mubr.bf16.gmra.mxu0 %v475
  %v1886 = vpop.f32.mrf.mxu0
  %v1887 = vadd.f32 %v1838, %v1886
  %v1888 = vpop.f32.mrf.mxu0
  %v1889 = vpop.f32.mrf.mxu0
  %v1890 = vadd.f32 %v1841, %v1889
  %v1891 = vpop.f32.mrf.mxu0
  %1892 = vmatprep.mubr.bf16.mxu0 %v512
  %1893 = vmatmul.mubr.bf16.gmra.mxu0 %v511
  %v1894 = vpop.f32.mrf.mxu0
  %v1895 = vadd.f32 %v1846, %v1894
  %v1896 = vpop.f32.mrf.mxu0
  %v1897 = vpop.f32.mrf.mxu0
  %v1898 = vadd.f32 %v1849, %v1897
  %v1899 = vpop.f32.mrf.mxu0
  %1900 = vdwg.mxu0
  %1901 = vmatprep.subr.bf16.mxu0 0
  %1902 = vmatpush1.bf16.msra.mxu0 %v1520
  %1903 = vmatprep.subr.bf16.mxu0 0
  %1904 = vmatpush1.bf16.msra.mxu0 %v1519
  %1905 = vmatprep.subr.bf16.mxu0 0
  %1906 = vmatpush1.bf16.msra.mxu0 %v1518
  %1907 = vmatprep.subr.bf16.mxu0 0
  %1908 = vmatpush1.bf16.msra.mxu0 %v1517
  %1909 = vmatprep.subr.bf16.mxu0 0
  %1910 = vmatpush1.bf16.msra.mxu0 %v1516
  %1911 = vmatprep.subr.bf16.mxu0 0
  %1912 = vmatpush1.bf16.msra.mxu0 %v1515
  %1913 = vmatprep.subr.bf16.mxu0 0
  %1914 = vmatpush1.bf16.msra.mxu0 %v1514
  %1915 = vmatprep.subr.bf16.mxu0 0
  %1916 = vmatpush1.bf16.msra.mxu0 %v1513
  %1917 = vmatprep.subr.bf16.mxu0 0
  %1918 = vmatpush2.bf16.msra.mxu0 %v1528
  %1919 = vmatprep.subr.bf16.mxu0 0
  %1920 = vmatpush2.bf16.msra.mxu0 %v1527
  %1921 = vmatprep.subr.bf16.mxu0 0
  %1922 = vmatpush2.bf16.msra.mxu0 %v1526
  %1923 = vmatprep.subr.bf16.mxu0 0
  %1924 = vmatpush2.bf16.msra.mxu0 %v1525
  %1925 = vmatprep.subr.bf16.mxu0 0
  %1926 = vmatpush2.bf16.msra.mxu0 %v1524
  %1927 = vmatprep.subr.bf16.mxu0 0
  %1928 = vmatpush2.bf16.msra.mxu0 %v1523
  %1929 = vmatprep.subr.bf16.mxu0 0
  %1930 = vmatpush2.bf16.msra.mxu0 %v1522
  %1931 = vmatprep.subr.bf16.mxu0 0
  %1932 = vmatpush2.bf16.msra.mxu0 %v1521
  %1933 = vmatprep.mubr.bf16.mxu0 %v554
  %1934 = vmatmul.mubr.bf16.gmra.mxu0 %v553
  %v1935 = vpop.f32.mrf.mxu0
  %v1936 = vadd.f32 %v1887, %v1935
  %v1937 = vpop.f32.mrf.mxu0
  %v1938 = vpop.f32.mrf.mxu0
  %v1939 = vadd.f32 %v1890, %v1938
  %v1940 = vpop.f32.mrf.mxu0
  %1941 = vmatprep.mubr.bf16.mxu0 %v590
  %1942 = vmatmul.mubr.bf16.gmra.mxu0 %v589
  %v1943 = vpop.f32.mrf.mxu0
  %v1944 = vadd.f32 %v1895, %v1943
  %v1945 = vpop.f32.mrf.mxu0
  %v1946 = vpop.f32.mrf.mxu0
  %v1947 = vadd.f32 %v1898, %v1946
  %v1948 = vpop.f32.mrf.mxu0
  %1949 = vdwg.mxu0
  %1950 = vmatprep.subr.bf16.mxu0 0
  %1951 = vmatpush1.bf16.msra.mxu0 %v1536
  %1952 = vmatprep.subr.bf16.mxu0 0
  %1953 = vmatpush1.bf16.msra.mxu0 %v1535
  %1954 = vmatprep.subr.bf16.mxu0 0
  %1955 = vmatpush1.bf16.msra.mxu0 %v1534
  %1956 = vmatprep.subr.bf16.mxu0 0
  %1957 = vmatpush1.bf16.msra.mxu0 %v1533
  %1958 = vmatprep.subr.bf16.mxu0 0
  %1959 = vmatpush1.bf16.msra.mxu0 %v1532
  %1960 = vmatprep.subr.bf16.mxu0 0
  %1961 = vmatpush1.bf16.msra.mxu0 %v1531
  %1962 = vmatprep.subr.bf16.mxu0 0
  %1963 = vmatpush1.bf16.msra.mxu0 %v1530
  %1964 = vmatprep.subr.bf16.mxu0 0
  %1965 = vmatpush1.bf16.msra.mxu0 %v1529
  %1966 = vmatprep.subr.bf16.mxu0 0
  %1967 = vmatpush2.bf16.msra.mxu0 %v1544
  %1968 = vmatprep.subr.bf16.mxu0 0
  %1969 = vmatpush2.bf16.msra.mxu0 %v1543
  %1970 = vmatprep.subr.bf16.mxu0 0
  %1971 = vmatpush2.bf16.msra.mxu0 %v1542
  %1972 = vmatprep.subr.bf16.mxu0 0
  %1973 = vmatpush2.bf16.msra.mxu0 %v1541
  %1974 = vmatprep.subr.bf16.mxu0 0
  %1975 = vmatpush2.bf16.msra.mxu0 %v1540
  %1976 = vmatprep.subr.bf16.mxu0 0
  %1977 = vmatpush2.bf16.msra.mxu0 %v1539
  %1978 = vmatprep.subr.bf16.mxu0 0
  %1979 = vmatpush2.bf16.msra.mxu0 %v1538
  %1980 = vmatprep.subr.bf16.mxu0 0
  %1981 = vmatpush2.bf16.msra.mxu0 %v1537
  %1982 = vmatprep.mubr.bf16.mxu0 %v556
  %1983 = vmatmul.mubr.bf16.gmra.mxu0 %v555
  %v1984 = vpop.f32.mrf.mxu0
  %v1985 = vadd.f32 %v1936, %v1984
  %v1986 = vpop.f32.mrf.mxu0
  %v1987 = vpop.f32.mrf.mxu0
  %v1988 = vadd.f32 %v1939, %v1987
  %v1989 = vpop.f32.mrf.mxu0
  %1990 = vmatprep.mubr.bf16.mxu0 %v592
  %1991 = vmatmul.mubr.bf16.gmra.mxu0 %v591
  %v1992 = vpop.f32.mrf.mxu0
  %v1993 = vadd.f32 %v1944, %v1992
  %v1994 = vpop.f32.mrf.mxu0
  %v1995 = vpop.f32.mrf.mxu0
  %v1996 = vadd.f32 %v1947, %v1995
  %v1997 = vpop.f32.mrf.mxu0
  %1998 = vdwg.mxu0
  %1999 = vmatprep.subr.bf16.mxu0 0
  %2000 = vmatpush1.bf16.msra.mxu0 %v1552
  %2001 = vmatprep.subr.bf16.mxu0 0
  %2002 = vmatpush1.bf16.msra.mxu0 %v1551
  %2003 = vmatprep.subr.bf16.mxu0 0
  %2004 = vmatpush1.bf16.msra.mxu0 %v1550
  %2005 = vmatprep.subr.bf16.mxu0 0
  %2006 = vmatpush1.bf16.msra.mxu0 %v1549
  %2007 = vmatprep.subr.bf16.mxu0 0
  %2008 = vmatpush1.bf16.msra.mxu0 %v1548
  %2009 = vmatprep.subr.bf16.mxu0 0
  %2010 = vmatpush1.bf16.msra.mxu0 %v1547
  %2011 = vmatprep.subr.bf16.mxu0 0
  %2012 = vmatpush1.bf16.msra.mxu0 %v1546
  %2013 = vmatprep.subr.bf16.mxu0 0
  %2014 = vmatpush1.bf16.msra.mxu0 %v1545
  %2015 = vmatprep.subr.bf16.mxu0 0
  %2016 = vmatpush2.bf16.msra.mxu0 %v1560
  %2017 = vmatprep.subr.bf16.mxu0 0
  %2018 = vmatpush2.bf16.msra.mxu0 %v1559
  %2019 = vmatprep.subr.bf16.mxu0 0
  %2020 = vmatpush2.bf16.msra.mxu0 %v1558
  %2021 = vmatprep.subr.bf16.mxu0 0
  %2022 = vmatpush2.bf16.msra.mxu0 %v1557
  %2023 = vmatprep.subr.bf16.mxu0 0
  %2024 = vmatpush2.bf16.msra.mxu0 %v1556
  %2025 = vmatprep.subr.bf16.mxu0 0
  %2026 = vmatpush2.bf16.msra.mxu0 %v1555
  %2027 = vmatprep.subr.bf16.mxu0 0
  %2028 = vmatpush2.bf16.msra.mxu0 %v1554
  %2029 = vmatprep.subr.bf16.mxu0 0
  %2030 = vmatpush2.bf16.msra.mxu0 %v1553
  %2031 = vmatprep.mubr.bf16.mxu0 %v634
  %2032 = vmatmul.mubr.bf16.gmra.mxu0 %v633
  %v2033 = vpop.f32.mrf.mxu0
  %v2034 = vadd.f32 %v1985, %v2033
  %v2035 = vpop.f32.mrf.mxu0
  %v2036 = vpop.f32.mrf.mxu0
  %v2037 = vadd.f32 %v1988, %v2036
  %v2038 = vpop.f32.mrf.mxu0
  %2039 = vmatprep.mubr.bf16.mxu0 %v670
  %2040 = vmatmul.mubr.bf16.gmra.mxu0 %v669
  %v2041 = vpop.f32.mrf.mxu0
  %v2042 = vadd.f32 %v1993, %v2041
  %v2043 = vpop.f32.mrf.mxu0
  %v2044 = vpop.f32.mrf.mxu0
  %v2045 = vadd.f32 %v1996, %v2044
  %v2046 = vpop.f32.mrf.mxu0
  %2047 = vdwg.mxu0
  %2048 = vmatprep.subr.bf16.mxu0 0
  %2049 = vmatpush1.bf16.msra.mxu0 %v1568
  %2050 = vmatprep.subr.bf16.mxu0 0
  %2051 = vmatpush1.bf16.msra.mxu0 %v1567
  %2052 = vmatprep.subr.bf16.mxu0 0
  %2053 = vmatpush1.bf16.msra.mxu0 %v1566
  %2054 = vmatprep.subr.bf16.mxu0 0
  %2055 = vmatpush1.bf16.msra.mxu0 %v1565
  %2056 = vmatprep.subr.bf16.mxu0 0
  %2057 = vmatpush1.bf16.msra.mxu0 %v1564
  %2058 = vmatprep.subr.bf16.mxu0 0
  %2059 = vmatpush1.bf16.msra.mxu0 %v1563
  %2060 = vmatprep.subr.bf16.mxu0 0
  %2061 = vmatpush1.bf16.msra.mxu0 %v1562
  %2062 = vmatprep.subr.bf16.mxu0 0
  %2063 = vmatpush1.bf16.msra.mxu0 %v1561
  %2064 = vmatprep.subr.bf16.mxu0 0
  %2065 = vmatpush2.bf16.msra.mxu0 %v1576
  %2066 = vmatprep.subr.bf16.mxu0 0
  %2067 = vmatpush2.bf16.msra.mxu0 %v1575
  %2068 = vmatprep.subr.bf16.mxu0 0
  %2069 = vmatpush2.bf16.msra.mxu0 %v1574
  %2070 = vmatprep.subr.bf16.mxu0 0
  %2071 = vmatpush2.bf16.msra.mxu0 %v1573
  %2072 = vmatprep.subr.bf16.mxu0 0
  %2073 = vmatpush2.bf16.msra.mxu0 %v1572
  %2074 = vmatprep.subr.bf16.mxu0 0
  %2075 = vmatpush2.bf16.msra.mxu0 %v1571
  %2076 = vmatprep.subr.bf16.mxu0 0
  %2077 = vmatpush2.bf16.msra.mxu0 %v1570
  %2078 = vmatprep.subr.bf16.mxu0 0
  %2079 = vmatpush2.bf16.msra.mxu0 %v1569
  %2080 = vmatprep.mubr.bf16.mxu0 %v636
  %2081 = vmatmul.mubr.bf16.gmra.mxu0 %v635
  %v2082 = vpop.f32.mrf.mxu0
  %v2083 = vadd.f32 %v2034, %v2082
  %v2084 = vpop.f32.mrf.mxu0
  %v2085 = vpop.f32.mrf.mxu0
  %v2086 = vadd.f32 %v2037, %v2085
  %v2087 = vpop.f32.mrf.mxu0
  %2088 = vmatprep.mubr.bf16.mxu0 %v672
  %2089 = vmatmul.mubr.bf16.gmra.mxu0 %v671
  %v2090 = vpop.f32.mrf.mxu0
  %v2091 = vadd.f32 %v2042, %v2090
  %v2092 = vpop.f32.mrf.mxu0
  %v2093 = vpop.f32.mrf.mxu0
  %v2094 = vadd.f32 %v2045, %v2093
  %v2095 = vpop.f32.mrf.mxu0
  %2096 = vdwg.mxu0
  %v2097 = vpack.c.bf16 %v2086, %v2083
  %v2098 = vpack.c.bf16 %v2094, %v2091
  %v2101 = vunpack.c.l.b16 %v2097
  %v2102 = vunpack.c.h.b16 %v2097
  %v2103 = vunpack.c.l.b16 %v2098
  %v2104 = vunpack.c.h.b16 %v2098
  %v2105 = vpack.c.b16 %v2101, %v2101
  %v2106 = vpack.c.b16 %v2102, %v2102
  %v2107 = vpack.c.b16 %v2103, %v2103
  %v2108 = vpack.c.b16 %v2104, %v2104
  %2113 = vst [vmem:[%s2] sm:$0xf] %v2105
  %2114 = vst [vmem:[%s2 + $0x4] sm:$0xf] %v2106
  %2115 = vst [vmem:[%s2 + $0x8] sm:$0xf] %v2107
  %2116 = vst [vmem:[%s2 + $0xc] sm:$0xf] %v2108
  %v2117 = vadd.f32 %v2083, %v2086
  %v2118 = vadd.f32 %v2117, %v2091
  %v2119 = vadd.f32 %v2118, %v2094
  %v2120 = vrot.slane %v2119, 4
  %v2121 = vadd.f32 %v2119, %v2120
  %v2122 = vrot.slane %v2121, 2
  %v2123 = vadd.f32 %v2121, %v2122
  %v2124 = vrot.slane %v2123, 1
  %v2125 = vadd.f32 %v2123, %v2124
  %2126 = vst [vmem:[%s3] sm:$0x1] %v2125
  %v2127 = vmul.f32 %v2083, %v2083
  %v2128 = vmul.f32 %v2086, %v2086
  %v2129 = vmul.f32 %v2091, %v2091
  %v2130 = vmul.f32 %v2094, %v2094
  %v2131 = vadd.f32 %v2127, %v2128
  %v2132 = vadd.f32 %v2131, %v2129
  %v2133 = vadd.f32 %v2132, %v2130
  %v2134 = vrot.slane %v2133, 4
  %v2135 = vadd.f32 %v2133, %v2134
  %v2136 = vrot.slane %v2135, 2
  %v2137 = vadd.f32 %v2135, %v2136
  %v2138 = vrot.slane %v2137, 1
  %v2139 = vadd.f32 %v2137, %v2138
  %2140 = vst [vmem:[%s3 + $0x1] sm:$0x1] %v2139
  // Predicated region
  $region10: #{discriminator_forward.4} parent=0 // pred_check
    _
  $region11: #{discriminator_forward.4} parent=0 // pred_check_branch
    %2142 = sbr.rel (0) target = $region13
  $region12: #{discriminator_forward.4} parent=0 // pred_region
    _
  $region13: #{discriminator_forward.4} parent=0 // pred_fallthru
    _
  // Predicated region
  $region14: #{discriminator_forward.4} parent=0 // pred_check
    _
  $region15: #{discriminator_forward.4} parent=0 // pred_check_branch
    %2144 = sbr.rel (0) target = $region17
  $region16: #{discriminator_forward.4} parent=0 // pred_region
    _
  $region17: #{discriminator_forward.4} parent=0 // pred_fallthru
    _
  // Predicated region
  $region18: #{discriminator_forward.4} parent=0 // pred_check
    _
  $region19: #{discriminator_forward.4} parent=0 // pred_check_branch
    %2146 = sbr.rel (0) target = $region21
  $region20: #{discriminator_forward.4} parent=0 // pred_region
    _
  $region21: #{discriminator_forward.4} parent=0 // pred_fallthru
    _
  // Predicated region
  $region22: #{discriminator_forward.4} parent=0 // pred_check
    _
  $region23: #{discriminator_forward.4} parent=0 // pred_check_branch
    %2148 = sbr.rel (0) target = $region25
  $region24: #{discriminator_forward.4} parent=0 // pred_region
    _
  $region25: #{discriminator_forward.4} parent=0 // pred_fallthru
    _

// kernel: discriminator_forward.5
$region0: #{discriminator_forward.5}
  #allocation0 [shape = 'u32[]', space=smem, size = 0x4, offset = 0x4, fixed_abs, tag = 'smem constant byte address 0x4 - core index']
  #allocation1 [shape = 'u32[144,128]{1,0:T(1,128)}', space=vmem, size = 0x12000, scoped, tag = 'internal scratch']
  %s0 = inlined_call_operand.vmem [shape: bf16[2,4,4,128], index: 0, kind: input, shape index: {}]
  %s1 = inlined_call_operand.vmem [shape: f32[1,128], index: 1, kind: input, shape index: {}]
  %s2 = inlined_call_operand.vmem [shape: f32[1,128], index: 2, kind: input, shape index: {}]
  %s3 = inlined_call_operand.vmem [shape: bf16[2048,128], index: 3, kind: input, shape index: {}]
  %s4 = inlined_call_operand.vmem [shape: f32[2,128], index: 4, kind: output, shape index: {}]
  %s5 = sld [smem:[#allocation0]]
  $region26: #{discriminator_forward.5} parent=0
    _
  %s7 = ssub.s32 1, %s5
  %s8 = scalar_select 0, %s7, %s5
  // Predicated region
  $region2: #{discriminator_forward.5} parent=0 // pred_check
    _
  $region3: #{discriminator_forward.5} parent=0 // pred_check_branch
    %10 = sbr.rel (0) target = $region5
  $region4: #{discriminator_forward.5} parent=0 // pred_region
    _
  $region5: #{discriminator_forward.5} parent=0 // pred_fallthru
    _
  // Predicated region
  $region6: #{discriminator_forward.5} parent=0 // pred_check
    _
  $region7: #{discriminator_forward.5} parent=0 // pred_check_branch
    %12 = sbr.rel (0) target = $region9
  $region8: #{discriminator_forward.5} parent=0 // pred_region
    _
  $region9: #{discriminator_forward.5} parent=0 // pred_fallthru
    _
  // Predicated region
  $region10: #{discriminator_forward.5} parent=0 // pred_check
    _
  $region11: #{discriminator_forward.5} parent=0 // pred_check_branch
    %14 = sbr.rel (0) target = $region13
  $region12: #{discriminator_forward.5} parent=0 // pred_region
    _
  $region13: #{discriminator_forward.5} parent=0 // pred_fallthru
    _
  // Predicated region
  $region14: #{discriminator_forward.5} parent=0 // pred_check
    _
  $region15: #{discriminator_forward.5} parent=0 // pred_check_branch
    %16 = sbr.rel (0) target = $region17
  $region16: #{discriminator_forward.5} parent=0 // pred_region
    _
  $region17: #{discriminator_forward.5} parent=0 // pred_fallthru
    _
  %v18 = vld [vmem:[%s0] sm:$0x3]
  %v19 = vld [vmem:[%s0 + $0x2] sm:$0x3]
  %v20 = vld [vmem:[%s0 + $0x4] sm:$0x3]
  %v21 = vld [vmem:[%s0 + $0x6] sm:$0x3]
  %v22 = vld [vmem:[%s0 + $0x8] sm:$0x3]
  %v23 = vld [vmem:[%s0 + $0xa] sm:$0x3]
  %v24 = vld [vmem:[%s0 + $0xc] sm:$0x3]
  %v25 = vld [vmem:[%s0 + $0xe] sm:$0x3]
  %v26 = vunpack.c.l.bf16 %v18
  %v27 = vunpack.c.l.bf16 %v19
  %v28 = vunpack.c.l.bf16 %v20
  %v29 = vunpack.c.l.bf16 %v21
  %v30 = vunpack.c.l.bf16 %v22
  %v31 = vunpack.c.l.bf16 %v23
  %v32 = vunpack.c.l.bf16 %v24
  %v33 = vunpack.c.l.bf16 %v25
  %v34 = vld [vmem:[%s1] sm:$0x1]
  %v36 = vlaneseq
  %v37 = vshrl.u32 %v36, 7
  %v38 = vsub.s32 0, %v37
  %v39 = vrot.slane %v34, %v38
  %v41 = vmul.f32 %v26, %v39
  %v42 = vmul.f32 %v27, %v39
  %v43 = vmul.f32 %v28, %v39
  %v44 = vmul.f32 %v29, %v39
  %v45 = vmul.f32 %v30, %v39
  %v46 = vmul.f32 %v31, %v39
  %v47 = vmul.f32 %v32, %v39
  %v48 = vmul.f32 %v33, %v39
  %v49 = vld [vmem:[%s2] sm:$0x1]
  %v51 = vlaneseq
  %v52 = vshrl.u32 %v51, 7
  %v53 = vsub.s32 0, %v52
  %v54 = vrot.slane %v49, %v53
  %v56 = vadd.f32 %v41, %v54
  %v57 = vadd.f32 %v42, %v54
  %v58 = vadd.f32 %v43, %v54
  %v59 = vadd.f32 %v44, %v54
  %v60 = vadd.f32 %v45, %v54
  %v61 = vadd.f32 %v46, %v54
  %v62 = vadd.f32 %v47, %v54
  %v63 = vadd.f32 %v48, %v54
  %v64 = vmul.f32 %v56, 0.2
  %v65 = vmul.f32 %v57, 0.2
  %v66 = vmul.f32 %v58, 0.2
  %v67 = vmul.f32 %v59, 0.2
  %v68 = vmul.f32 %v60, 0.2
  %v69 = vmul.f32 %v61, 0.2
  %v70 = vmul.f32 %v62, 0.2
  %v71 = vmul.f32 %v63, 0.2
  %v72 = vmax.f32 %v56, %v64
  %v73 = vmax.f32 %v57, %v65
  %v74 = vmax.f32 %v58, %v66
  %v75 = vmax.f32 %v59, %v67
  %v76 = vmax.f32 %v60, %v68
  %v77 = vmax.f32 %v61, %v69
  %v78 = vmax.f32 %v62, %v70
  %v79 = vmax.f32 %v63, %v71
  %v80 = vpack.c.bf16 %v72, %v72
  %v81 = vpack.c.bf16 %v73, %v73
  %v82 = vpack.c.bf16 %v74, %v74
  %v83 = vpack.c.bf16 %v75, %v75
  %v84 = vpack.c.bf16 %v76, %v76
  %v85 = vpack.c.bf16 %v77, %v77
  %v86 = vpack.c.bf16 %v78, %v78
  %v87 = vpack.c.bf16 %v79, %v79
  %v90 = vunpack.c.l.b16 %v80
  %v91 = vunpack.c.l.b16 %v84
  %v92 = vrot.slane %v91, 7
  %vm93 = vcmask 1041409
  %v94 = vsel %vm93, %v92, %v90
  %v95 = vpack.c.b16 %v94, %v94
  %v97 = vrot.slane %v90, 1
  %v98 = vsel %vm93, %v91, %v97
  %v99 = vpack.c.b16 %v98, %v98
  %v101 = vrot.slane %v90, 2
  %v102 = vrot.slane %v91, 1
  %v103 = vsel %vm93, %v102, %v101
  %v104 = vpack.c.b16 %v103, %v103
  %v106 = vrot.slane %v90, 3
  %v107 = vrot.slane %v91, 2
  %v108 = vsel %vm93, %v107, %v106
  %v109 = vpack.c.b16 %v108, %v108
  %v113 = vunpack.c.l.b16 %v81
  %v114 = vunpack.c.l.b16 %v85
  %v115 = vrot.slane %v114, 7
  %v116 = vsel %vm93, %v115, %v113
  %v117 = vpack.c.b16 %v116, %v116
  %v119 = vrot.slane %v113, 1
  %v120 = vsel %vm93, %v114, %v119
  %v121 = vpack.c.b16 %v120, %v120
  %v123 = vrot.slane %v113, 2
  %v124 = vrot.slane %v114, 1
  %v125 = vsel %vm93, %v124, %v123
  %v126 = vpack.c.b16 %v125, %v125
  %v128 = vrot.slane %v113, 3
  %v129 = vrot.slane %v114, 2
  %v130 = vsel %vm93, %v129, %v128
  %v131 = vpack.c.b16 %v130, %v130
  %v135 = vunpack.c.l.b16 %v82
  %v136 = vunpack.c.l.b16 %v86
  %v137 = vrot.slane %v136, 7
  %v138 = vsel %vm93, %v137, %v135
  %v139 = vpack.c.b16 %v138, %v138
  %v141 = vrot.slane %v135, 1
  %v142 = vsel %vm93, %v136, %v141
  %v143 = vpack.c.b16 %v142, %v142
  %v145 = vrot.slane %v135, 2
  %v146 = vrot.slane %v136, 1
  %v147 = vsel %vm93, %v146, %v145
  %v148 = vpack.c.b16 %v147, %v147
  %v150 = vrot.slane %v135, 3
  %v151 = vrot.slane %v136, 2
  %v152 = vsel %vm93, %v151, %v150
  %v153 = vpack.c.b16 %v152, %v152
  %v157 = vunpack.c.l.b16 %v83
  %v158 = vunpack.c.l.b16 %v87
  %v159 = vrot.slane %v158, 7
  %v160 = vsel %vm93, %v159, %v157
  %v161 = vpack.c.b16 %v160, %v160
  %v163 = vrot.slane %v157, 1
  %v164 = vsel %vm93, %v158, %v163
  %v165 = vpack.c.b16 %v164, %v164
  %v167 = vrot.slane %v157, 2
  %v168 = vrot.slane %v158, 1
  %v169 = vsel %vm93, %v168, %v167
  %v170 = vpack.c.b16 %v169, %v169
  %v172 = vrot.slane %v157, 3
  %v173 = vrot.slane %v158, 2
  %v174 = vsel %vm93, %v173, %v172
  %v175 = vpack.c.b16 %v174, %v174
  %v177 = vld [vmem:[%s3] sm:$0xf]
  %v178 = vld [vmem:[%s3 + $0x4] sm:$0xf]
  %v179 = vld [vmem:[%s3 + $0x8] sm:$0xf]
  %v180 = vld [vmem:[%s3 + $0xc] sm:$0xf]
  %v181 = vld [vmem:[%s3 + $0x10] sm:$0xf]
  %v182 = vld [vmem:[%s3 + $0x14] sm:$0xf]
  %v183 = vld [vmem:[%s3 + $0x18] sm:$0xf]
  %v184 = vld [vmem:[%s3 + $0x1c] sm:$0xf]
  %v185 = vld [vmem:[%s3 + $0x20] sm:$0xf]
  %v186 = vld [vmem:[%s3 + $0x24] sm:$0xf]
  %v187 = vld [vmem:[%s3 + $0x28] sm:$0xf]
  %v188 = vld [vmem:[%s3 + $0x2c] sm:$0xf]
  %v189 = vld [vmem:[%s3 + $0x30] sm:$0xf]
  %v190 = vld [vmem:[%s3 + $0x34] sm:$0xf]
  %v191 = vld [vmem:[%s3 + $0x38] sm:$0xf]
  %v192 = vld [vmem:[%s3 + $0x3c] sm:$0xf]
  %v193 = vld [vmem:[%s3 + $0x40] sm:$0xf]
  %v194 = vld [vmem:[%s3 + $0x44] sm:$0xf]
  %v195 = vld [vmem:[%s3 + $0x48] sm:$0xf]
  %v196 = vld [vmem:[%s3 + $0x4c] sm:$0xf]
  %v197 = vld [vmem:[%s3 + $0x50] sm:$0xf]
  %v198 = vld [vmem:[%s3 + $0x54] sm:$0xf]
  %v199 = vld [vmem:[%s3 + $0x58] sm:$0xf]
  %v200 = vld [vmem:[%s3 + $0x5c] sm:$0xf]
  %v201 = vld [vmem:[%s3 + $0x60] sm:$0xf]
  %v202 = vld [vmem:[%s3 + $0x64] sm:$0xf]
  %v203 = vld [vmem:[%s3 + $0x68] sm:$0xf]
  %v204 = vld [vmem:[%s3 + $0x6c] sm:$0xf]
  %v205 = vld [vmem:[%s3 + $0x70] sm:$0xf]
  %v206 = vld [vmem:[%s3 + $0x74] sm:$0xf]
  %v207 = vld [vmem:[%s3 + $0x78] sm:$0xf]
  %v208 = vld [vmem:[%s3 + $0x7c] sm:$0xf]
  %v209 = vld [vmem:[%s3 + $0x80] sm:$0xf]
  %v210 = vld [vmem:[%s3 + $0x84] sm:$0xf]
  %v211 = vld [vmem:[%s3 + $0x88] sm:$0xf]
  %v212 = vld [vmem:[%s3 + $0x8c] sm:$0xf]
  %v213 = vld [vmem:[%s3 + $0x90] sm:$0xf]
  %v214 = vld [vmem:[%s3 + $0x94] sm:$0xf]
  %v215 = vld [vmem:[%s3 + $0x98] sm:$0xf]
  %v216 = vld [vmem:[%s3 + $0x9c] sm:$0xf]
  %v217 = vld [vmem:[%s3 + $0xa0] sm:$0xf]
  %v218 = vld [vmem:[%s3 + $0xa4] sm:$0xf]
  %v219 = vld [vmem:[%s3 + $0xa8] sm:$0xf]
  %v220 = vld [vmem:[%s3 + $0xac] sm:$0xf]
  %v221 = vld [vmem:[%s3 + $0xb0] sm:$0xf]
  %v222 = vld [vmem:[%s3 + $0xb4] sm:$0xf]
  %v223 = vld [vmem:[%s3 + $0xb8] sm:$0xf]
  %v224 = vld [vmem:[%s3 + $0xbc] sm:$0xf]
  %v225 = vld [vmem:[%s3 + $0xc0] sm:$0xf]
  %v226 = vld [vmem:[%s3 + $0xc4] sm:$0xf]
  %v227 = vld [vmem:[%s3 + $0xc8] sm:$0xf]
  %v228 = vld [vmem:[%s3 + $0xcc] sm:$0xf]
  %v229 = vld [vmem:[%s3 + $0xd0] sm:$0xf]
  %v230 = vld [vmem:[%s3 + $0xd4] sm:$0xf]
  %v231 = vld [vmem:[%s3 + $0xd8] sm:$0xf]
  %v232 = vld [vmem:[%s3 + $0xdc] sm:$0xf]
  %v233 = vld [vmem:[%s3 + $0xe0] sm:$0xf]
  %v234 = vld [vmem:[%s3 + $0xe4] sm:$0xf]
  %v235 = vld [vmem:[%s3 + $0xe8] sm:$0xf]
  %v236 = vld [vmem:[%s3 + $0xec] sm:$0xf]
  %v237 = vld [vmem:[%s3 + $0xf0] sm:$0xf]
  %v238 = vld [vmem:[%s3 + $0xf4] sm:$0xf]
  %v239 = vld [vmem:[%s3 + $0xf8] sm:$0xf]
  %v240 = vld [vmem:[%s3 + $0xfc] sm:$0xf]
  %v241 = vld [vmem:[%s3 + $0x100] sm:$0xf]
  %v242 = vld [vmem:[%s3 + $0x104] sm:$0xf]
  %v243 = vld [vmem:[%s3 + $0x108] sm:$0xf]
  %v244 = vld [vmem:[%s3 + $0x10c] sm:$0xf]
  %v245 = vld [vmem:[%s3 + $0x110] sm:$0xf]
  %v246 = vld [vmem:[%s3 + $0x114] sm:$0xf]
  %v247 = vld [vmem:[%s3 + $0x118] sm:$0xf]
  %v248 = vld [vmem:[%s3 + $0x11c] sm:$0xf]
  %v249 = vld [vmem:[%s3 + $0x120] sm:$0xf]
  %v250 = vld [vmem:[%s3 + $0x124] sm:$0xf]
  %v251 = vld [vmem:[%s3 + $0x128] sm:$0xf]
  %v252 = vld [vmem:[%s3 + $0x12c] sm:$0xf]
  %v253 = vld [vmem:[%s3 + $0x130] sm:$0xf]
  %v254 = vld [vmem:[%s3 + $0x134] sm:$0xf]
  %v255 = vld [vmem:[%s3 + $0x138] sm:$0xf]
  %v256 = vld [vmem:[%s3 + $0x13c] sm:$0xf]
  %v257 = vld [vmem:[%s3 + $0x140] sm:$0xf]
  %v258 = vld [vmem:[%s3 + $0x144] sm:$0xf]
  %v259 = vld [vmem:[%s3 + $0x148] sm:$0xf]
  %v260 = vld [vmem:[%s3 + $0x14c] sm:$0xf]
  %v261 = vld [vmem:[%s3 + $0x150] sm:$0xf]
  %v262 = vld [vmem:[%s3 + $0x154] sm:$0xf]
  %v263 = vld [vmem:[%s3 + $0x158] sm:$0xf]
  %v264 = vld [vmem:[%s3 + $0x15c] sm:$0xf]
  %v265 = vld [vmem:[%s3 + $0x160] sm:$0xf]
  %v266 = vld [vmem:[%s3 + $0x164] sm:$0xf]
  %v267 = vld [vmem:[%s3 + $0x168] sm:$0xf]
  %v268 = vld [vmem:[%s3 + $0x16c] sm:$0xf]
  %v269 = vld [vmem:[%s3 + $0x170] sm:$0xf]
  %v270 = vld [vmem:[%s3 + $0x174] sm:$0xf]
  %v271 = vld [vmem:[%s3 + $0x178] sm:$0xf]
  %v272 = vld [vmem:[%s3 + $0x17c] sm:$0xf]
  %v273 = vld [vmem:[%s3 + $0x180] sm:$0xf]
  %v274 = vld [vmem:[%s3 + $0x184] sm:$0xf]
  %v275 = vld [vmem:[%s3 + $0x188] sm:$0xf]
  %v276 = vld [vmem:[%s3 + $0x18c] sm:$0xf]
  %v277 = vld [vmem:[%s3 + $0x190] sm:$0xf]
  %v278 = vld [vmem:[%s3 + $0x194] sm:$0xf]
  %v279 = vld [vmem:[%s3 + $0x198] sm:$0xf]
  %v280 = vld [vmem:[%s3 + $0x19c] sm:$0xf]
  %v281 = vld [vmem:[%s3 + $0x1a0] sm:$0xf]
  %v282 = vld [vmem:[%s3 + $0x1a4] sm:$0xf]
  %v283 = vld [vmem:[%s3 + $0x1a8] sm:$0xf]
  %v284 = vld [vmem:[%s3 + $0x1ac] sm:$0xf]
  %v285 = vld [vmem:[%s3 + $0x1b0] sm:$0xf]
  %v286 = vld [vmem:[%s3 + $0x1b4] sm:$0xf]
  %v287 = vld [vmem:[%s3 + $0x1b8] sm:$0xf]
  %v288 = vld [vmem:[%s3 + $0x1bc] sm:$0xf]
  %v289 = vld [vmem:[%s3 + $0x1c0] sm:$0xf]
  %v290 = vld [vmem:[%s3 + $0x1c4] sm:$0xf]
  %v291 = vld [vmem:[%s3 + $0x1c8] sm:$0xf]
  %v292 = vld [vmem:[%s3 + $0x1cc] sm:$0xf]
  %v293 = vld [vmem:[%s3 + $0x1d0] sm:$0xf]
  %v294 = vld [vmem:[%s3 + $0x1d4] sm:$0xf]
  %v295 = vld [vmem:[%s3 + $0x1d8] sm:$0xf]
  %v296 = vld [vmem:[%s3 + $0x1dc] sm:$0xf]
  %v297 = vld [vmem:[%s3 + $0x1e0] sm:$0xf]
  %v298 = vld [vmem:[%s3 + $0x1e4] sm:$0xf]
  %v299 = vld [vmem:[%s3 + $0x1e8] sm:$0xf]
  %v300 = vld [vmem:[%s3 + $0x1ec] sm:$0xf]
  %v301 = vld [vmem:[%s3 + $0x1f0] sm:$0xf]
  %v302 = vld [vmem:[%s3 + $0x1f4] sm:$0xf]
  %v303 = vld [vmem:[%s3 + $0x1f8] sm:$0xf]
  %v304 = vld [vmem:[%s3 + $0x1fc] sm:$0xf]
  %v305 = vld [vmem:[%s3 + $0x200] sm:$0xf]
  %v306 = vld [vmem:[%s3 + $0x204] sm:$0xf]
  %v307 = vld [vmem:[%s3 + $0x208] sm:$0xf]
  %v308 = vld [vmem:[%s3 + $0x20c] sm:$0xf]
  %v309 = vld [vmem:[%s3 + $0x210] sm:$0xf]
  %v310 = vld [vmem:[%s3 + $0x214] sm:$0xf]
  %v311 = vld [vmem:[%s3 + $0x218] sm:$0xf]
  %v312 = vld [vmem:[%s3 + $0x21c] sm:$0xf]
  %v313 = vld [vmem:[%s3 + $0x220] sm:$0xf]
  %v314 = vld [vmem:[%s3 + $0x224] sm:$0xf]
  %v315 = vld [vmem:[%s3 + $0x228] sm:$0xf]
  %v316 = vld [vmem:[%s3 + $0x22c] sm:$0xf]
  %v317 = vld [vmem:[%s3 + $0x230] sm:$0xf]
  %v318 = vld [vmem:[%s3 + $0x234] sm:$0xf]
  %v319 = vld [vmem:[%s3 + $0x238] sm:$0xf]
  %v320 = vld [vmem:[%s3 + $0x23c] sm:$0xf]
  %v321 = vld [vmem:[%s3 + $0x240] sm:$0xf]
  %v322 = vld [vmem:[%s3 + $0x244] sm:$0xf]
  %v323 = vld [vmem:[%s3 + $0x248] sm:$0xf]
  %v324 = vld [vmem:[%s3 + $0x24c] sm:$0xf]
  %v325 = vld [vmem:[%s3 + $0x250] sm:$0xf]
  %v326 = vld [vmem:[%s3 + $0x254] sm:$0xf]
  %v327 = vld [vmem:[%s3 + $0x258] sm:$0xf]
  %v328 = vld [vmem:[%s3 + $0x25c] sm:$0xf]
  %v329 = vld [vmem:[%s3 + $0x260] sm:$0xf]
  %v330 = vld [vmem:[%s3 + $0x264] sm:$0xf]
  %v331 = vld [vmem:[%s3 + $0x268] sm:$0xf]
  %v332 = vld [vmem:[%s3 + $0x26c] sm:$0xf]
  %v333 = vld [vmem:[%s3 + $0x270] sm:$0xf]
  %v334 = vld [vmem:[%s3 + $0x274] sm:$0xf]
  %v335 = vld [vmem:[%s3 + $0x278] sm:$0xf]
  %v336 = vld [vmem:[%s3 + $0x27c] sm:$0xf]
  %v337 = vld [vmem:[%s3 + $0x280] sm:$0xf]
  %v338 = vld [vmem:[%s3 + $0x284] sm:$0xf]
  %v339 = vld [vmem:[%s3 + $0x288] sm:$0xf]
  %v340 = vld [vmem:[%s3 + $0x28c] sm:$0xf]
  %v341 = vld [vmem:[%s3 + $0x290] sm:$0xf]
  %v342 = vld [vmem:[%s3 + $0x294] sm:$0xf]
  %v343 = vld [vmem:[%s3 + $0x298] sm:$0xf]
  %v344 = vld [vmem:[%s3 + $0x29c] sm:$0xf]
  %v345 = vld [vmem:[%s3 + $0x2a0] sm:$0xf]
  %v346 = vld [vmem:[%s3 + $0x2a4] sm:$0xf]
  %v347 = vld [vmem:[%s3 + $0x2a8] sm:$0xf]
  %v348 = vld [vmem:[%s3 + $0x2ac] sm:$0xf]
  %v349 = vld [vmem:[%s3 + $0x2b0] sm:$0xf]
  %v350 = vld [vmem:[%s3 + $0x2b4] sm:$0xf]
  %v351 = vld [vmem:[%s3 + $0x2b8] sm:$0xf]
  %v352 = vld [vmem:[%s3 + $0x2bc] sm:$0xf]
  %v353 = vld [vmem:[%s3 + $0x2c0] sm:$0xf]
  %v354 = vld [vmem:[%s3 + $0x2c4] sm:$0xf]
  %v355 = vld [vmem:[%s3 + $0x2c8] sm:$0xf]
  %v356 = vld [vmem:[%s3 + $0x2cc] sm:$0xf]
  %v357 = vld [vmem:[%s3 + $0x2d0] sm:$0xf]
  %v358 = vld [vmem:[%s3 + $0x2d4] sm:$0xf]
  %v359 = vld [vmem:[%s3 + $0x2d8] sm:$0xf]
  %v360 = vld [vmem:[%s3 + $0x2dc] sm:$0xf]
  %v361 = vld [vmem:[%s3 + $0x2e0] sm:$0xf]
  %v362 = vld [vmem:[%s3 + $0x2e4] sm:$0xf]
  %v363 = vld [vmem:[%s3 + $0x2e8] sm:$0xf]
  %v364 = vld [vmem:[%s3 + $0x2ec] sm:$0xf]
  %v365 = vld [vmem:[%s3 + $0x2f0] sm:$0xf]
  %v366 = vld [vmem:[%s3 + $0x2f4] sm:$0xf]
  %v367 = vld [vmem:[%s3 + $0x2f8] sm:$0xf]
  %v368 = vld [vmem:[%s3 + $0x2fc] sm:$0xf]
  %v369 = vld [vmem:[%s3 + $0x300] sm:$0xf]
  %v370 = vld [vmem:[%s3 + $0x304] sm:$0xf]
  %v371 = vld [vmem:[%s3 + $0x308] sm:$0xf]
  %v372 = vld [vmem:[%s3 + $0x30c] sm:$0xf]
  %v373 = vld [vmem:[%s3 + $0x310] sm:$0xf]
  %v374 = vld [vmem:[%s3 + $0x314] sm:$0xf]
  %v375 = vld [vmem:[%s3 + $0x318] sm:$0xf]
  %v376 = vld [vmem:[%s3 + $0x31c] sm:$0xf]
  %v377 = vld [vmem:[%s3 + $0x320] sm:$0xf]
  %v378 = vld [vmem:[%s3 + $0x324] sm:$0xf]
  %v379 = vld [vmem:[%s3 + $0x328] sm:$0xf]
  %v380 = vld [vmem:[%s3 + $0x32c] sm:$0xf]
  %v381 = vld [vmem:[%s3 + $0x330] sm:$0xf]
  %v382 = vld [vmem:[%s3 + $0x334] sm:$0xf]
  %v383 = vld [vmem:[%s3 + $0x338] sm:$0xf]
  %v384 = vld [vmem:[%s3 + $0x33c] sm:$0xf]
  %v385 = vld [vmem:[%s3 + $0x340] sm:$0xf]
  %v386 = vld [vmem:[%s3 + $0x344] sm:$0xf]
  %v387 = vld [vmem:[%s3 + $0x348] sm:$0xf]
  %v388 = vld [vmem:[%s3 + $0x34c] sm:$0xf]
  %v389 = vld [vmem:[%s3 + $0x350] sm:$0xf]
  %v390 = vld [vmem:[%s3 + $0x354] sm:$0xf]
  %v391 = vld [vmem:[%s3 + $0x358] sm:$0xf]
  %v392 = vld [vmem:[%s3 + $0x35c] sm:$0xf]
  %v393 = vld [vmem:[%s3 + $0x360] sm:$0xf]
  %v394 = vld [vmem:[%s3 + $0x364] sm:$0xf]
  %v395 = vld [vmem:[%s3 + $0x368] sm:$0xf]
  %v396 = vld [vmem:[%s3 + $0x36c] sm:$0xf]
  %v397 = vld [vmem:[%s3 + $0x370] sm:$0xf]
  %v398 = vld [vmem:[%s3 + $0x374] sm:$0xf]
  %v399 = vld [vmem:[%s3 + $0x378] sm:$0xf]
  %v400 = vld [vmem:[%s3 + $0x37c] sm:$0xf]
  %v401 = vld [vmem:[%s3 + $0x380] sm:$0xf]
  %v402 = vld [vmem:[%s3 + $0x384] sm:$0xf]
  %v403 = vld [vmem:[%s3 + $0x388] sm:$0xf]
  %v404 = vld [vmem:[%s3 + $0x38c] sm:$0xf]
  %v405 = vld [vmem:[%s3 + $0x390] sm:$0xf]
  %v406 = vld [vmem:[%s3 + $0x394] sm:$0xf]
  %v407 = vld [vmem:[%s3 + $0x398] sm:$0xf]
  %v408 = vld [vmem:[%s3 + $0x39c] sm:$0xf]
  %v409 = vld [vmem:[%s3 + $0x3a0] sm:$0xf]
  %v410 = vld [vmem:[%s3 + $0x3a4] sm:$0xf]
  %v411 = vld [vmem:[%s3 + $0x3a8] sm:$0xf]
  %v412 = vld [vmem:[%s3 + $0x3ac] sm:$0xf]
  %v413 = vld [vmem:[%s3 + $0x3b0] sm:$0xf]
  %v414 = vld [vmem:[%s3 + $0x3b4] sm:$0xf]
  %v415 = vld [vmem:[%s3 + $0x3b8] sm:$0xf]
  %v416 = vld [vmem:[%s3 + $0x3bc] sm:$0xf]
  %v417 = vld [vmem:[%s3 + $0x3c0] sm:$0xf]
  %v418 = vld [vmem:[%s3 + $0x3c4] sm:$0xf]
  %v419 = vld [vmem:[%s3 + $0x3c8] sm:$0xf]
  %v420 = vld [vmem:[%s3 + $0x3cc] sm:$0xf]
  %v421 = vld [vmem:[%s3 + $0x3d0] sm:$0xf]
  %v422 = vld [vmem:[%s3 + $0x3d4] sm:$0xf]
  %v423 = vld [vmem:[%s3 + $0x3d8] sm:$0xf]
  %v424 = vld [vmem:[%s3 + $0x3dc] sm:$0xf]
  %v425 = vld [vmem:[%s3 + $0x3e0] sm:$0xf]
  %v426 = vld [vmem:[%s3 + $0x3e4] sm:$0xf]
  %v427 = vld [vmem:[%s3 + $0x3e8] sm:$0xf]
  %v428 = vld [vmem:[%s3 + $0x3ec] sm:$0xf]
  %v429 = vld [vmem:[%s3 + $0x3f0] sm:$0xf]
  %v430 = vld [vmem:[%s3 + $0x3f4] sm:$0xf]
  %v431 = vld [vmem:[%s3 + $0x3f8] sm:$0xf]
  %v432 = vld [vmem:[%s3 + $0x3fc] sm:$0xf]
  %v689 = vunpack.c.l.b16 %v177
  %v690 = vunpack.c.l.b16 %v178
  %v691 = vunpack.c.l.b16 %v179
  %v692 = vunpack.c.l.b16 %v180
  %v693 = vunpack.c.l.b16 %v181
  %v694 = vunpack.c.l.b16 %v182
  %v695 = vunpack.c.l.b16 %v183
  %v696 = vunpack.c.l.b16 %v184
  %v697 = vunpack.c.l.b16 %v185
  %v698 = vunpack.c.l.b16 %v186
  %v699 = vunpack.c.l.b16 %v187
  %v700 = vunpack.c.l.b16 %v188
  %v701 = vunpack.c.l.b16 %v189
  %v702 = vunpack.c.l.b16 %v190
  %v703 = vunpack.c.l.b16 %v191
  %v704 = vunpack.c.l.b16 %v192
  %v705 = vunpack.c.l.b16 %v193
  %v706 = vunpack.c.l.b16 %v194
  %v707 = vunpack.c.l.b16 %v195
  %v708 = vunpack.c.l.b16 %v196
  %v709 = vunpack.c.l.b16 %v197
  %v710 = vunpack.c.l.b16 %v198
  %v711 = vunpack.c.l.b16 %v199
  %v712 = vunpack.c.l.b16 %v200
  %v713 = vunpack.c.l.b16 %v201
  %v714 = vunpack.c.l.b16 %v202
  %v715 = vunpack.c.l.b16 %v203
  %v716 = vunpack.c.l.b16 %v204
  %v717 = vunpack.c.l.b16 %v205
  %v718 = vunpack.c.l.b16 %v206
  %v719 = vunpack.c.l.b16 %v207
  %v720 = vunpack.c.l.b16 %v208
  %v721 = vunpack.c.l.b16 %v209
  %v722 = vunpack.c.l.b16 %v210
  %v723 = vunpack.c.l.b16 %v211
  %v724 = vunpack.c.l.b16 %v212
  %v725 = vunpack.c.l.b16 %v213
  %v726 = vunpack.c.l.b16 %v214
  %v727 = vunpack.c.l.b16 %v215
  %v728 = vunpack.c.l.b16 %v216
  %v729 = vunpack.c.l.b16 %v217
  %v730 = vunpack.c.l.b16 %v218
  %v731 = vunpack.c.l.b16 %v219
  %v732 = vunpack.c.l.b16 %v220
  %v733 = vunpack.c.l.b16 %v221
  %v734 = vunpack.c.l.b16 %v222
  %v735 = vunpack.c.l.b16 %v223
  %v736 = vunpack.c.l.b16 %v224
  %v737 = vunpack.c.l.b16 %v225
  %v738 = vunpack.c.l.b16 %v226
  %v739 = vunpack.c.l.b16 %v227
  %v740 = vunpack.c.l.b16 %v228
  %v741 = vunpack.c.l.b16 %v229
  %v742 = vunpack.c.l.b16 %v230
  %v743 = vunpack.c.l.b16 %v231
  %v744 = vunpack.c.l.b16 %v232
  %v745 = vunpack.c.l.b16 %v233
  %v746 = vunpack.c.l.b16 %v234
  %v747 = vunpack.c.l.b16 %v235
  %v748 = vunpack.c.l.b16 %v236
  %v749 = vunpack.c.l.b16 %v237
  %v750 = vunpack.c.l.b16 %v238
  %v751 = vunpack.c.l.b16 %v239
  %v752 = vunpack.c.l.b16 %v240
  %v753 = vunpack.c.l.b16 %v241
  %v754 = vunpack.c.l.b16 %v242
  %v755 = vunpack.c.l.b16 %v243
  %v756 = vunpack.c.l.b16 %v244
  %v757 = vunpack.c.l.b16 %v245
  %v758 = vunpack.c.l.b16 %v246
  %v759 = vunpack.c.l.b16 %v247
  %v760 = vunpack.c.l.b16 %v248
  %v761 = vunpack.c.l.b16 %v249
  %v762 = vunpack.c.l.b16 %v250
  %v763 = vunpack.c.l.b16 %v251
  %v764 = vunpack.c.l.b16 %v252
  %v765 = vunpack.c.l.b16 %v253
  %v766 = vunpack.c.l.b16 %v254
  %v767 = vunpack.c.l.b16 %v255
  %v768 = vunpack.c.l.b16 %v256
  %v769 = vunpack.c.l.b16 %v257
  %v770 = vunpack.c.l.b16 %v258
  %v771 = vunpack.c.l.b16 %v259
  %v772 = vunpack.c.l.b16 %v260
  %v773 = vunpack.c.l.b16 %v261
  %v774 = vunpack.c.l.b16 %v262
  %v775 = vunpack.c.l.b16 %v263
  %v776 = vunpack.c.l.b16 %v264
  %v777 = vunpack.c.l.b16 %v265
  %v778 = vunpack.c.l.b16 %v266
  %v779 = vunpack.c.l.b16 %v267
  %v780 = vunpack.c.l.b16 %v268
  %v781 = vunpack.c.l.b16 %v269
  %v782 = vunpack.c.l.b16 %v270
  %v783 = vunpack.c.l.b16 %v271
  %v784 = vunpack.c.l.b16 %v272
  %v785 = vunpack.c.l.b16 %v273
  %v786 = vunpack.c.l.b16 %v274
  %v787 = vunpack.c.l.b16 %v275
  %v788 = vunpack.c.l.b16 %v276
  %v789 = vunpack.c.l.b16 %v277
  %v790 = vunpack.c.l.b16 %v278
  %v791 = vunpack.c.l.b16 %v279
  %v792 = vunpack.c.l.b16 %v280
  %v793 = vunpack.c.l.b16 %v281
  %v794 = vunpack.c.l.b16 %v282
  %v795 = vunpack.c.l.b16 %v283
  %v796 = vunpack.c.l.b16 %v284
  %v797 = vunpack.c.l.b16 %v285
  %v798 = vunpack.c.l.b16 %v286
  %v799 = vunpack.c.l.b16 %v287
  %v800 = vunpack.c.l.b16 %v288
  %v801 = vunpack.c.l.b16 %v289
  %v802 = vunpack.c.l.b16 %v290
  %v803 = vunpack.c.l.b16 %v291
  %v804 = vunpack.c.l.b16 %v292
  %v805 = vunpack.c.l.b16 %v293
  %v806 = vunpack.c.l.b16 %v294
  %v807 = vunpack.c.l.b16 %v295
  %v808 = vunpack.c.l.b16 %v296
  %v809 = vunpack.c.l.b16 %v297
  %v810 = vunpack.c.l.b16 %v298
  %v811 = vunpack.c.l.b16 %v299
  %v812 = vunpack.c.l.b16 %v300
  %v813 = vunpack.c.l.b16 %v301
  %v814 = vunpack.c.l.b16 %v302
  %v815 = vunpack.c.l.b16 %v303
  %v816 = vunpack.c.l.b16 %v304
  %v817 = vunpack.c.l.b16 %v305
  %v818 = vunpack.c.l.b16 %v306
  %v819 = vunpack.c.l.b16 %v307
  %v820 = vunpack.c.l.b16 %v308
  %v821 = vunpack.c.l.b16 %v309
  %v822 = vunpack.c.l.b16 %v310
  %v823 = vunpack.c.l.b16 %v311
  %v824 = vunpack.c.l.b16 %v312
  %v825 = vunpack.c.l.b16 %v313
  %v826 = vunpack.c.l.b16 %v314
  %v827 = vunpack.c.l.b16 %v315
  %v828 = vunpack.c.l.b16 %v316
  %v829 = vunpack.c.l.b16 %v317
  %v830 = vunpack.c.l.b16 %v318
  %v831 = vunpack.c.l.b16 %v319
  %v832 = vunpack.c.l.b16 %v320
  %v833 = vunpack.c.l.b16 %v321
  %v834 = vunpack.c.l.b16 %v322
  %v835 = vunpack.c.l.b16 %v323
  %v836 = vunpack.c.l.b16 %v324
  %v837 = vunpack.c.l.b16 %v325
  %v838 = vunpack.c.l.b16 %v326
  %v839 = vunpack.c.l.b16 %v327
  %v840 = vunpack.c.l.b16 %v328
  %v841 = vunpack.c.l.b16 %v329
  %v842 = vunpack.c.l.b16 %v330
  %v843 = vunpack.c.l.b16 %v331
  %v844 = vunpack.c.l.b16 %v332
  %v845 = vunpack.c.l.b16 %v333
  %v846 = vunpack.c.l.b16 %v334
  %v847 = vunpack.c.l.b16 %v335
  %v848 = vunpack.c.l.b16 %v336
  %v849 = vunpack.c.l.b16 %v337
  %v850 = vunpack.c.l.b16 %v338
  %v851 = vunpack.c.l.b16 %v339
  %v852 = vunpack.c.l.b16 %v340
  %v853 = vunpack.c.l.b16 %v341
  %v854 = vunpack.c.l.b16 %v342
  %v855 = vunpack.c.l.b16 %v343
  %v856 = vunpack.c.l.b16 %v344
  %v857 = vunpack.c.l.b16 %v345
  %v858 = vunpack.c.l.b16 %v346
  %v859 = vunpack.c.l.b16 %v347
  %v860 = vunpack.c.l.b16 %v348
  %v861 = vunpack.c.l.b16 %v349
  %v862 = vunpack.c.l.b16 %v350
  %v863 = vunpack.c.l.b16 %v351
  %v864 = vunpack.c.l.b16 %v352
  %v865 = vunpack.c.l.b16 %v353
  %v866 = vunpack.c.l.b16 %v354
  %v867 = vunpack.c.l.b16 %v355
  %v868 = vunpack.c.l.b16 %v356
  %v869 = vunpack.c.l.b16 %v357
  %v870 = vunpack.c.l.b16 %v358
  %v871 = vunpack.c.l.b16 %v359
  %v872 = vunpack.c.l.b16 %v360
  %v873 = vunpack.c.l.b16 %v361
  %v874 = vunpack.c.l.b16 %v362
  %v875 = vunpack.c.l.b16 %v363
  %v876 = vunpack.c.l.b16 %v364
  %v877 = vunpack.c.l.b16 %v365
  %v878 = vunpack.c.l.b16 %v366
  %v879 = vunpack.c.l.b16 %v367
  %v880 = vunpack.c.l.b16 %v368
  %v881 = vunpack.c.l.b16 %v369
  %v882 = vunpack.c.l.b16 %v370
  %v883 = vunpack.c.l.b16 %v371
  %v884 = vunpack.c.l.b16 %v372
  %v885 = vunpack.c.l.b16 %v373
  %v886 = vunpack.c.l.b16 %v374
  %v887 = vunpack.c.l.b16 %v375
  %v888 = vunpack.c.l.b16 %v376
  %v889 = vunpack.c.l.b16 %v377
  %v890 = vunpack.c.l.b16 %v378
  %v891 = vunpack.c.l.b16 %v379
  %v892 = vunpack.c.l.b16 %v380
  %v893 = vunpack.c.l.b16 %v381
  %v894 = vunpack.c.l.b16 %v382
  %v895 = vunpack.c.l.b16 %v383
  %v896 = vunpack.c.l.b16 %v384
  %v897 = vunpack.c.l.b16 %v385
  %v898 = vunpack.c.l.b16 %v386
  %v899 = vunpack.c.l.b16 %v387
  %v900 = vunpack.c.l.b16 %v388
  %v901 = vunpack.c.l.b16 %v389
  %v902 = vunpack.c.l.b16 %v390
  %v903 = vunpack.c.l.b16 %v391
  %v904 = vunpack.c.l.b16 %v392
  %v905 = vunpack.c.l.b16 %v393
  %v906 = vunpack.c.l.b16 %v394
  %v907 = vunpack.c.l.b16 %v395
  %v908 = vunpack.c.l.b16 %v396
  %v909 = vunpack.c.l.b16 %v397
  %v910 = vunpack.c.l.b16 %v398
  %v911 = vunpack.c.l.b16 %v399
  %v912 = vunpack.c.l.b16 %v400
  %v913 = vunpack.c.l.b16 %v401
  %v914 = vunpack.c.l.b16 %v402
  %v915 = vunpack.c.l.b16 %v403
  %v916 = vunpack.c.l.b16 %v404
  %v917 = vunpack.c.l.b16 %v405
  %v918 = vunpack.c.l.b16 %v406
  %v919 = vunpack.c.l.b16 %v407
  %v920 = vunpack.c.l.b16 %v408
  %v921 = vunpack.c.l.b16 %v409
  %v922 = vunpack.c.l.b16 %v410
  %v923 = vunpack.c.l.b16 %v411
  %v924 = vunpack.c.l.b16 %v412
  %v925 = vunpack.c.l.b16 %v413
  %v926 = vunpack.c.l.b16 %v414
  %v927 = vunpack.c.l.b16 %v415
  %v928 = vunpack.c.l.b16 %v416
  %v929 = vunpack.c.l.b16 %v417
  %v930 = vunpack.c.l.b16 %v418
  %v931 = vunpack.c.l.b16 %v419
  %v932 = vunpack.c.l.b16 %v420
  %v933 = vunpack.c.l.b16 %v421
  %v934 = vunpack.c.l.b16 %v422
  %v935 = vunpack.c.l.b16 %v423
  %v936 = vunpack.c.l.b16 %v424
  %v937 = vunpack.c.l.b16 %v425
  %v938 = vunpack.c.l.b16 %v426
  %v939 = vunpack.c.l.b16 %v427
  %v940 = vunpack.c.l.b16 %v428
  %v941 = vunpack.c.l.b16 %v429
  %v942 = vunpack.c.l.b16 %v430
  %v943 = vunpack.c.l.b16 %v431
  %v944 = vunpack.c.l.b16 %v432
  %v945 = vpack.c.b16 %v690, %v689
  %v946 = vpack.c.b16 %v692, %v691
  %v947 = vpack.c.b16 %v694, %v693
  %v948 = vpack.c.b16 %v696, %v695
  %v949 = vpack.c.b16 %v698, %v697
  %v950 = vpack.c.b16 %v700, %v699
  %v951 = vpack.c.b16 %v702, %v701
  %v952 = vpack.c.b16 %v704, %v703
  %v953 = vpack.c.b16 %v706, %v705
  %v954 = vpack.c.b16 %v708, %v707
  %v955 = vpack.c.b16 %v710, %v709
  %v956 = vpack.c.b16 %v712, %v711
  %v957 = vpack.c.b16 %v714, %v713
  %v958 = vpack.c.b16 %v716, %v715
  %v959 = vpack.c.b16 %v718, %v717
  %v960 = vpack.c.b16 %v720, %v719
  %v961 = vpack.c.b16 %v722, %v721
  %v962 = vpack.c.b16 %v724, %v723
  %v963 = vpack.c.b16 %v726, %v725
  %v964 = vpack.c.b16 %v728, %v727
  %v965 = vpack.c.b16 %v730, %v729
  %v966 = vpack.c.b16 %v732, %v731
  %v967 = vpack.c.b16 %v734, %v733
  %v968 = vpack.c.b16 %v736, %v735
  %v969 = vpack.c.b16 %v738, %v737
  %v970 = vpack.c.b16 %v740, %v739
  %v971 = vpack.c.b16 %v742, %v741
  %v972 = vpack.c.b16 %v744, %v743
  %v973 = vpack.c.b16 %v746, %v745
  %v974 = vpack.c.b16 %v748, %v747
  %v975 = vpack.c.b16 %v750, %v749
  %v976 = vpack.c.b16 %v752, %v751
  %v977 = vpack.c.b16 %v754, %v753
  %v978 = vpack.c.b16 %v756, %v755
  %v979 = vpack.c.b16 %v758, %v757
  %v980 = vpack.c.b16 %v760, %v759
  %v981 = vpack.c.b16 %v762, %v761
  %v982 = vpack.c.b16 %v764, %v763
  %v983 = vpack.c.b16 %v766, %v765
  %v984 = vpack.c.b16 %v768, %v767
  %v985 = vpack.c.b16 %v770, %v769
  %v986 = vpack.c.b16 %v772, %v771
  %v987 = vpack.c.b16 %v774, %v773
  %v988 = vpack.c.b16 %v776, %v775
  %v989 = vpack.c.b16 %v778, %v777
  %v990 = vpack.c.b16 %v780, %v779
  %v991 = vpack.c.b16 %v782, %v781
  %v992 = vpack.c.b16 %v784, %v783
  %v993 = vpack.c.b16 %v786, %v785
  %v994 = vpack.c.b16 %v788, %v787
  %v995 = vpack.c.b16 %v790, %v789
  %v996 = vpack.c.b16 %v792, %v791
  %v997 = vpack.c.b16 %v794, %v793
  %v998 = vpack.c.b16 %v796, %v795
  %v999 = vpack.c.b16 %v798, %v797
  %v1000 = vpack.c.b16 %v800, %v799
  %v1001 = vpack.c.b16 %v802, %v801
  %v1002 = vpack.c.b16 %v804, %v803
  %v1003 = vpack.c.b16 %v806, %v805
  %v1004 = vpack.c.b16 %v808, %v807
  %v1005 = vpack.c.b16 %v810, %v809
  %v1006 = vpack.c.b16 %v812, %v811
  %v1007 = vpack.c.b16 %v814, %v813
  %v1008 = vpack.c.b16 %v816, %v815
  %v1009 = vpack.c.b16 %v818, %v817
  %v1010 = vpack.c.b16 %v820, %v819
  %v1011 = vpack.c.b16 %v822, %v821
  %v1012 = vpack.c.b16 %v824, %v823
  %v1013 = vpack.c.b16 %v826, %v825
  %v1014 = vpack.c.b16 %v828, %v827
  %v1015 = vpack.c.b16 %v830, %v829
  %v1016 = vpack.c.b16 %v832, %v831
  %v1017 = vpack.c.b16 %v834, %v833
  %v1018 = vpack.c.b16 %v836, %v835
  %v1019 = vpack.c.b16 %v838, %v837
  %v1020 = vpack.c.b16 %v840, %v839
  %v1021 = vpack.c.b16 %v842, %v841
  %v1022 = vpack.c.b16 %v844, %v843
  %v1023 = vpack.c.b16 %v846, %v845
  %v1024 = vpack.c.b16 %v848, %v847
  %v1025 = vpack.c.b16 %v850, %v849
  %v1026 = vpack.c.b16 %v852, %v851
  %v1027 = vpack.c.b16 %v854, %v853
  %v1028 = vpack.c.b16 %v856, %v855
  %v1029 = vpack.c.b16 %v858, %v857
  %v1030 = vpack.c.b16 %v860, %v859
  %v1031 = vpack.c.b16 %v862, %v861
  %v1032 = vpack.c.b16 %v864, %v863
  %v1033 = vpack.c.b16 %v866, %v865
  %v1034 = vpack.c.b16 %v868, %v867
  %v1035 = vpack.c.b16 %v870, %v869
  %v1036 = vpack.c.b16 %v872, %v871
  %v1037 = vpack.c.b16 %v874, %v873
  %v1038 = vpack.c.b16 %v876, %v875
  %v1039 = vpack.c.b16 %v878, %v877
  %v1040 = vpack.c.b16 %v880, %v879
  %v1041 = vpack.c.b16 %v882, %v881
  %v1042 = vpack.c.b16 %v884, %v883
  %v1043 = vpack.c.b16 %v886, %v885
  %v1044 = vpack.c.b16 %v888, %v887
  %v1045 = vpack.c.b16 %v890, %v889
  %v1046 = vpack.c.b16 %v892, %v891
  %v1047 = vpack.c.b16 %v894, %v893
  %v1048 = vpack.c.b16 %v896, %v895
  %v1049 = vpack.c.b16 %v898, %v897
  %v1050 = vpack.c.b16 %v900, %v899
  %v1051 = vpack.c.b16 %v902, %v901
  %v1052 = vpack.c.b16 %v904, %v903
  %v1053 = vpack.c.b16 %v906, %v905
  %v1054 = vpack.c.b16 %v908, %v907
  %v1055 = vpack.c.b16 %v910, %v909
  %v1056 = vpack.c.b16 %v912, %v911
  %v1057 = vpack.c.b16 %v914, %v913
  %v1058 = vpack.c.b16 %v916, %v915
  %v1059 = vpack.c.b16 %v918, %v917
  %v1060 = vpack.c.b16 %v920, %v919
  %v1061 = vpack.c.b16 %v922, %v921
  %v1062 = vpack.c.b16 %v924, %v923
  %v1063 = vpack.c.b16 %v926, %v925
  %v1064 = vpack.c.b16 %v928, %v927
  %v1065 = vpack.c.b16 %v930, %v929
  %v1066 = vpack.c.b16 %v932, %v931
  %v1067 = vpack.c.b16 %v934, %v933
  %v1068 = vpack.c.b16 %v936, %v935
  %v1069 = vpack.c.b16 %v938, %v937
  %v1070 = vpack.c.b16 %v940, %v939
  %v1071 = vpack.c.b16 %v942, %v941
  %v1072 = vpack.c.b16 %v944, %v943
  %1201 = vmatprep.subr.bf16.mxu0 0
  %1202 = vmatpush1.bf16.msra.mxu0 %v952
  %1203 = vmatprep.subr.bf16.mxu0 0
  %1204 = vmatpush1.bf16.msra.mxu0 %v951
  %1205 = vmatprep.subr.bf16.mxu0 0
  %1206 = vmatpush1.bf16.msra.mxu0 %v950
  %1207 = vmatprep.subr.bf16.mxu0 0
  %1208 = vmatpush1.bf16.msra.mxu0 %v949
  %1209 = vmatprep.subr.bf16.mxu0 0
  %1210 = vmatpush1.bf16.msra.mxu0 %v948
  %1211 = vmatprep.subr.bf16.mxu0 0
  %1212 = vmatpush1.bf16.msra.mxu0 %v947
  %1213 = vmatprep.subr.bf16.mxu0 0
  %1214 = vmatpush1.bf16.msra.mxu0 %v946
  %1215 = vmatprep.subr.bf16.mxu0 0
  %1216 = vmatpush1.bf16.msra.mxu0 %v945
  %1217 = vmatprep.subr.bf16.mxu0 0
  %1218 = vmatpush2.bf16.msra.mxu0 %v960
  %1219 = vmatprep.subr.bf16.mxu0 0
  %1220 = vmatpush2.bf16.msra.mxu0 %v959
  %1221 = vmatprep.subr.bf16.mxu0 0
  %1222 = vmatpush2.bf16.msra.mxu0 %v958
  %1223 = vmatprep.subr.bf16.mxu0 0
  %1224 = vmatpush2.bf16.msra.mxu0 %v957
  %1225 = vmatprep.subr.bf16.mxu0 0
  %1226 = vmatpush2.bf16.msra.mxu0 %v956
  %1227 = vmatprep.subr.bf16.mxu0 0
  %1228 = vmatpush2.bf16.msra.mxu0 %v955
  %1229 = vmatprep.subr.bf16.mxu0 0
  %1230 = vmatpush2.bf16.msra.mxu0 %v954
  %1231 = vmatprep.subr.bf16.mxu0 0
  %1232 = vmatpush2.bf16.msra.mxu0 %v953
  %1233 = vmatprep.mubr.bf16.mxu0 %v99
  %1234 = vmatmul.mubr.bf16.gmra.mxu0 %v95
  %v1235 = vpop.f32.mrf.mxu0
  %v1236 = vadd.f32 0.0, %v1235
  %v1237 = vpop.f32.mrf.mxu0
  %v1238 = vpop.f32.mrf.mxu0
  %v1239 = vpop.f32.mrf.mxu0
  %1240 = vdwg.mxu0
  %1241 = vmatprep.subr.bf16.mxu0 0
  %1242 = vmatpush1.bf16.msra.mxu0 %v968
  %1243 = vmatprep.subr.bf16.mxu0 0
  %1244 = vmatpush1.bf16.msra.mxu0 %v967
  %1245 = vmatprep.subr.bf16.mxu0 0
  %1246 = vmatpush1.bf16.msra.mxu0 %v966
  %1247 = vmatprep.subr.bf16.mxu0 0
  %1248 = vmatpush1.bf16.msra.mxu0 %v965
  %1249 = vmatprep.subr.bf16.mxu0 0
  %1250 = vmatpush1.bf16.msra.mxu0 %v964
  %1251 = vmatprep.subr.bf16.mxu0 0
  %1252 = vmatpush1.bf16.msra.mxu0 %v963
  %1253 = vmatprep.subr.bf16.mxu0 0
  %1254 = vmatpush1.bf16.msra.mxu0 %v962
  %1255 = vmatprep.subr.bf16.mxu0 0
  %1256 = vmatpush1.bf16.msra.mxu0 %v961
  %1257 = vmatprep.subr.bf16.mxu0 0
  %1258 = vmatpush2.bf16.msra.mxu0 %v976
  %1259 = vmatprep.subr.bf16.mxu0 0
  %1260 = vmatpush2.bf16.msra.mxu0 %v975
  %1261 = vmatprep.subr.bf16.mxu0 0
  %1262 = vmatpush2.bf16.msra.mxu0 %v974
  %1263 = vmatprep.subr.bf16.mxu0 0
  %1264 = vmatpush2.bf16.msra.mxu0 %v973
  %1265 = vmatprep.subr.bf16.mxu0 0
  %1266 = vmatpush2.bf16.msra.mxu0 %v972
  %1267 = vmatprep.subr.bf16.mxu0 0
  %1268 = vmatpush2.bf16.msra.mxu0 %v971
  %1269 = vmatprep.subr.bf16.mxu0 0
  %1270 = vmatpush2.bf16.msra.mxu0 %v970
  %1271 = vmatprep.subr.bf16.mxu0 0
  %1272 = vmatpush2.bf16.msra.mxu0 %v969
  %1273 = vmatprep.mubr.bf16.mxu0 %v109
  %1274 = vmatmul.mubr.bf16.gmra.mxu0 %v104
  %v1275 = vpop.f32.mrf.mxu0
  %v1276 = vadd.f32 %v1236, %v1275
  %v1277 = vpop.f32.mrf.mxu0
  %v1278 = vpop.f32.mrf.mxu0
  %v1279 = vpop.f32.mrf.mxu0
  %1280 = vdwg.mxu0
  %1281 = vmatprep.subr.bf16.mxu0 0
  %1282 = vmatpush1.bf16.msra.mxu0 %v984
  %1283 = vmatprep.subr.bf16.mxu0 0
  %1284 = vmatpush1.bf16.msra.mxu0 %v983
  %1285 = vmatprep.subr.bf16.mxu0 0
  %1286 = vmatpush1.bf16.msra.mxu0 %v982
  %1287 = vmatprep.subr.bf16.mxu0 0
  %1288 = vmatpush1.bf16.msra.mxu0 %v981
  %1289 = vmatprep.subr.bf16.mxu0 0
  %1290 = vmatpush1.bf16.msra.mxu0 %v980
  %1291 = vmatprep.subr.bf16.mxu0 0
  %1292 = vmatpush1.bf16.msra.mxu0 %v979
  %1293 = vmatprep.subr.bf16.mxu0 0
  %1294 = vmatpush1.bf16.msra.mxu0 %v978
  %1295 = vmatprep.subr.bf16.mxu0 0
  %1296 = vmatpush1.bf16.msra.mxu0 %v977
  %1297 = vmatprep.subr.bf16.mxu0 0
  %1298 = vmatpush2.bf16.msra.mxu0 %v992
  %1299 = vmatprep.subr.bf16.mxu0 0
  %1300 = vmatpush2.bf16.msra.mxu0 %v991
  %1301 = vmatprep.subr.bf16.mxu0 0
  %1302 = vmatpush2.bf16.msra.mxu0 %v990
  %1303 = vmatprep.subr.bf16.mxu0 0
  %1304 = vmatpush2.bf16.msra.mxu0 %v989
  %1305 = vmatprep.subr.bf16.mxu0 0
  %1306 = vmatpush2.bf16.msra.mxu0 %v988
  %1307 = vmatprep.subr.bf16.mxu0 0
  %1308 = vmatpush2.bf16.msra.mxu0 %v987
  %1309 = vmatprep.subr.bf16.mxu0 0
  %1310 = vmatpush2.bf16.msra.mxu0 %v986
  %1311 = vmatprep.subr.bf16.mxu0 0
  %1312 = vmatpush2.bf16.msra.mxu0 %v985
  %1313 = vmatprep.mubr.bf16.mxu0 %v121
  %1314 = vmatmul.mubr.bf16.gmra.mxu0 %v117
  %v1315 = vpop.f32.mrf.mxu0
  %v1316 = vadd.f32 %v1276, %v1315
  %v1317 = vpop.f32.mrf.mxu0
  %v1318 = vpop.f32.mrf.mxu0
  %v1319 = vpop.f32.mrf.mxu0
  %1320 = vdwg.mxu0
  %1321 = vmatprep.subr.bf16.mxu0 0
  %1322 = vmatpush1.bf16.msra.mxu0 %v1000
  %1323 = vmatprep.subr.bf16.mxu0 0
  %1324 = vmatpush1.bf16.msra.mxu0 %v999
  %1325 = vmatprep.subr.bf16.mxu0 0
  %1326 = vmatpush1.bf16.msra.mxu0 %v998
  %1327 = vmatprep.subr.bf16.mxu0 0
  %1328 = vmatpush1.bf16.msra.mxu0 %v997
  %1329 = vmatprep.subr.bf16.mxu0 0
  %1330 = vmatpush1.bf16.msra.mxu0 %v996
  %1331 = vmatprep.subr.bf16.mxu0 0
  %1332 = vmatpush1.bf16.msra.mxu0 %v995
  %1333 = vmatprep.subr.bf16.mxu0 0
  %1334 = vmatpush1.bf16.msra.mxu0 %v994
  %1335 = vmatprep.subr.bf16.mxu0 0
  %1336 = vmatpush1.bf16.msra.mxu0 %v993
  %1337 = vmatprep.subr.bf16.mxu0 0
  %1338 = vmatpush2.bf16.msra.mxu0 %v1008
  %1339 = vmatprep.subr.bf16.mxu0 0
  %1340 = vmatpush2.bf16.msra.mxu0 %v1007
  %1341 = vmatprep.subr.bf16.mxu0 0
  %1342 = vmatpush2.bf16.msra.mxu0 %v1006
  %1343 = vmatprep.subr.bf16.mxu0 0
  %1344 = vmatpush2.bf16.msra.mxu0 %v1005
  %1345 = vmatprep.subr.bf16.mxu0 0
  %1346 = vmatpush2.bf16.msra.mxu0 %v1004
  %1347 = vmatprep.subr.bf16.mxu0 0
  %1348 = vmatpush2.bf16.msra.mxu0 %v1003
  %1349 = vmatprep.subr.bf16.mxu0 0
  %1350 = vmatpush2.bf16.msra.mxu0 %v1002
  %1351 = vmatprep.subr.bf16.mxu0 0
  %1352 = vmatpush2.bf16.msra.mxu0 %v1001
  %1353 = vmatprep.mubr.bf16.mxu0 %v131
  %1354 = vmatmul.mubr.bf16.gmra.mxu0 %v126
  %v1355 = vpop.f32.mrf.mxu0
  %v1356 = vadd.f32 %v1316, %v1355
  %v1357 = vpop.f32.mrf.mxu0
  %v1358 = vpop.f32.mrf.mxu0
  %v1359 = vpop.f32.mrf.mxu0
  %1360 = vdwg.mxu0
  %1361 = vmatprep.subr.bf16.mxu0 0
  %1362 = vmatpush1.bf16.msra.mxu0 %v1016
  %1363 = vmatprep.subr.bf16.mxu0 0
  %1364 = vmatpush1.bf16.msra.mxu0 %v1015
  %1365 = vmatprep.subr.bf16.mxu0 0
  %1366 = vmatpush1.bf16.msra.mxu0 %v1014
  %1367 = vmatprep.subr.bf16.mxu0 0
  %1368 = vmatpush1.bf16.msra.mxu0 %v1013
  %1369 = vmatprep.subr.bf16.mxu0 0
  %1370 = vmatpush1.bf16.msra.mxu0 %v1012
  %1371 = vmatprep.subr.bf16.mxu0 0
  %1372 = vmatpush1.bf16.msra.mxu0 %v1011
  %1373 = vmatprep.subr.bf16.mxu0 0
  %1374 = vmatpush1.bf16.msra.mxu0 %v1010
  %1375 = vmatprep.subr.bf16.mxu0 0
  %1376 = vmatpush1.bf16.msra.mxu0 %v1009
  %1377 = vmatprep.subr.bf16.mxu0 0
  %1378 = vmatpush2.bf16.msra.mxu0 %v1024
  %1379 = vmatprep.subr.bf16.mxu0 0
  %1380 = vmatpush2.bf16.msra.mxu0 %v1023
  %1381 = vmatprep.subr.bf16.mxu0 0
  %1382 = vmatpush2.bf16.msra.mxu0 %v1022
  %1383 = vmatprep.subr.bf16.mxu0 0
  %1384 = vmatpush2.bf16.msra.mxu0 %v1021
  %1385 = vmatprep.subr.bf16.mxu0 0
  %1386 = vmatpush2.bf16.msra.mxu0 %v1020
  %1387 = vmatprep.subr.bf16.mxu0 0
  %1388 = vmatpush2.bf16.msra.mxu0 %v1019
  %1389 = vmatprep.subr.bf16.mxu0 0
  %1390 = vmatpush2.bf16.msra.mxu0 %v1018
  %1391 = vmatprep.subr.bf16.mxu0 0
  %1392 = vmatpush2.bf16.msra.mxu0 %v1017
  %1393 = vmatprep.mubr.bf16.mxu0 %v143
  %1394 = vmatmul.mubr.bf16.gmra.mxu0 %v139
  %v1395 = vpop.f32.mrf.mxu0
  %v1396 = vadd.f32 %v1356, %v1395
  %v1397 = vpop.f32.mrf.mxu0
  %v1398 = vpop.f32.mrf.mxu0
  %v1399 = vpop.f32.mrf.mxu0
  %1400 = vdwg.mxu0
  %1401 = vmatprep.subr.bf16.mxu0 0
  %1402 = vmatpush1.bf16.msra.mxu0 %v1032
  %1403 = vmatprep.subr.bf16.mxu0 0
  %1404 = vmatpush1.bf16.msra.mxu0 %v1031
  %1405 = vmatprep.subr.bf16.mxu0 0
  %1406 = vmatpush1.bf16.msra.mxu0 %v1030
  %1407 = vmatprep.subr.bf16.mxu0 0
  %1408 = vmatpush1.bf16.msra.mxu0 %v1029
  %1409 = vmatprep.subr.bf16.mxu0 0
  %1410 = vmatpush1.bf16.msra.mxu0 %v1028
  %1411 = vmatprep.subr.bf16.mxu0 0
  %1412 = vmatpush1.bf16.msra.mxu0 %v1027
  %1413 = vmatprep.subr.bf16.mxu0 0
  %1414 = vmatpush1.bf16.msra.mxu0 %v1026
  %1415 = vmatprep.subr.bf16.mxu0 0
  %1416 = vmatpush1.bf16.msra.mxu0 %v1025
  %1417 = vmatprep.subr.bf16.mxu0 0
  %1418 = vmatpush2.bf16.msra.mxu0 %v1040
  %1419 = vmatprep.subr.bf16.mxu0 0
  %1420 = vmatpush2.bf16.msra.mxu0 %v1039
  %1421 = vmatprep.subr.bf16.mxu0 0
  %1422 = vmatpush2.bf16.msra.mxu0 %v1038
  %1423 = vmatprep.subr.bf16.mxu0 0
  %1424 = vmatpush2.bf16.msra.mxu0 %v1037
  %1425 = vmatprep.subr.bf16.mxu0 0
  %1426 = vmatpush2.bf16.msra.mxu0 %v1036
  %1427 = vmatprep.subr.bf16.mxu0 0
  %1428 = vmatpush2.bf16.msra.mxu0 %v1035
  %1429 = vmatprep.subr.bf16.mxu0 0
  %1430 = vmatpush2.bf16.msra.mxu0 %v1034
  %1431 = vmatprep.subr.bf16.mxu0 0
  %1432 = vmatpush2.bf16.msra.mxu0 %v1033
  %1433 = vmatprep.mubr.bf16.mxu0 %v153
  %1434 = vmatmul.mubr.bf16.gmra.mxu0 %v148
  %v1435 = vpop.f32.mrf.mxu0
  %v1436 = vadd.f32 %v1396, %v1435
  %v1437 = vpop.f32.mrf.mxu0
  %v1438 = vpop.f32.mrf.mxu0
  %v1439 = vpop.f32.mrf.mxu0
  %1440 = vdwg.mxu0
  %1441 = vmatprep.subr.bf16.mxu0 0
  %1442 = vmatpush1.bf16.msra.mxu0 %v1048
  %1443 = vmatprep.subr.bf16.mxu0 0
  %1444 = vmatpush1.bf16.msra.mxu0 %v1047
  %1445 = vmatprep.subr.bf16.mxu0 0
  %1446 = vmatpush1.bf16.msra.mxu0 %v1046
  %1447 = vmatprep.subr.bf16.mxu0 0
  %1448 = vmatpush1.bf16.msra.mxu0 %v1045
  %1449 = vmatprep.subr.bf16.mxu0 0
  %1450 = vmatpush1.bf16.msra.mxu0 %v1044
  %1451 = vmatprep.subr.bf16.mxu0 0
  %1452 = vmatpush1.bf16.msra.mxu0 %v1043
  %1453 = vmatprep.subr.bf16.mxu0 0
  %1454 = vmatpush1.bf16.msra.mxu0 %v1042
  %1455 = vmatprep.subr.bf16.mxu0 0
  %1456 = vmatpush1.bf16.msra.mxu0 %v1041
  %1457 = vmatprep.subr.bf16.mxu0 0
  %1458 = vmatpush2.bf16.msra.mxu0 %v1056
  %1459 = vmatprep.subr.bf16.mxu0 0
  %1460 = vmatpush2.bf16.msra.mxu0 %v1055
  %1461 = vmatprep.subr.bf16.mxu0 0
  %1462 = vmatpush2.bf16.msra.mxu0 %v1054
  %1463 = vmatprep.subr.bf16.mxu0 0
  %1464 = vmatpush2.bf16.msra.mxu0 %v1053
  %1465 = vmatprep.subr.bf16.mxu0 0
  %1466 = vmatpush2.bf16.msra.mxu0 %v1052
  %1467 = vmatprep.subr.bf16.mxu0 0
  %1468 = vmatpush2.bf16.msra.mxu0 %v1051
  %1469 = vmatprep.subr.bf16.mxu0 0
  %1470 = vmatpush2.bf16.msra.mxu0 %v1050
  %1471 = vmatprep.subr.bf16.mxu0 0
  %1472 = vmatpush2.bf16.msra.mxu0 %v1049
  %1473 = vmatprep.mubr.bf16.mxu0 %v165
  %1474 = vmatmul.mubr.bf16.gmra.mxu0 %v161
  %v1475 = vpop.f32.mrf.mxu0
  %v1476 = vadd.f32 %v1436, %v1475
  %v1477 = vpop.f32.mrf.mxu0
  %v1478 = vpop.f32.mrf.mxu0
  %v1479 = vpop.f32.mrf.mxu0
  %1480 = vdwg.mxu0
  %1481 = vmatprep.subr.bf16.mxu0 0
  %1482 = vmatpush1.bf16.msra.mxu0 %v1064
  %1483 = vmatprep.subr.bf16.mxu0 0
  %1484 = vmatpush1.bf16.msra.mxu0 %v1063
  %1485 = vmatprep.subr.bf16.mxu0 0
  %1486 = vmatpush1.bf16.msra.mxu0 %v1062
  %1487 = vmatprep.subr.bf16.mxu0 0
  %1488 = vmatpush1.bf16.msra.mxu0 %v1061
  %1489 = vmatprep.subr.bf16.mxu0 0
  %1490 = vmatpush1.bf16.msra.mxu0 %v1060
  %1491 = vmatprep.subr.bf16.mxu0 0
  %1492 = vmatpush1.bf16.msra.mxu0 %v1059
  %1493 = vmatprep.subr.bf16.mxu0 0
  %1494 = vmatpush1.bf16.msra.mxu0 %v1058
  %1495 = vmatprep.subr.bf16.mxu0 0
  %1496 = vmatpush1.bf16.msra.mxu0 %v1057
  %1497 = vmatprep.subr.bf16.mxu0 0
  %1498 = vmatpush2.bf16.msra.mxu0 %v1072
  %1499 = vmatprep.subr.bf16.mxu0 0
  %1500 = vmatpush2.bf16.msra.mxu0 %v1071
  %1501 = vmatprep.subr.bf16.mxu0 0
  %1502 = vmatpush2.bf16.msra.mxu0 %v1070
  %1503 = vmatprep.subr.bf16.mxu0 0
  %1504 = vmatpush2.bf16.msra.mxu0 %v1069
  %1505 = vmatprep.subr.bf16.mxu0 0
  %1506 = vmatpush2.bf16.msra.mxu0 %v1068
  %1507 = vmatprep.subr.bf16.mxu0 0
  %1508 = vmatpush2.bf16.msra.mxu0 %v1067
  %1509 = vmatprep.subr.bf16.mxu0 0
  %1510 = vmatpush2.bf16.msra.mxu0 %v1066
  %1511 = vmatprep.subr.bf16.mxu0 0
  %1512 = vmatpush2.bf16.msra.mxu0 %v1065
  %1513 = vmatprep.mubr.bf16.mxu0 %v175
  %1514 = vmatmul.mubr.bf16.gmra.mxu0 %v170
  %v1515 = vpop.f32.mrf.mxu0
  %v1516 = vadd.f32 %v1476, %v1515
  %v1517 = vpop.f32.mrf.mxu0
  %v1518 = vpop.f32.mrf.mxu0
  %v1519 = vpop.f32.mrf.mxu0
  %1520 = vdwg.mxu0
  %v1521 = vsub.f32 0.0, %v1516
  %v1522 = vmul.f32 %v1521, 1.442695
  %v1523 = vpow.pop %v1522
  %v1524 = vadd.f32 %v1523, 1.0
  %v1525 = vrcp.pop %v1524
  %1526 = vst [vmem:[%s4] sm:$0x3] %v1525
  // Predicated region
  $region18: #{discriminator_forward.5} parent=0 // pred_check
    _
  $region19: #{discriminator_forward.5} parent=0 // pred_check_branch
    %1528 = sbr.rel (0) target = $region21
  $region20: #{discriminator_forward.5} parent=0 // pred_region
    _
  $region21: #{discriminator_forward.5} parent=0 // pred_fallthru
    _
  // Predicated region
  $region22: #{discriminator_forward.5} parent=0 // pred_check
    _
  $region23: #{discriminator_forward.5} parent=0 // pred_check_branch
    %1530 = sbr.rel (0) target = $region25
  $region24: #{discriminator_forward.5} parent=0 // pred_region
    _
  $region25: #{discriminator_forward.5} parent=0 // pred_fallthru
    _

</llo_original>
